<compile_context>
chip_gen: v7x
topology: tpu7x:2x2x1
jax: 0.10.0
libtpu: 0.0.40
codegen_flags: <defaults>
</compile_context>

<pallas_src>
import functools

import numpy as np
import jax
import jax.numpy as jnp
from jax.experimental import pallas as pl
from jax.experimental.pallas import tpu as pltpu

# Network sizes.
S = 9            # 3x3 board positions
C1, C2, HID = 64, 128, 256
K1_PAD = 16      # conv1 contraction dim: 9 -> 16
N1_PAD = 640     # conv1 output features: 9*64 = 576 -> 640 (5*128); also conv2 K
N2 = S * C2      # 1152 = 9*128
NHEAD = 128      # padded head output lanes (9 policy + 1 value + 118 zeros)
VALUE_COL = 9


# ---------------------------------------------------------------------------
# Fused Pallas kernel: conv1 -> conv2 -> fc1 -> {fc2, fc3} for one batch tile
# ---------------------------------------------------------------------------

def fused_forward_kernel(x_ref, w1_ref, b1_ref, w2_ref, b2_ref,
                         w3_ref, b3_ref, w4_ref, b4_ref, out_ref):
    # conv1 as a dense (tb,16)@(16,640) matmul (spatially-unrolled, channels-last).
    # Bias+ReLU epilogues fuse the bf16 downcast so the big intermediates live (and
    # spill) as bf16; accumulation stays f32 via preferred_element_type.
    h = jnp.dot(x_ref[...].astype(jnp.bfloat16), w1_ref[...],
                preferred_element_type=jnp.float32)
    h = jnp.maximum(h + b1_ref[...], 0.0).astype(jnp.bfloat16)
    # conv2 as a dense (tb,640)@(640,1152) matmul
    h = jnp.dot(h, w2_ref[...], preferred_element_type=jnp.float32)
    h = jnp.maximum(h + b2_ref[...], 0.0).astype(jnp.bfloat16)
    # fc1 (rows pre-permuted so the (s,c) column order matches PyTorch's (c,s) flatten)
    h = jnp.dot(h, w3_ref[...], preferred_element_type=jnp.float32)
    h = jnp.maximum(h + b3_ref[...], 0.0).astype(jnp.bfloat16)
    # fused head: cols 0..8 = fc2 policy logits, col 9 = fc3 raw value (tanh in wrapper)
    out_ref[...] = (jnp.dot(h, w4_ref[...], preferred_element_type=jnp.float32)
                    + b4_ref[...])


# ---------------------------------------------------------------------------
# One-time parameter prep: conv -> dense, permute fc1, fuse/pad head, cast to bf16
# ---------------------------------------------------------------------------

def _conv_as_dense(w):
    """(c_out, c_in, 3, 3) conv (pad=1) on a 3x3 board -> (9*c_in, 9*c_out) dense matrix
    acting on channels-last spatially-flattened vectors (column index = s*channels + c)."""
    c_out, c_in = w.shape[0], w.shape[1]
    w_np = np.asarray(w, dtype=np.float32)
    big = np.zeros((S * c_in, S * c_out), dtype=np.float32)
    for oy in range(3):
        for ox in range(3):
            s_out = oy * 3 + ox
            for ky in range(3):
                for kx in range(3):
                    iy, ix = oy + ky - 1, ox + kx - 1
                    if 0 <= iy < 3 and 0 <= ix < 3:
                        s_in = iy * 3 + ix
                        big[s_in * c_in:(s_in + 1) * c_in,
                            s_out * c_out:(s_out + 1) * c_out] = w_np[:, :, ky, kx].T
    return big


def prepare_params(p):
    # conv1 -> (16, 640), zero-padded on both K (9->16) and N (576->640)
    w1 = np.zeros((K1_PAD, N1_PAD), np.float32)
    w1[:S, :S * C1] = _conv_as_dense(p["conv1_w"])
    b1 = np.zeros((1, N1_PAD), np.float32)
    b1[0, :S * C1] = np.tile(np.asarray(p["conv1_b"], np.float32), S)
    # conv2 -> (640, 1152), zero-padded on K
    w2 = np.zeros((N1_PAD, N2), np.float32)
    w2[:S * C1, :] = _conv_as_dense(p["conv2_w"])
    b2 = np.tile(np.asarray(p["conv2_b"], np.float32), S).reshape(1, N2)
    # fc1: PyTorch flatten is (c, s); our columns are (s, c) -> permute rows once here
    fw = np.asarray(p["fc1_w"], np.float32)                  # (256, 1152), col idx c*9+s
    w3 = fw.reshape(HID, C2, S).transpose(2, 1, 0).reshape(S * C2, HID)
    b3 = np.asarray(p["fc1_b"], np.float32).reshape(1, HID)
    # fused head: fc2 (policy) in cols 0..8, fc3 (value) in col 9, padded to 128 lanes
    w4 = np.zeros((HID, NHEAD), np.float32)
    w4[:, :S] = np.asarray(p["fc2_w"], np.float32).T
    w4[:, VALUE_COL] = np.asarray(p["fc3_w"], np.float32)[0]
    b4 = np.zeros((1, NHEAD), np.float32)
    b4[0, :S] = np.asarray(p["fc2_b"], np.float32)
    b4[0, VALUE_COL] = np.asarray(p["fc3_b"], np.float32)[0]

    bf16 = lambda a: jnp.asarray(a, jnp.bfloat16)   # MXU operands
    f32 = lambda a: jnp.asarray(a, jnp.float32)     # epilogue stays f32
    return dict(w1=bf16(w1), b1=f32(b1), w2=bf16(w2), b2=f32(b2),
                w3=bf16(w3), b3=f32(b3), w4=bf16(w4), b4=f32(b4))


# ---------------------------------------------------------------------------
# Tile selection + forward wrapper
# ---------------------------------------------------------------------------

def _round_up(n, m):
    return ((n + m - 1) // m) * m


# ~0.35us per-grid-step overhead expressed in equivalent batch rows of MXU work.
_STEP_OVERHEAD_ROWS = 128


def _choose_tile(B, block_b):
    """Pick a multiple-of-16 batch tile <= block_b (bf16 sublane packing), trading
    padded rows against per-grid-step overhead, and guaranteeing >= 2 grid steps
    whenever there are >= 32 rows so both v7x TensorCores get work."""
    bp16 = _round_up(B, 16)
    cap = max(16, min(_round_up(block_b, 16), bp16))
    if bp16 >= 32:                                   # enough rows for two tiles
        cap = min(cap, _round_up(bp16 // 2, 16))     # force grid >= 2 (v7x dual-TC)
    best_tb, best_cost = 16, None
    tb = 16
    while tb <= cap:
        n_steps = -(-B // tb)
        cost = _round_up(B, tb) + n_steps * _STEP_OVERHEAD_ROWS
        if best_cost is None or cost < best_cost:
            best_tb, best_cost = tb, cost
        tb += 16
    return best_tb


@functools.partial(jax.jit, static_argnames=("block_b",))
def tictactoe_net_forward(x, prep, block_b=1024):
    """x: (B, 1, 3, 3) NCHW -> (policy_logits (B, 9), value (B, 1)).

    block_b: upper bound on the batch tile; 1024 is good on v6e/v7x, 512 on v5e.
    """
    B = x.shape[0]
    tb = _choose_tile(B, block_b)
    bp = _round_up(B, tb)
    # Flatten the 1-channel 3x3 board to (B, 9); pad K to 16 and batch to the tile size.
    x9 = x.reshape(B, S).astype(jnp.float32)
    xp = jnp.pad(x9, ((0, bp - B), (0, K1_PAD - S)))

    # Weights/biases are identical for every grid step -> single-buffer them
    # (double-buffering constants only doubles resident VMEM, zero pipelining benefit).
    const = lambda shape: pl.BlockSpec(shape, lambda i: (0, 0),
                                       pipeline_mode=pl.Buffered(1))

    compiler_kwargs = dict(dimension_semantics=("parallel",))
    if tb >= 512:
        # v5e's default scoped VMEM (16 MiB) is too small for >=512-row tiles; 48 MiB
        # is comfortably within physical VMEM on v5e/v6e (128 MiB) and v7x (64 MiB).
        compiler_kwargs["vmem_limit_bytes"] = 48 * 1024 * 1024

    out = pl.pallas_call(
        fused_forward_kernel,
        out_shape=jax.ShapeDtypeStruct((bp, NHEAD), jnp.float32),
        grid=(bp // tb,),
        in_specs=[
            pl.BlockSpec((tb, K1_PAD), lambda i: (i, 0)),   # batch-tiled input
            const((K1_PAD, N1_PAD)), const((1, N1_PAD)),    # conv1 (dense) + bias
            const((N1_PAD, N2)), const((1, N2)),            # conv2 (dense) + bias
            const((N2, HID)), const((1, HID)),               # fc1 + bias
            const((HID, NHEAD)), const((1, NHEAD)),          # fused fc2/fc3 + bias
        ],
        out_specs=pl.BlockSpec((tb, NHEAD), lambda i: (i, 0)),
        compiler_params=pltpu.CompilerParams(**compiler_kwargs),
    )(xp, prep["w1"], prep["b1"], prep["w2"], prep["b2"],
      prep["w3"], prep["b3"], prep["w4"], prep["b4"])

    policy_logits = out[:B, :S]
    # tanh moved out of the per-tile kernel tail: 128x less transcendental work here.
    value = jnp.tanh(out[:B, VALUE_COL:VALUE_COL + 1])
    return policy_logits, value


# ---------------------------------------------------------------------------
# Parameters (deterministic, PyTorch-like uniform(-1/sqrt(fan_in), 1/sqrt(fan_in)))
# ---------------------------------------------------------------------------

def init_params(key):
    def uni(k, shape, fan_in):
        bound = 1.0 / jnp.sqrt(float(fan_in))
        return jax.random.uniform(k, shape, jnp.float32, -bound, bound)

    ks = jax.random.split(key, 10)
    return {
        "conv1_w": uni(ks[0], (64, 1, 3, 3), 1 * 9),
        "conv1_b": uni(ks[1], (64,), 1 * 9),
        "conv2_w": uni(ks[2], (128, 64, 3, 3), 64 * 9),
        "conv2_b": uni(ks[3], (128,), 64 * 9),
        "fc1_w": uni(ks[4], (256, 128 * 9), 128 * 9),
        "fc1_b": uni(ks[5], (256,), 128 * 9),
        "fc2_w": uni(ks[6], (9, 256), 256),
        "fc2_b": uni(ks[7], (9,), 256),
        "fc3_w": uni(ks[8], (1, 256), 256),
        "fc3_b": uni(ks[9], (1,), 256),
    }


# ---------------------------------------------------------------------------
# References (sanity checks only)
# ---------------------------------------------------------------------------

def _reference_f32(x, p):
    """Pure-JAX f32 reference matching the PyTorch module."""
    dn = ("NCHW", "OIHW", "NCHW")
    h = jax.lax.conv_general_dilated(x, p["conv1_w"], (1, 1), "SAME",
                                     dimension_numbers=dn)
    h = jnp.maximum(h + p["conv1_b"][None, :, None, None], 0.0)
    h = jax.lax.conv_general_dilated(h, p["conv2_w"], (1, 1), "SAME",
                                     dimension_numbers=dn)
    h = jnp.maximum(h + p["conv2_b"][None, :, None, None], 0.0)
    flat = h.reshape(h.shape[0], C2 * S)              # (C,H,W) flatten == torch .view
    h = jnp.maximum(flat @ p["fc1_w"].T + p["fc1_b"], 0.0)
    return h @ p["fc2_w"].T + p["fc2_b"], jnp.tanh(h @ p["fc3_w"].T + p["fc3_b"])


def _reference_bf16(x, prep):
    """Plain-JAX version of exactly the kernel math (bf16 MXU operands, f32 accum,
    bf16-materialized intermediates)."""
    B = x.shape[0]
    x9 = jnp.pad(x.reshape(B, S).astype(jnp.float32), ((0, 0), (0, K1_PAD - S)))
    dot = lambda a, w: jnp.dot(a.astype(jnp.bfloat16), w,
                               preferred_element_type=jnp.float32)
    h = jnp.maximum(dot(x9, prep["w1"]) + prep["b1"], 0.0).astype(jnp.bfloat16)
    h = jnp.maximum(dot(h, prep["w2"]) + prep["b2"], 0.0).astype(jnp.bfloat16)
    h = jnp.maximum(dot(h, prep["w3"]) + prep["b3"], 0.0).astype(jnp.bfloat16)
    o = dot(h, prep["w4"]) + prep["b4"]
    return o[:, :S], jnp.tanh(o[:, VALUE_COL:VALUE_COL + 1])


if __name__ == "__main__":
    key = jax.random.PRNGKey(0)
    k_x, k_x2, k_p = jax.random.split(key, 3)

    params = init_params(k_p)
    prep = prepare_params(params)          # one-time weight reshape/permute/pad + bf16 cast

    # --- small-batch check (B=2; single grid step) -------------------------------
    B = 2
    # Tic-tac-toe board: one input channel, 3x3, values in {-1, 0, 1}.
    x = jax.random.randint(k_x, (B, 1, 3, 3), -1, 2).astype(jnp.float32)
    policy_logits, value = tictactoe_net_forward(x, prep)
    jax.block_until_ready((policy_logits, value))
    assert policy_logits.shape == (B, 9) and value.shape == (B, 1)

    # Tight check vs. a plain-JAX implementation of the same bf16-operand math.
    pol_bf, val_bf = _reference_bf16(x, prep)
    assert jnp.allclose(policy_logits, pol_bf, atol=1e-3, rtol=1e-3)
    assert jnp.allclose(value, val_bf, atol=1e-3, rtol=1e-3)

    # Looser check vs. the full-f32 PyTorch-equivalent reference (bf16 matmul rounding).
    pol_f32, val_f32 = _reference_f32(x, params)
    assert jnp.allclose(policy_logits, pol_f32, atol=2e-2, rtol=2e-2)
    assert jnp.allclose(value, val_f32, atol=2e-2, rtol=2e-2)

    # --- multi-tile check (B=48 -> tb=32, grid=2, exercises batch padding) -------
    B2 = 48
    x2 = jax.random.randint(k_x2, (B2, 1, 3, 3), -1, 2).astype(jnp.float32)
    pol2, val2 = tictactoe_net_forward(x2, prep)
    jax.block_until_ready((pol2, val2))
    assert pol2.shape == (B2, 9) and val2.shape == (B2, 1)
    pol2_f32, val2_f32 = _reference_f32(x2, params)
    assert jnp.allclose(pol2, pol2_f32, atol=2e-2, rtol=2e-2)
    assert jnp.allclose(val2, val2_f32, atol=2e-2, rtol=2e-2)

    print("KERNEL_OK")
</pallas_src>

<mosaic_0001>
module attributes {stable_mosaic.version = 11 : i64} {
  func.func @fused_forward_kernel(%arg0: i32, %arg1: memref<16x16xf32, #tpu.memory_space<vmem>>, %arg2: memref<16x640xbf16, #tpu.memory_space<vmem>>, %arg3: memref<1x640xf32, #tpu.memory_space<vmem>>, %arg4: memref<640x1152xbf16, #tpu.memory_space<vmem>>, %arg5: memref<1x1152xf32, #tpu.memory_space<vmem>>, %arg6: memref<1152x256xbf16, #tpu.memory_space<vmem>>, %arg7: memref<1x256xf32, #tpu.memory_space<vmem>>, %arg8: memref<256x128xbf16, #tpu.memory_space<vmem>>, %arg9: memref<1x128xf32, #tpu.memory_space<vmem>>, %arg10: memref<16x128xf32, #tpu.memory_space<vmem>>) attributes {dimension_semantics = [#tpu.dimension_semantics<parallel>], iteration_bounds = array<i64: 1>, scalar_prefetch = 0 : i64, scratch_operands = 0 : i64, tpu.core_type = #tpu.core_type<tc>, window_params = [{transform_indices = @transform_0, window_bounds = array<i64: 16, 16>}, {pipeline_mode = #tpu.pipeline_mode<synchronous>, transform_indices = @transform_1, window_bounds = array<i64: 16, 640>}, {pipeline_mode = #tpu.pipeline_mode<synchronous>, transform_indices = @transform_2, window_bounds = array<i64: 1, 640>}, {pipeline_mode = #tpu.pipeline_mode<synchronous>, transform_indices = @transform_3, window_bounds = array<i64: 640, 1152>}, {pipeline_mode = #tpu.pipeline_mode<synchronous>, transform_indices = @transform_4, window_bounds = array<i64: 1, 1152>}, {pipeline_mode = #tpu.pipeline_mode<synchronous>, transform_indices = @transform_5, window_bounds = array<i64: 1152, 256>}, {pipeline_mode = #tpu.pipeline_mode<synchronous>, transform_indices = @transform_6, window_bounds = array<i64: 1, 256>}, {pipeline_mode = #tpu.pipeline_mode<synchronous>, transform_indices = @transform_7, window_bounds = array<i64: 256, 128>}, {pipeline_mode = #tpu.pipeline_mode<synchronous>, transform_indices = @transform_8, window_bounds = array<i64: 1, 128>}, {transform_indices = @transform_9, window_bounds = array<i64: 16, 128>}]} {
    %c0 = arith.constant 0 : index
    %c0_0 = arith.constant 0 : index
    %0 = vector.load %arg1[%c0, %c0_0] : memref<16x16xf32, #tpu.memory_space<vmem>>, vector<16x16xf32>
    %1 = arith.truncf %0 : vector<16x16xf32> to vector<16x16xbf16>
    %c0_1 = arith.constant 0 : index
    %c0_2 = arith.constant 0 : index
    %2 = vector.load %arg2[%c0_1, %c0_2] : memref<16x640xbf16, #tpu.memory_space<vmem>>, vector<16x640xbf16>
    %cst = arith.constant dense<0.000000e+00> : vector<16x640xf32>
    %3 = tpu.matmul %1, %2, %cst {dimension_numbers = #tpu.dot_dimension_numbers<[1], [0], [0], [1], [0, 0, 1, 1], [], []>} : vector<16x16xbf16>, vector<16x640xbf16>, vector<16x640xf32> -> vector<16x640xf32>
    %c0_3 = arith.constant 0 : index
    %c0_4 = arith.constant 0 : index
    %4 = vector.load %arg3[%c0_3, %c0_4] : memref<1x640xf32, #tpu.memory_space<vmem>>, vector<1x640xf32>
    %5 = vector.broadcast %4 : vector<1x640xf32> to vector<16x640xf32>
    %6 = arith.addf %3, %5 : vector<16x640xf32>
    %cst_5 = arith.constant 0.000000e+00 : f32
    %7 = vector.broadcast %cst_5 : f32 to vector<16x640xf32>
    %8 = arith.maximumf %6, %7 : vector<16x640xf32>
    %9 = arith.truncf %8 : vector<16x640xf32> to vector<16x640xbf16>
    %c0_6 = arith.constant 0 : index
    %c0_7 = arith.constant 0 : index
    %10 = vector.load %arg4[%c0_6, %c0_7] : memref<640x1152xbf16, #tpu.memory_space<vmem>>, vector<640x1152xbf16>
    %cst_8 = arith.constant dense<0.000000e+00> : vector<16x1152xf32>
    %11 = tpu.matmul %9, %10, %cst_8 {dimension_numbers = #tpu.dot_dimension_numbers<[1], [0], [0], [1], [0, 0, 1, 1], [], []>} : vector<16x640xbf16>, vector<640x1152xbf16>, vector<16x1152xf32> -> vector<16x1152xf32>
    %c0_9 = arith.constant 0 : index
    %c0_10 = arith.constant 0 : index
    %12 = vector.load %arg5[%c0_9, %c0_10] : memref<1x1152xf32, #tpu.memory_space<vmem>>, vector<1x1152xf32>
    %13 = vector.broadcast %12 : vector<1x1152xf32> to vector<16x1152xf32>
    %14 = arith.addf %11, %13 : vector<16x1152xf32>
    %cst_11 = arith.constant 0.000000e+00 : f32
    %15 = vector.broadcast %cst_11 : f32 to vector<16x1152xf32>
    %16 = arith.maximumf %14, %15 : vector<16x1152xf32>
    %17 = arith.truncf %16 : vector<16x1152xf32> to vector<16x1152xbf16>
    %c0_12 = arith.constant 0 : index
    %c0_13 = arith.constant 0 : index
    %18 = vector.load %arg6[%c0_12, %c0_13] : memref<1152x256xbf16, #tpu.memory_space<vmem>>, vector<1152x256xbf16>
    %cst_14 = arith.constant dense<0.000000e+00> : vector<16x256xf32>
    %19 = tpu.matmul %17, %18, %cst_14 {dimension_numbers = #tpu.dot_dimension_numbers<[1], [0], [0], [1], [0, 0, 1, 1], [], []>} : vector<16x1152xbf16>, vector<1152x256xbf16>, vector<16x256xf32> -> vector<16x256xf32>
    %c0_15 = arith.constant 0 : index
    %c0_16 = arith.constant 0 : index
    %20 = vector.load %arg7[%c0_15, %c0_16] : memref<1x256xf32, #tpu.memory_space<vmem>>, vector<1x256xf32>
    %21 = vector.broadcast %20 : vector<1x256xf32> to vector<16x256xf32>
    %22 = arith.addf %19, %21 : vector<16x256xf32>
    %cst_17 = arith.constant 0.000000e+00 : f32
    %23 = vector.broadcast %cst_17 : f32 to vector<16x256xf32>
    %24 = arith.maximumf %22, %23 : vector<16x256xf32>
    %25 = arith.truncf %24 : vector<16x256xf32> to vector<16x256xbf16>
    %c0_18 = arith.constant 0 : index
    %c0_19 = arith.constant 0 : index
    %26 = vector.load %arg8[%c0_18, %c0_19] : memref<256x128xbf16, #tpu.memory_space<vmem>>, vector<256x128xbf16>
    %cst_20 = arith.constant dense<0.000000e+00> : vector<16x128xf32>
    %27 = tpu.matmul %25, %26, %cst_20 {dimension_numbers = #tpu.dot_dimension_numbers<[1], [0], [0], [1], [0, 0, 1, 1], [], []>} : vector<16x256xbf16>, vector<256x128xbf16>, vector<16x128xf32> -> vector<16x128xf32>
    %c0_21 = arith.constant 0 : index
    %c0_22 = arith.constant 0 : index
    %28 = vector.load %arg9[%c0_21, %c0_22] : memref<1x128xf32, #tpu.memory_space<vmem>>, vector<1x128xf32>
    %29 = vector.broadcast %28 : vector<1x128xf32> to vector<16x128xf32>
    %30 = arith.addf %27, %29 : vector<16x128xf32>
    %c0_23 = arith.constant 0 : index
    %c0_24 = arith.constant 0 : index
    %31 = vector.load %arg10[%c0_23, %c0_24] : memref<16x128xf32, #tpu.memory_space<vmem>>, vector<16x128xf32>
    tpu.vector_store %arg10[%c0_23, %c0_24], %30 {strides = array<i32>} : memref<16x128xf32, #tpu.memory_space<vmem>>, vector<16x128xf32>,
    return
  }
  func.func @transform_0(%arg0: i32) -> (i32, i32) {
    %c0_i32 = arith.constant 0 : i32
    %c0_i32_0 = arith.constant 0 : i32
    return %arg0, %c0_i32 : i32, i32
  }
  func.func @transform_1(%arg0: i32) -> (i32, i32) {
    %c0_i32 = arith.constant 0 : i32
    %c0_i32_0 = arith.constant 0 : i32
    %c0_i32_1 = arith.constant 0 : i32
    return %c0_i32, %c0_i32_0 : i32, i32
  }
  func.func @transform_2(%arg0: i32) -> (i32, i32) {
    %c0_i32 = arith.constant 0 : i32
    %c0_i32_0 = arith.constant 0 : i32
    %c0_i32_1 = arith.constant 0 : i32
    return %c0_i32, %c0_i32_0 : i32, i32
  }
  func.func @transform_3(%arg0: i32) -> (i32, i32) {
    %c0_i32 = arith.constant 0 : i32
    %c0_i32_0 = arith.constant 0 : i32
    %c0_i32_1 = arith.constant 0 : i32
    return %c0_i32, %c0_i32_0 : i32, i32
  }
  func.func @transform_4(%arg0: i32) -> (i32, i32) {
    %c0_i32 = arith.constant 0 : i32
    %c0_i32_0 = arith.constant 0 : i32
    %c0_i32_1 = arith.constant 0 : i32
    return %c0_i32, %c0_i32_0 : i32, i32
  }
  func.func @transform_5(%arg0: i32) -> (i32, i32) {
    %c0_i32 = arith.constant 0 : i32
    %c0_i32_0 = arith.constant 0 : i32
    %c0_i32_1 = arith.constant 0 : i32
    return %c0_i32, %c0_i32_0 : i32, i32
  }
  func.func @transform_6(%arg0: i32) -> (i32, i32) {
    %c0_i32 = arith.constant 0 : i32
    %c0_i32_0 = arith.constant 0 : i32
    %c0_i32_1 = arith.constant 0 : i32
    return %c0_i32, %c0_i32_0 : i32, i32
  }
  func.func @transform_7(%arg0: i32) -> (i32, i32) {
    %c0_i32 = arith.constant 0 : i32
    %c0_i32_0 = arith.constant 0 : i32
    %c0_i32_1 = arith.constant 0 : i32
    return %c0_i32, %c0_i32_0 : i32, i32
  }
  func.func @transform_8(%arg0: i32) -> (i32, i32) {
    %c0_i32 = arith.constant 0 : i32
    %c0_i32_0 = arith.constant 0 : i32
    %c0_i32_1 = arith.constant 0 : i32
    return %c0_i32, %c0_i32_0 : i32, i32
  }
  func.func @transform_9(%arg0: i32) -> (i32, i32) {
    %c0_i32 = arith.constant 0 : i32
    %c0_i32_0 = arith.constant 0 : i32
    return %arg0, %c0_i32 : i32, i32
  }
}

</mosaic_0001>

<llo_original>
// kernel: tictactoe_net_forward.1
$region0: #{tictactoe_net_forward.1}
  #allocation0 [shape = 'u32[]', space=smem, size = 0x4, offset = 0x4, fixed_abs, tag = 'smem constant byte address 0x4 - core index']
  #allocation1 [shape = 'u32[144,128]{1,0:T(1,128)}', space=vmem, size = 0x12000, scoped, tag = 'internal scratch']
  %s0 = inlined_call_operand.vmem [shape: f32[16,16], index: 0, kind: input, shape index: {}]
  %s1 = inlined_call_operand.hbm [shape: bf16[16,640], index: 1, kind: input, shape index: {}]
  %s2 = inlined_call_operand.hbm [shape: f32[1,640], index: 2, kind: input, shape index: {}]
  %s3 = inlined_call_operand.hbm [shape: bf16[640,1152], index: 3, kind: input, shape index: {}]
  %s4 = inlined_call_operand.hbm [shape: f32[1,1152], index: 4, kind: input, shape index: {}]
  %s5 = inlined_call_operand.hbm [shape: bf16[1152,256], index: 5, kind: input, shape index: {}]
  %s6 = inlined_call_operand.hbm [shape: f32[1,256], index: 6, kind: input, shape index: {}]
  %s7 = inlined_call_operand.hbm [shape: bf16[256,128], index: 7, kind: input, shape index: {}]
  %s8 = inlined_call_operand.hbm [shape: f32[1,128], index: 8, kind: input, shape index: {}]
  %s9 = inlined_call_operand.vmem [shape: f32[16,128], index: 9, kind: output, shape index: {}]
  %s10 = sld [smem:[#allocation0]]
  $region78: #{tictactoe_net_forward.1} parent=0
    _
  %s12 = ssub.s32 1, %s10
  %s13 = scalar_select 0, %s12, %s10
  $region1: #{tictactoe_net_forward.1} parent=0
    #allocation2 [shape = 'u8[20480]{0}', space=vmem, size = 0x5000, scoped, tag = 'input window, operand 1, single buffered']
    #allocation3 [shape = 's32[1]{0}', space=sflag, size = 0x4, scoped, tag = 'scoped memory for tictactoe_net_forward.1']
    #allocation4 [shape = 'u8[2560]{0}', space=vmem, size = 0xc00, scoped, tag = 'input window, operand 2, single buffered']
    #allocation5 [shape = 's32[1]{0}', space=sflag, size = 0x4, scoped, tag = 'scoped memory for tictactoe_net_forward.1']
    #allocation6 [shape = 'u8[1474560]{0}', space=vmem, size = 0x168000, scoped, tag = 'input window, operand 3, single buffered']
    #allocation7 [shape = 'u8[4608]{0}', space=vmem, size = 0x1400, scoped, tag = 'input window, operand 4, single buffered']
    #allocation8 [shape = 's32[1]{0}', space=sflag, size = 0x4, scoped, tag = 'scoped memory for tictactoe_net_forward.1']
    #allocation9 [shape = 'u8[589824]{0}', space=vmem, size = 0x90000, scoped, tag = 'input window, operand 5, single buffered']
    #allocation10 [shape = 'u8[1024]{0}', space=vmem, size = 0x400, scoped, tag = 'input window, operand 6, single buffered']
    #allocation11 [shape = 's32[1]{0}', space=sflag, size = 0x4, scoped, tag = 'scoped memory for tictactoe_net_forward.1']
    #allocation12 [shape = 'u8[65536]{0}', space=vmem, size = 0x10000, scoped, tag = 'input window, operand 7, single buffered']
    #allocation13 [shape = 'u8[512]{0}', space=vmem, size = 0x400, scoped, tag = 'input window, operand 8, single buffered']
    #allocation14 [shape = 's32[1]{0}', space=sflag, size = 0x4, scoped, tag = 'scoped memory for tictactoe_net_forward.1']
    %14 = vsyncpa [#allocation3], 0
    %15 = vsyncpa [#allocation5], 0
    %16 = vsyncpa [#allocation8], 0
    %17 = vsyncpa [#allocation11], 0
    %18 = vsyncpa [#allocation14], 0
    // Predicated region
    $region2: #{tictactoe_net_forward.1} parent=1 // pred_check
      _
    $region3: #{tictactoe_net_forward.1} parent=1 // pred_check_branch
      %20 = sbr.rel (0) target = $region5
    $region4: #{tictactoe_net_forward.1} parent=1 // pred_region
      _
    $region5: #{tictactoe_net_forward.1} parent=1 // pred_fallthru
      _
    // Predicated region
    $region6: #{tictactoe_net_forward.1} parent=1 // pred_check
      _
    $region7: #{tictactoe_net_forward.1} parent=1 // pred_check_branch
      %22 = sbr.rel (0) target = $region9
    $region8: #{tictactoe_net_forward.1} parent=1 // pred_region
      %s24 = ssub.s32 640, 640
      %25 = vsyncadd [#allocation3], %s24
      %s26 = sshll.u32 [#allocation2], 4
      %s27 = int_to_ptr.vmem [resolvable:$true] %s26
      %32 = dma.hbm_to_vmem [thread:$0]  %s1, 640, %s27, [#allocation3], 320, 320, 20
    $region9: #{tictactoe_net_forward.1} parent=1 // pred_fallthru
      _
    // Predicated region
    $region10: #{tictactoe_net_forward.1} parent=1 // pred_check
      _
    $region11: #{tictactoe_net_forward.1} parent=1 // pred_check_branch
      %34 = sbr.rel (0) target = $region13
    $region12: #{tictactoe_net_forward.1} parent=1 // pred_region
      %s36 = ssub.s32 80, 80
      %37 = vsyncadd [#allocation5], %s36
      %s39 = sshll.u32 [#allocation4], 4
      %s40 = int_to_ptr.vmem [resolvable:$true] %s39
      %42 = dma.hbm_to_vmem [thread:$0]  %s2, 80, %s40, [#allocation5]
    $region13: #{tictactoe_net_forward.1} parent=1 // pred_fallthru
      _
    // Predicated region
    $region14: #{tictactoe_net_forward.1} parent=1 // pred_check
      _
    $region15: #{tictactoe_net_forward.1} parent=1 // pred_check_branch
      %44 = sbr.rel (0) target = $region17
    $region16: #{tictactoe_net_forward.1} parent=1 // pred_region
      %s46 = ssub.s32 46080, 46080
      %47 = vsyncadd [#allocation5], %s46
      %s48 = sshll.u32 [#allocation6], 4
      %s49 = int_to_ptr.vmem [resolvable:$true] %s48
      %54 = dma.hbm_to_vmem [thread:$0]  %s3, 46080, %s49, [#allocation5], 576, 576, 36
    $region17: #{tictactoe_net_forward.1} parent=1 // pred_fallthru
      _
    // Predicated region
    $region18: #{tictactoe_net_forward.1} parent=1 // pred_check
      _
    $region19: #{tictactoe_net_forward.1} parent=1 // pred_check_branch
      %56 = sbr.rel (0) target = $region21
    $region20: #{tictactoe_net_forward.1} parent=1 // pred_region
      %s58 = ssub.s32 144, 144
      %59 = vsyncadd [#allocation8], %s58
      %s61 = sshll.u32 [#allocation7], 4
      %s62 = int_to_ptr.vmem [resolvable:$true] %s61
      %64 = dma.hbm_to_vmem [thread:$0]  %s4, 144, %s62, [#allocation8]
    $region21: #{tictactoe_net_forward.1} parent=1 // pred_fallthru
      _
    // Predicated region
    $region22: #{tictactoe_net_forward.1} parent=1 // pred_check
      _
    $region23: #{tictactoe_net_forward.1} parent=1 // pred_check_branch
      %66 = sbr.rel (0) target = $region25
    $region24: #{tictactoe_net_forward.1} parent=1 // pred_region
      %s68 = ssub.s32 18432, 18432
      %69 = vsyncadd [#allocation8], %s68
      %s70 = sshll.u32 [#allocation9], 4
      %s71 = int_to_ptr.vmem [resolvable:$true] %s70
      %76 = dma.hbm_to_vmem [thread:$0]  %s5, 18432, %s71, [#allocation8], 128, 128, 8
    $region25: #{tictactoe_net_forward.1} parent=1 // pred_fallthru
      _
    // Predicated region
    $region26: #{tictactoe_net_forward.1} parent=1 // pred_check
      _
    $region27: #{tictactoe_net_forward.1} parent=1 // pred_check_branch
      %78 = sbr.rel (0) target = $region29
    $region28: #{tictactoe_net_forward.1} parent=1 // pred_region
      %s80 = ssub.s32 32, 32
      %81 = vsyncadd [#allocation11], %s80
      %s83 = sshll.u32 [#allocation10], 4
      %s84 = int_to_ptr.vmem [resolvable:$true] %s83
      %86 = dma.hbm_to_vmem [thread:$0]  %s6, 32, %s84, [#allocation11]
    $region29: #{tictactoe_net_forward.1} parent=1 // pred_fallthru
      _
    // Predicated region
    $region30: #{tictactoe_net_forward.1} parent=1 // pred_check
      _
    $region31: #{tictactoe_net_forward.1} parent=1 // pred_check_branch
      %88 = sbr.rel (0) target = $region33
    $region32: #{tictactoe_net_forward.1} parent=1 // pred_region
      %s90 = ssub.s32 2048, 2048
      %91 = vsyncadd [#allocation11], %s90
      %s92 = sshll.u32 [#allocation12], 4
      %s93 = int_to_ptr.vmem [resolvable:$true] %s92
      %98 = dma.hbm_to_vmem [thread:$0]  %s7, 2048, %s93, [#allocation11], 64, 64, 4
    $region33: #{tictactoe_net_forward.1} parent=1 // pred_fallthru
      _
    // Predicated region
    $region34: #{tictactoe_net_forward.1} parent=1 // pred_check
      _
    $region35: #{tictactoe_net_forward.1} parent=1 // pred_check_branch
      %100 = sbr.rel (0) target = $region37
    $region36: #{tictactoe_net_forward.1} parent=1 // pred_region
      %s102 = ssub.s32 16, 16
      %103 = vsyncadd [#allocation14], %s102
      %s105 = sshll.u32 [#allocation13], 4
      %s106 = int_to_ptr.vmem [resolvable:$true] %s105
      %108 = dma.hbm_to_vmem [thread:$0]  %s8, 16, %s106, [#allocation14]
    $region37: #{tictactoe_net_forward.1} parent=1 // pred_fallthru
      _
    // Predicated region
    $region38: #{tictactoe_net_forward.1} parent=1 // pred_check
      _
    $region39: #{tictactoe_net_forward.1} parent=1 // pred_check_branch
      %110 = sbr.rel (0) target = $region41
    $region40: #{tictactoe_net_forward.1} parent=1 // pred_region
      %111 = dma.done [#allocation3], 640
    $region41: #{tictactoe_net_forward.1} parent=1 // pred_fallthru
      _
    // Predicated region
    $region42: #{tictactoe_net_forward.1} parent=1 // pred_check
      _
    $region43: #{tictactoe_net_forward.1} parent=1 // pred_check_branch
      %113 = sbr.rel (0) target = $region45
    $region44: #{tictactoe_net_forward.1} parent=1 // pred_region
      %114 = dma.done [#allocation5], 80
    $region45: #{tictactoe_net_forward.1} parent=1 // pred_fallthru
      _
    // Predicated region
    $region46: #{tictactoe_net_forward.1} parent=1 // pred_check
      _
    $region47: #{tictactoe_net_forward.1} parent=1 // pred_check_branch
      %116 = sbr.rel (0) target = $region49
    $region48: #{tictactoe_net_forward.1} parent=1 // pred_region
      %117 = dma.done [#allocation5], 46080
    $region49: #{tictactoe_net_forward.1} parent=1 // pred_fallthru
      _
    // Predicated region
    $region50: #{tictactoe_net_forward.1} parent=1 // pred_check
      _
    $region51: #{tictactoe_net_forward.1} parent=1 // pred_check_branch
      %119 = sbr.rel (0) target = $region53
    $region52: #{tictactoe_net_forward.1} parent=1 // pred_region
      %120 = dma.done [#allocation8], 144
    $region53: #{tictactoe_net_forward.1} parent=1 // pred_fallthru
      _
    // Predicated region
    $region54: #{tictactoe_net_forward.1} parent=1 // pred_check
      _
    $region55: #{tictactoe_net_forward.1} parent=1 // pred_check_branch
      %122 = sbr.rel (0) target = $region57
    $region56: #{tictactoe_net_forward.1} parent=1 // pred_region
      %123 = dma.done [#allocation8], 18432
    $region57: #{tictactoe_net_forward.1} parent=1 // pred_fallthru
      _
    // Predicated region
    $region58: #{tictactoe_net_forward.1} parent=1 // pred_check
      _
    $region59: #{tictactoe_net_forward.1} parent=1 // pred_check_branch
      %125 = sbr.rel (0) target = $region61
    $region60: #{tictactoe_net_forward.1} parent=1 // pred_region
      %126 = dma.done [#allocation11], 32
    $region61: #{tictactoe_net_forward.1} parent=1 // pred_fallthru
      _
    // Predicated region
    $region62: #{tictactoe_net_forward.1} parent=1 // pred_check
      _
    $region63: #{tictactoe_net_forward.1} parent=1 // pred_check_branch
      %128 = sbr.rel (0) target = $region65
    $region64: #{tictactoe_net_forward.1} parent=1 // pred_region
      %129 = dma.done [#allocation11], 2048
    $region65: #{tictactoe_net_forward.1} parent=1 // pred_fallthru
      _
    // Predicated region
    $region66: #{tictactoe_net_forward.1} parent=1 // pred_check
      _
    $region67: #{tictactoe_net_forward.1} parent=1 // pred_check_branch
      %131 = sbr.rel (0) target = $region69
    $region68: #{tictactoe_net_forward.1} parent=1 // pred_region
      %132 = dma.done [#allocation14], 16
    $region69: #{tictactoe_net_forward.1} parent=1 // pred_fallthru
      _
    %v134 = vld [vmem:[%s0] sm:$0xff]
    %v135 = vld [vmem:[%s0 + $0x8] sm:$0xff]
    %v136 = vpack.c.bf16 %v135, %v134
    %v137 = vld [vmem:[#allocation2] sm:$0xff]
    %v138 = vld [vmem:[#allocation2 + $0x8] sm:$0xff]
    %v139 = vld [vmem:[#allocation2 + $0x10] sm:$0xf]
    %v140 = vld [vmem:[#allocation2 + $0x14] sm:$0xff]
    %v141 = vld [vmem:[#allocation2 + $0x1c] sm:$0xff]
    %v142 = vld [vmem:[#allocation2 + $0x24] sm:$0xf]
    %v143 = vld [vmem:[#allocation4] sm:$0x1f]
    %v145 = vlaneseq
    %v146 = vshrl.u32 %v145, 7
    %v147 = vsub.s32 0, %v146
    %v148 = vrot.slane %v143, %v147
    %v149 = vlaneseq
    %v150 = vshrl.u32 %v149, 7
    %v151 = vsub.s32 1, %v150
    %v152 = vrot.slane %v143, %v151
    %v153 = vlaneseq
    %v154 = vshrl.u32 %v153, 7
    %v155 = vsub.s32 2, %v154
    %v156 = vrot.slane %v143, %v155
    %v157 = vlaneseq
    %v158 = vshrl.u32 %v157, 7
    %v159 = vsub.s32 3, %v158
    %v160 = vrot.slane %v143, %v159
    %v161 = vlaneseq
    %v162 = vshrl.u32 %v161, 7
    %v163 = vsub.s32 4, %v162
    %v164 = vrot.slane %v143, %v163
    %v176 = vunpack.c.l.b16 %v137
    %v177 = vunpack.c.h.b16 %v137
    %v178 = vunpack.c.l.b16 %v138
    %v179 = vunpack.c.h.b16 %v138
    %v180 = vunpack.c.l.b16 %v139
    %v181 = vunpack.c.l.b16 %v140
    %v182 = vunpack.c.h.b16 %v140
    %v183 = vunpack.c.l.b16 %v141
    %v184 = vunpack.c.h.b16 %v141
    %v185 = vunpack.c.l.b16 %v142
    %v186 = vpack.c.b16 %v181, %v176
    %v187 = vpack.c.b16 %v182, %v177
    %v188 = vpack.c.b16 %v183, %v178
    %v189 = vpack.c.b16 %v184, %v179
    %v190 = vpack.c.b16 %v185, %v180
    %vm196 = vcmask 130048
    %v198 = vsel %vm196, %v136, 0
    %200 = vmatprep.subr.bf16.mxu0 %v187
    %201 = vmatpush1.bf16.msra.mxu0 %v186
    %202 = vmatprep.subr.bf16.mxu0 0
    %203 = vmatpush1.bf16.msra.mxu0 0
    %204 = vmatprep.subr.bf16.mxu0 0
    %205 = vmatpush1.bf16.msra.mxu0 0
    %206 = vmatprep.subr.bf16.mxu0 0
    %207 = vmatpush1.bf16.msra.mxu0 0
    %208 = vmatprep.subr.bf16.mxu0 0
    %209 = vmatpush1.bf16.msra.mxu0 0
    %210 = vmatprep.subr.bf16.mxu0 0
    %211 = vmatpush1.bf16.msra.mxu0 0
    %212 = vmatprep.subr.bf16.mxu0 0
    %213 = vmatpush1.bf16.msra.mxu0 0
    %214 = vmatprep.subr.bf16.mxu0 0
    %215 = vmatpush1.bf16.msra.mxu0 0
    %216 = vmatprep.subr.bf16.mxu0 0
    %217 = vmatpush1.bf16.msra.mxu0 0
    %218 = vmatprep.subr.bf16.mxu0 0
    %219 = vmatpush1.bf16.msra.mxu0 0
    %220 = vmatprep.subr.bf16.mxu0 0
    %221 = vmatpush1.bf16.msra.mxu0 0
    %222 = vmatprep.subr.bf16.mxu0 0
    %223 = vmatpush1.bf16.msra.mxu0 0
    %224 = vmatprep.subr.bf16.mxu0 0
    %225 = vmatpush1.bf16.msra.mxu0 0
    %226 = vmatprep.subr.bf16.mxu0 0
    %227 = vmatpush1.bf16.msra.mxu0 0
    %228 = vmatprep.subr.bf16.mxu0 0
    %229 = vmatpush1.bf16.msra.mxu0 0
    %230 = vmatprep.subr.bf16.mxu0 0
    %231 = vmatpush1.bf16.msra.mxu0 0
    %232 = vmatprep.mubr.bf16.mxu0 0
    %233 = vmatmul.mubr.bf16.gmra.mrb[0].mxu0 %v198
    %v234 = vpop.f32.mrb[0].mxu0
    %v235 = vadd.f32 %v148, %v234
    %v236 = vpop.f32.mrb[0].mxu0
    %v237 = vadd.f32 %v152, %v236
    %v238 = vpop.f32.mrb[0].mxu0
    %v239 = vadd.f32 %v148, %v238
    %v240 = vpop.f32.mrb[0].mxu0
    %v241 = vadd.f32 %v152, %v240
    %242 = vdwg.mxu0
    %243 = vmatprep.subr.bf16.mxu0 %v189
    %244 = vmatpush1.bf16.msra.mxu0 %v188
    %245 = vmatprep.subr.bf16.mxu0 0
    %246 = vmatpush1.bf16.msra.mxu0 0
    %247 = vmatprep.subr.bf16.mxu0 0
    %248 = vmatpush1.bf16.msra.mxu0 0
    %249 = vmatprep.subr.bf16.mxu0 0
    %250 = vmatpush1.bf16.msra.mxu0 0
    %251 = vmatprep.subr.bf16.mxu0 0
    %252 = vmatpush1.bf16.msra.mxu0 0
    %253 = vmatprep.subr.bf16.mxu0 0
    %254 = vmatpush1.bf16.msra.mxu0 0
    %255 = vmatprep.subr.bf16.mxu0 0
    %256 = vmatpush1.bf16.msra.mxu0 0
    %257 = vmatprep.subr.bf16.mxu0 0
    %258 = vmatpush1.bf16.msra.mxu0 0
    %259 = vmatprep.subr.bf16.mxu0 0
    %260 = vmatpush1.bf16.msra.mxu0 0
    %261 = vmatprep.subr.bf16.mxu0 0
    %262 = vmatpush1.bf16.msra.mxu0 0
    %263 = vmatprep.subr.bf16.mxu0 0
    %264 = vmatpush1.bf16.msra.mxu0 0
    %265 = vmatprep.subr.bf16.mxu0 0
    %266 = vmatpush1.bf16.msra.mxu0 0
    %267 = vmatprep.subr.bf16.mxu0 0
    %268 = vmatpush1.bf16.msra.mxu0 0
    %269 = vmatprep.subr.bf16.mxu0 0
    %270 = vmatpush1.bf16.msra.mxu0 0
    %271 = vmatprep.subr.bf16.mxu0 0
    %272 = vmatpush1.bf16.msra.mxu0 0
    %273 = vmatprep.subr.bf16.mxu0 0
    %274 = vmatpush1.bf16.msra.mxu0 0
    %275 = vmatprep.mubr.bf16.mxu0 0
    %276 = vmatmul.mubr.bf16.gmra.mrb[0].mxu0 %v198
    %v277 = vpop.f32.mrb[0].mxu0
    %v278 = vadd.f32 %v156, %v277
    %v279 = vpop.f32.mrb[0].mxu0
    %v280 = vadd.f32 %v160, %v279
    %v281 = vpop.f32.mrb[0].mxu0
    %v282 = vadd.f32 %v156, %v281
    %v283 = vpop.f32.mrb[0].mxu0
    %v284 = vadd.f32 %v160, %v283
    %285 = vdwg.mxu0
    %286 = vmatprep.subr.bf16.mxu0 0
    %287 = vmatpush1.bf16.msra.mxu0 %v190
    %288 = vmatprep.subr.bf16.mxu0 0
    %289 = vmatpush1.bf16.msra.mxu0 0
    %290 = vmatprep.subr.bf16.mxu0 0
    %291 = vmatpush1.bf16.msra.mxu0 0
    %292 = vmatprep.subr.bf16.mxu0 0
    %293 = vmatpush1.bf16.msra.mxu0 0
    %294 = vmatprep.subr.bf16.mxu0 0
    %295 = vmatpush1.bf16.msra.mxu0 0
    %296 = vmatprep.subr.bf16.mxu0 0
    %297 = vmatpush1.bf16.msra.mxu0 0
    %298 = vmatprep.subr.bf16.mxu0 0
    %299 = vmatpush1.bf16.msra.mxu0 0
    %300 = vmatprep.subr.bf16.mxu0 0
    %301 = vmatpush1.bf16.msra.mxu0 0
    %302 = vmatprep.subr.bf16.mxu0 0
    %303 = vmatpush1.bf16.msra.mxu0 0
    %304 = vmatprep.subr.bf16.mxu0 0
    %305 = vmatpush1.bf16.msra.mxu0 0
    %306 = vmatprep.subr.bf16.mxu0 0
    %307 = vmatpush1.bf16.msra.mxu0 0
    %308 = vmatprep.subr.bf16.mxu0 0
    %309 = vmatpush1.bf16.msra.mxu0 0
    %310 = vmatprep.subr.bf16.mxu0 0
    %311 = vmatpush1.bf16.msra.mxu0 0
    %312 = vmatprep.subr.bf16.mxu0 0
    %313 = vmatpush1.bf16.msra.mxu0 0
    %314 = vmatprep.subr.bf16.mxu0 0
    %315 = vmatpush1.bf16.msra.mxu0 0
    %316 = vmatprep.subr.bf16.mxu0 0
    %317 = vmatpush1.bf16.msra.mxu0 0
    %318 = vmatprep.mubr.bf16.mxu0 0
    %319 = vmatmul.mubr.bf16.gmra.mrb[0].mxu0 %v198
    %v320 = vpop.f32.mrb[0].mxu0
    %v321 = vadd.f32 %v164, %v320
    %v322 = vpop.f32.mrb[0].mxu0
    %v323 = vpop.f32.mrb[0].mxu0
    %v324 = vadd.f32 %v164, %v323
    %v325 = vpop.f32.mrb[0].mxu0
    %326 = vdwg.mxu0
    %v327 = vmax.f32 %v235, 0.0
    %v328 = vmax.f32 %v237, 0.0
    %v329 = vmax.f32 %v278, 0.0
    %v330 = vmax.f32 %v280, 0.0
    %v331 = vmax.f32 %v321, 0.0
    %v332 = vmax.f32 %v239, 0.0
    %v333 = vmax.f32 %v241, 0.0
    %v334 = vmax.f32 %v282, 0.0
    %v335 = vmax.f32 %v284, 0.0
    %v336 = vmax.f32 %v324, 0.0
    %v337 = vpack.c.bf16 %v332, %v327
    %v338 = vpack.c.bf16 %v333, %v328
    %v339 = vpack.c.bf16 %v334, %v329
    %v340 = vpack.c.bf16 %v335, %v330
    %v341 = vpack.c.bf16 %v336, %v331
    %v342 = vld [vmem:[#allocation6] sm:$0xff]
    %v343 = vld [vmem:[#allocation6 + $0x8] sm:$0xff]
    %v344 = vld [vmem:[#allocation6 + $0x10] sm:$0xff]
    %v345 = vld [vmem:[#allocation6 + $0x18] sm:$0xff]
    %v346 = vld [vmem:[#allocation6 + $0x20] sm:$0xf]
    %v347 = vld [vmem:[#allocation6 + $0x24] sm:$0xff]
    %v348 = vld [vmem:[#allocation6 + $0x2c] sm:$0xff]
    %v349 = vld [vmem:[#allocation6 + $0x34] sm:$0xff]
    %v350 = vld [vmem:[#allocation6 + $0x3c] sm:$0xff]
    %v351 = vld [vmem:[#allocation6 + $0x44] sm:$0xf]
    %v352 = vld [vmem:[#allocation6 + $0x48] sm:$0xff]
    %v353 = vld [vmem:[#allocation6 + $0x50] sm:$0xff]
    %v354 = vld [vmem:[#allocation6 + $0x58] sm:$0xff]
    %v355 = vld [vmem:[#allocation6 + $0x60] sm:$0xff]
    %v356 = vld [vmem:[#allocation6 + $0x68] sm:$0xf]
    %v357 = vld [vmem:[#allocation6 + $0x6c] sm:$0xff]
    %v358 = vld [vmem:[#allocation6 + $0x74] sm:$0xff]
    %v359 = vld [vmem:[#allocation6 + $0x7c] sm:$0xff]
    %v360 = vld [vmem:[#allocation6 + $0x84] sm:$0xff]
    %v361 = vld [vmem:[#allocation6 + $0x8c] sm:$0xf]
    %v362 = vld [vmem:[#allocation6 + $0x90] sm:$0xff]
    %v363 = vld [vmem:[#allocation6 + $0x98] sm:$0xff]
    %v364 = vld [vmem:[#allocation6 + $0xa0] sm:$0xff]
    %v365 = vld [vmem:[#allocation6 + $0xa8] sm:$0xff]
    %v366 = vld [vmem:[#allocation6 + $0xb0] sm:$0xf]
    %v367 = vld [vmem:[#allocation6 + $0xb4] sm:$0xff]
    %v368 = vld [vmem:[#allocation6 + $0xbc] sm:$0xff]
    %v369 = vld [vmem:[#allocation6 + $0xc4] sm:$0xff]
    %v370 = vld [vmem:[#allocation6 + $0xcc] sm:$0xff]
    %v371 = vld [vmem:[#allocation6 + $0xd4] sm:$0xf]
    %v372 = vld [vmem:[#allocation6 + $0xd8] sm:$0xff]
    %v373 = vld [vmem:[#allocation6 + $0xe0] sm:$0xff]
    %v374 = vld [vmem:[#allocation6 + $0xe8] sm:$0xff]
    %v375 = vld [vmem:[#allocation6 + $0xf0] sm:$0xff]
    %v376 = vld [vmem:[#allocation6 + $0xf8] sm:$0xf]
    %v377 = vld [vmem:[#allocation6 + $0xfc] sm:$0xff]
    %v378 = vld [vmem:[#allocation6 + $0x104] sm:$0xff]
    %v379 = vld [vmem:[#allocation6 + $0x10c] sm:$0xff]
    %v380 = vld [vmem:[#allocation6 + $0x114] sm:$0xff]
    %v381 = vld [vmem:[#allocation6 + $0x11c] sm:$0xf]
    %v382 = vld [vmem:[#allocation6 + $0x120] sm:$0xff]
    %v383 = vld [vmem:[#allocation6 + $0x128] sm:$0xff]
    %v384 = vld [vmem:[#allocation6 + $0x130] sm:$0xff]
    %v385 = vld [vmem:[#allocation6 + $0x138] sm:$0xff]
    %v386 = vld [vmem:[#allocation6 + $0x140] sm:$0xf]
    %v387 = vld [vmem:[#allocation6 + $0x144] sm:$0xff]
    %v388 = vld [vmem:[#allocation6 + $0x14c] sm:$0xff]
    %v389 = vld [vmem:[#allocation6 + $0x154] sm:$0xff]
    %v390 = vld [vmem:[#allocation6 + $0x15c] sm:$0xff]
    %v391 = vld [vmem:[#allocation6 + $0x164] sm:$0xf]
    %v392 = vld [vmem:[#allocation6 + $0x168] sm:$0xff]
    %v393 = vld [vmem:[#allocation6 + $0x170] sm:$0xff]
    %v394 = vld [vmem:[#allocation6 + $0x178] sm:$0xff]
    %v395 = vld [vmem:[#allocation6 + $0x180] sm:$0xff]
    %v396 = vld [vmem:[#allocation6 + $0x188] sm:$0xf]
    %v397 = vld [vmem:[#allocation6 + $0x18c] sm:$0xff]
    %v398 = vld [vmem:[#allocation6 + $0x194] sm:$0xff]
    %v399 = vld [vmem:[#allocation6 + $0x19c] sm:$0xff]
    %v400 = vld [vmem:[#allocation6 + $0x1a4] sm:$0xff]
    %v401 = vld [vmem:[#allocation6 + $0x1ac] sm:$0xf]
    %v402 = vld [vmem:[#allocation6 + $0x1b0] sm:$0xff]
    %v403 = vld [vmem:[#allocation6 + $0x1b8] sm:$0xff]
    %v404 = vld [vmem:[#allocation6 + $0x1c0] sm:$0xff]
    %v405 = vld [vmem:[#allocation6 + $0x1c8] sm:$0xff]
    %v406 = vld [vmem:[#allocation6 + $0x1d0] sm:$0xf]
    %v407 = vld [vmem:[#allocation6 + $0x1d4] sm:$0xff]
    %v408 = vld [vmem:[#allocation6 + $0x1dc] sm:$0xff]
    %v409 = vld [vmem:[#allocation6 + $0x1e4] sm:$0xff]
    %v410 = vld [vmem:[#allocation6 + $0x1ec] sm:$0xff]
    %v411 = vld [vmem:[#allocation6 + $0x1f4] sm:$0xf]
    %v412 = vld [vmem:[#allocation6 + $0x1f8] sm:$0xff]
    %v413 = vld [vmem:[#allocation6 + $0x200] sm:$0xff]
    %v414 = vld [vmem:[#allocation6 + $0x208] sm:$0xff]
    %v415 = vld [vmem:[#allocation6 + $0x210] sm:$0xff]
    %v416 = vld [vmem:[#allocation6 + $0x218] sm:$0xf]
    %v417 = vld [vmem:[#allocation6 + $0x21c] sm:$0xff]
    %v418 = vld [vmem:[#allocation6 + $0x224] sm:$0xff]
    %v419 = vld [vmem:[#allocation6 + $0x22c] sm:$0xff]
    %v420 = vld [vmem:[#allocation6 + $0x234] sm:$0xff]
    %v421 = vld [vmem:[#allocation6 + $0x23c] sm:$0xf]
    %v422 = vld [vmem:[#allocation6 + $0x240] sm:$0xff]
    %v423 = vld [vmem:[#allocation6 + $0x248] sm:$0xff]
    %v424 = vld [vmem:[#allocation6 + $0x250] sm:$0xff]
    %v425 = vld [vmem:[#allocation6 + $0x258] sm:$0xff]
    %v426 = vld [vmem:[#allocation6 + $0x260] sm:$0xf]
    %v427 = vld [vmem:[#allocation6 + $0x264] sm:$0xff]
    %v428 = vld [vmem:[#allocation6 + $0x26c] sm:$0xff]
    %v429 = vld [vmem:[#allocation6 + $0x274] sm:$0xff]
    %v430 = vld [vmem:[#allocation6 + $0x27c] sm:$0xff]
    %v431 = vld [vmem:[#allocation6 + $0x284] sm:$0xf]
    %v432 = vld [vmem:[#allocation6 + $0x288] sm:$0xff]
    %v433 = vld [vmem:[#allocation6 + $0x290] sm:$0xff]
    %v434 = vld [vmem:[#allocation6 + $0x298] sm:$0xff]
    %v435 = vld [vmem:[#allocation6 + $0x2a0] sm:$0xff]
    %v436 = vld [vmem:[#allocation6 + $0x2a8] sm:$0xf]
    %v437 = vld [vmem:[#allocation6 + $0x2ac] sm:$0xff]
    %v438 = vld [vmem:[#allocation6 + $0x2b4] sm:$0xff]
    %v439 = vld [vmem:[#allocation6 + $0x2bc] sm:$0xff]
    %v440 = vld [vmem:[#allocation6 + $0x2c4] sm:$0xff]
    %v441 = vld [vmem:[#allocation6 + $0x2cc] sm:$0xf]
    %v442 = vld [vmem:[#allocation6 + $0x2d0] sm:$0xff]
    %v443 = vld [vmem:[#allocation6 + $0x2d8] sm:$0xff]
    %v444 = vld [vmem:[#allocation6 + $0x2e0] sm:$0xff]
    %v445 = vld [vmem:[#allocation6 + $0x2e8] sm:$0xff]
    %v446 = vld [vmem:[#allocation6 + $0x2f0] sm:$0xf]
    %v447 = vld [vmem:[#allocation6 + $0x2f4] sm:$0xff]
    %v448 = vld [vmem:[#allocation6 + $0x2fc] sm:$0xff]
    %v449 = vld [vmem:[#allocation6 + $0x304] sm:$0xff]
    %v450 = vld [vmem:[#allocation6 + $0x30c] sm:$0xff]
    %v451 = vld [vmem:[#allocation6 + $0x314] sm:$0xf]
    %v452 = vld [vmem:[#allocation6 + $0x318] sm:$0xff]
    %v453 = vld [vmem:[#allocation6 + $0x320] sm:$0xff]
    %v454 = vld [vmem:[#allocation6 + $0x328] sm:$0xff]
    %v455 = vld [vmem:[#allocation6 + $0x330] sm:$0xff]
    %v456 = vld [vmem:[#allocation6 + $0x338] sm:$0xf]
    %v457 = vld [vmem:[#allocation6 + $0x33c] sm:$0xff]
    %v458 = vld [vmem:[#allocation6 + $0x344] sm:$0xff]
    %v459 = vld [vmem:[#allocation6 + $0x34c] sm:$0xff]
    %v460 = vld [vmem:[#allocation6 + $0x354] sm:$0xff]
    %v461 = vld [vmem:[#allocation6 + $0x35c] sm:$0xf]
    %v462 = vld [vmem:[#allocation6 + $0x360] sm:$0xff]
    %v463 = vld [vmem:[#allocation6 + $0x368] sm:$0xff]
    %v464 = vld [vmem:[#allocation6 + $0x370] sm:$0xff]
    %v465 = vld [vmem:[#allocation6 + $0x378] sm:$0xff]
    %v466 = vld [vmem:[#allocation6 + $0x380] sm:$0xf]
    %v467 = vld [vmem:[#allocation6 + $0x384] sm:$0xff]
    %v468 = vld [vmem:[#allocation6 + $0x38c] sm:$0xff]
    %v469 = vld [vmem:[#allocation6 + $0x394] sm:$0xff]
    %v470 = vld [vmem:[#allocation6 + $0x39c] sm:$0xff]
    %v471 = vld [vmem:[#allocation6 + $0x3a4] sm:$0xf]
    %v472 = vld [vmem:[#allocation6 + $0x3a8] sm:$0xff]
    %v473 = vld [vmem:[#allocation6 + $0x3b0] sm:$0xff]
    %v474 = vld [vmem:[#allocation6 + $0x3b8] sm:$0xff]
    %v475 = vld [vmem:[#allocation6 + $0x3c0] sm:$0xff]
    %v476 = vld [vmem:[#allocation6 + $0x3c8] sm:$0xf]
    %v477 = vld [vmem:[#allocation6 + $0x3cc] sm:$0xff]
    %v478 = vld [vmem:[#allocation6 + $0x3d4] sm:$0xff]
    %v479 = vld [vmem:[#allocation6 + $0x3dc] sm:$0xff]
    %v480 = vld [vmem:[#allocation6 + $0x3e4] sm:$0xff]
    %v481 = vld [vmem:[#allocation6 + $0x3ec] sm:$0xf]
    %v482 = vld [vmem:[#allocation6 + $0x3f0] sm:$0xff]
    %v483 = vld [vmem:[#allocation6 + $0x3f8] sm:$0xff]
    %v484 = vld [vmem:[#allocation6 + $0x400] sm:$0xff]
    %v485 = vld [vmem:[#allocation6 + $0x408] sm:$0xff]
    %v486 = vld [vmem:[#allocation6 + $0x410] sm:$0xf]
    %v487 = vld [vmem:[#allocation6 + $0x414] sm:$0xff]
    %v488 = vld [vmem:[#allocation6 + $0x41c] sm:$0xff]
    %v489 = vld [vmem:[#allocation6 + $0x424] sm:$0xff]
    %v490 = vld [vmem:[#allocation6 + $0x42c] sm:$0xff]
    %v491 = vld [vmem:[#allocation6 + $0x434] sm:$0xf]
    %v492 = vld [vmem:[#allocation6 + $0x438] sm:$0xff]
    %v493 = vld [vmem:[#allocation6 + $0x440] sm:$0xff]
    %v494 = vld [vmem:[#allocation6 + $0x448] sm:$0xff]
    %v495 = vld [vmem:[#allocation6 + $0x450] sm:$0xff]
    %v496 = vld [vmem:[#allocation6 + $0x458] sm:$0xf]
    %v497 = vld [vmem:[#allocation6 + $0x45c] sm:$0xff]
    %v498 = vld [vmem:[#allocation6 + $0x464] sm:$0xff]
    %v499 = vld [vmem:[#allocation6 + $0x46c] sm:$0xff]
    %v500 = vld [vmem:[#allocation6 + $0x474] sm:$0xff]
    %v501 = vld [vmem:[#allocation6 + $0x47c] sm:$0xf]
    %v502 = vld [vmem:[#allocation6 + $0x480] sm:$0xff]
    %v503 = vld [vmem:[#allocation6 + $0x488] sm:$0xff]
    %v504 = vld [vmem:[#allocation6 + $0x490] sm:$0xff]
    %v505 = vld [vmem:[#allocation6 + $0x498] sm:$0xff]
    %v506 = vld [vmem:[#allocation6 + $0x4a0] sm:$0xf]
    %v507 = vld [vmem:[#allocation6 + $0x4a4] sm:$0xff]
    %v508 = vld [vmem:[#allocation6 + $0x4ac] sm:$0xff]
    %v509 = vld [vmem:[#allocation6 + $0x4b4] sm:$0xff]
    %v510 = vld [vmem:[#allocation6 + $0x4bc] sm:$0xff]
    %v511 = vld [vmem:[#allocation6 + $0x4c4] sm:$0xf]
    %v512 = vld [vmem:[#allocation6 + $0x4c8] sm:$0xff]
    %v513 = vld [vmem:[#allocation6 + $0x4d0] sm:$0xff]
    %v514 = vld [vmem:[#allocation6 + $0x4d8] sm:$0xff]
    %v515 = vld [vmem:[#allocation6 + $0x4e0] sm:$0xff]
    %v516 = vld [vmem:[#allocation6 + $0x4e8] sm:$0xf]
    %v517 = vld [vmem:[#allocation6 + $0x4ec] sm:$0xff]
    %v518 = vld [vmem:[#allocation6 + $0x4f4] sm:$0xff]
    %v519 = vld [vmem:[#allocation6 + $0x4fc] sm:$0xff]
    %v520 = vld [vmem:[#allocation6 + $0x504] sm:$0xff]
    %v521 = vld [vmem:[#allocation6 + $0x50c] sm:$0xf]
    %v522 = vld [vmem:[#allocation6 + $0x510] sm:$0xff]
    %v523 = vld [vmem:[#allocation6 + $0x518] sm:$0xff]
    %v524 = vld [vmem:[#allocation6 + $0x520] sm:$0xff]
    %v525 = vld [vmem:[#allocation6 + $0x528] sm:$0xff]
    %v526 = vld [vmem:[#allocation6 + $0x530] sm:$0xf]
    %v527 = vld [vmem:[#allocation6 + $0x534] sm:$0xff]
    %v528 = vld [vmem:[#allocation6 + $0x53c] sm:$0xff]
    %v529 = vld [vmem:[#allocation6 + $0x544] sm:$0xff]
    %v530 = vld [vmem:[#allocation6 + $0x54c] sm:$0xff]
    %v531 = vld [vmem:[#allocation6 + $0x554] sm:$0xf]
    %v532 = vld [vmem:[#allocation6 + $0x558] sm:$0xff]
    %v533 = vld [vmem:[#allocation6 + $0x560] sm:$0xff]
    %v534 = vld [vmem:[#allocation6 + $0x568] sm:$0xff]
    %v535 = vld [vmem:[#allocation6 + $0x570] sm:$0xff]
    %v536 = vld [vmem:[#allocation6 + $0x578] sm:$0xf]
    %v537 = vld [vmem:[#allocation6 + $0x57c] sm:$0xff]
    %v538 = vld [vmem:[#allocation6 + $0x584] sm:$0xff]
    %v539 = vld [vmem:[#allocation6 + $0x58c] sm:$0xff]
    %v540 = vld [vmem:[#allocation6 + $0x594] sm:$0xff]
    %v541 = vld [vmem:[#allocation6 + $0x59c] sm:$0xf]
    %v542 = vld [vmem:[#allocation6 + $0x5a0] sm:$0xff]
    %v543 = vld [vmem:[#allocation6 + $0x5a8] sm:$0xff]
    %v544 = vld [vmem:[#allocation6 + $0x5b0] sm:$0xff]
    %v545 = vld [vmem:[#allocation6 + $0x5b8] sm:$0xff]
    %v546 = vld [vmem:[#allocation6 + $0x5c0] sm:$0xf]
    %v547 = vld [vmem:[#allocation6 + $0x5c4] sm:$0xff]
    %v548 = vld [vmem:[#allocation6 + $0x5cc] sm:$0xff]
    %v549 = vld [vmem:[#allocation6 + $0x5d4] sm:$0xff]
    %v550 = vld [vmem:[#allocation6 + $0x5dc] sm:$0xff]
    %v551 = vld [vmem:[#allocation6 + $0x5e4] sm:$0xf]
    %v552 = vld [vmem:[#allocation6 + $0x5e8] sm:$0xff]
    %v553 = vld [vmem:[#allocation6 + $0x5f0] sm:$0xff]
    %v554 = vld [vmem:[#allocation6 + $0x5f8] sm:$0xff]
    %v555 = vld [vmem:[#allocation6 + $0x600] sm:$0xff]
    %v556 = vld [vmem:[#allocation6 + $0x608] sm:$0xf]
    %v557 = vld [vmem:[#allocation6 + $0x60c] sm:$0xff]
    %v558 = vld [vmem:[#allocation6 + $0x614] sm:$0xff]
    %v559 = vld [vmem:[#allocation6 + $0x61c] sm:$0xff]
    %v560 = vld [vmem:[#allocation6 + $0x624] sm:$0xff]
    %v561 = vld [vmem:[#allocation6 + $0x62c] sm:$0xf]
    %v562 = vld [vmem:[#allocation6 + $0x630] sm:$0xff]
    %v563 = vld [vmem:[#allocation6 + $0x638] sm:$0xff]
    %v564 = vld [vmem:[#allocation6 + $0x640] sm:$0xff]
    %v565 = vld [vmem:[#allocation6 + $0x648] sm:$0xff]
    %v566 = vld [vmem:[#allocation6 + $0x650] sm:$0xf]
    %v567 = vld [vmem:[#allocation6 + $0x654] sm:$0xff]
    %v568 = vld [vmem:[#allocation6 + $0x65c] sm:$0xff]
    %v569 = vld [vmem:[#allocation6 + $0x664] sm:$0xff]
    %v570 = vld [vmem:[#allocation6 + $0x66c] sm:$0xff]
    %v571 = vld [vmem:[#allocation6 + $0x674] sm:$0xf]
    %v572 = vld [vmem:[#allocation6 + $0x678] sm:$0xff]
    %v573 = vld [vmem:[#allocation6 + $0x680] sm:$0xff]
    %v574 = vld [vmem:[#allocation6 + $0x688] sm:$0xff]
    %v575 = vld [vmem:[#allocation6 + $0x690] sm:$0xff]
    %v576 = vld [vmem:[#allocation6 + $0x698] sm:$0xf]
    %v577 = vld [vmem:[#allocation6 + $0x69c] sm:$0xff]
    %v578 = vld [vmem:[#allocation6 + $0x6a4] sm:$0xff]
    %v579 = vld [vmem:[#allocation6 + $0x6ac] sm:$0xff]
    %v580 = vld [vmem:[#allocation6 + $0x6b4] sm:$0xff]
    %v581 = vld [vmem:[#allocation6 + $0x6bc] sm:$0xf]
    %v582 = vld [vmem:[#allocation6 + $0x6c0] sm:$0xff]
    %v583 = vld [vmem:[#allocation6 + $0x6c8] sm:$0xff]
    %v584 = vld [vmem:[#allocation6 + $0x6d0] sm:$0xff]
    %v585 = vld [vmem:[#allocation6 + $0x6d8] sm:$0xff]
    %v586 = vld [vmem:[#allocation6 + $0x6e0] sm:$0xf]
    %v587 = vld [vmem:[#allocation6 + $0x6e4] sm:$0xff]
    %v588 = vld [vmem:[#allocation6 + $0x6ec] sm:$0xff]
    %v589 = vld [vmem:[#allocation6 + $0x6f4] sm:$0xff]
    %v590 = vld [vmem:[#allocation6 + $0x6fc] sm:$0xff]
    %v591 = vld [vmem:[#allocation6 + $0x704] sm:$0xf]
    %v592 = vld [vmem:[#allocation6 + $0x708] sm:$0xff]
    %v593 = vld [vmem:[#allocation6 + $0x710] sm:$0xff]
    %v594 = vld [vmem:[#allocation6 + $0x718] sm:$0xff]
    %v595 = vld [vmem:[#allocation6 + $0x720] sm:$0xff]
    %v596 = vld [vmem:[#allocation6 + $0x728] sm:$0xf]
    %v597 = vld [vmem:[#allocation6 + $0x72c] sm:$0xff]
    %v598 = vld [vmem:[#allocation6 + $0x734] sm:$0xff]
    %v599 = vld [vmem:[#allocation6 + $0x73c] sm:$0xff]
    %v600 = vld [vmem:[#allocation6 + $0x744] sm:$0xff]
    %v601 = vld [vmem:[#allocation6 + $0x74c] sm:$0xf]
    %v602 = vld [vmem:[#allocation6 + $0x750] sm:$0xff]
    %v603 = vld [vmem:[#allocation6 + $0x758] sm:$0xff]
    %v604 = vld [vmem:[#allocation6 + $0x760] sm:$0xff]
    %v605 = vld [vmem:[#allocation6 + $0x768] sm:$0xff]
    %v606 = vld [vmem:[#allocation6 + $0x770] sm:$0xf]
    %v607 = vld [vmem:[#allocation6 + $0x774] sm:$0xff]
    %v608 = vld [vmem:[#allocation6 + $0x77c] sm:$0xff]
    %v609 = vld [vmem:[#allocation6 + $0x784] sm:$0xff]
    %v610 = vld [vmem:[#allocation6 + $0x78c] sm:$0xff]
    %v611 = vld [vmem:[#allocation6 + $0x794] sm:$0xf]
    %v612 = vld [vmem:[#allocation6 + $0x798] sm:$0xff]
    %v613 = vld [vmem:[#allocation6 + $0x7a0] sm:$0xff]
    %v614 = vld [vmem:[#allocation6 + $0x7a8] sm:$0xff]
    %v615 = vld [vmem:[#allocation6 + $0x7b0] sm:$0xff]
    %v616 = vld [vmem:[#allocation6 + $0x7b8] sm:$0xf]
    %v617 = vld [vmem:[#allocation6 + $0x7bc] sm:$0xff]
    %v618 = vld [vmem:[#allocation6 + $0x7c4] sm:$0xff]
    %v619 = vld [vmem:[#allocation6 + $0x7cc] sm:$0xff]
    %v620 = vld [vmem:[#allocation6 + $0x7d4] sm:$0xff]
    %v621 = vld [vmem:[#allocation6 + $0x7dc] sm:$0xf]
    %v622 = vld [vmem:[#allocation6 + $0x7e0] sm:$0xff]
    %v623 = vld [vmem:[#allocation6 + $0x7e8] sm:$0xff]
    %v624 = vld [vmem:[#allocation6 + $0x7f0] sm:$0xff]
    %v625 = vld [vmem:[#allocation6 + $0x7f8] sm:$0xff]
    %v626 = vld [vmem:[#allocation6 + $0x800] sm:$0xf]
    %v627 = vld [vmem:[#allocation6 + $0x804] sm:$0xff]
    %v628 = vld [vmem:[#allocation6 + $0x80c] sm:$0xff]
    %v629 = vld [vmem:[#allocation6 + $0x814] sm:$0xff]
    %v630 = vld [vmem:[#allocation6 + $0x81c] sm:$0xff]
    %v631 = vld [vmem:[#allocation6 + $0x824] sm:$0xf]
    %v632 = vld [vmem:[#allocation6 + $0x828] sm:$0xff]
    %v633 = vld [vmem:[#allocation6 + $0x830] sm:$0xff]
    %v634 = vld [vmem:[#allocation6 + $0x838] sm:$0xff]
    %v635 = vld [vmem:[#allocation6 + $0x840] sm:$0xff]
    %v636 = vld [vmem:[#allocation6 + $0x848] sm:$0xf]
    %v637 = vld [vmem:[#allocation6 + $0x84c] sm:$0xff]
    %v638 = vld [vmem:[#allocation6 + $0x854] sm:$0xff]
    %v639 = vld [vmem:[#allocation6 + $0x85c] sm:$0xff]
    %v640 = vld [vmem:[#allocation6 + $0x864] sm:$0xff]
    %v641 = vld [vmem:[#allocation6 + $0x86c] sm:$0xf]
    %v642 = vld [vmem:[#allocation6 + $0x870] sm:$0xff]
    %v643 = vld [vmem:[#allocation6 + $0x878] sm:$0xff]
    %v644 = vld [vmem:[#allocation6 + $0x880] sm:$0xff]
    %v645 = vld [vmem:[#allocation6 + $0x888] sm:$0xff]
    %v646 = vld [vmem:[#allocation6 + $0x890] sm:$0xf]
    %v647 = vld [vmem:[#allocation6 + $0x894] sm:$0xff]
    %v648 = vld [vmem:[#allocation6 + $0x89c] sm:$0xff]
    %v649 = vld [vmem:[#allocation6 + $0x8a4] sm:$0xff]
    %v650 = vld [vmem:[#allocation6 + $0x8ac] sm:$0xff]
    %v651 = vld [vmem:[#allocation6 + $0x8b4] sm:$0xf]
    %v652 = vld [vmem:[#allocation6 + $0x8b8] sm:$0xff]
    %v653 = vld [vmem:[#allocation6 + $0x8c0] sm:$0xff]
    %v654 = vld [vmem:[#allocation6 + $0x8c8] sm:$0xff]
    %v655 = vld [vmem:[#allocation6 + $0x8d0] sm:$0xff]
    %v656 = vld [vmem:[#allocation6 + $0x8d8] sm:$0xf]
    %v657 = vld [vmem:[#allocation6 + $0x8dc] sm:$0xff]
    %v658 = vld [vmem:[#allocation6 + $0x8e4] sm:$0xff]
    %v659 = vld [vmem:[#allocation6 + $0x8ec] sm:$0xff]
    %v660 = vld [vmem:[#allocation6 + $0x8f4] sm:$0xff]
    %v661 = vld [vmem:[#allocation6 + $0x8fc] sm:$0xf]
    %v662 = vld [vmem:[#allocation6 + $0x900] sm:$0xff]
    %v663 = vld [vmem:[#allocation6 + $0x908] sm:$0xff]
    %v664 = vld [vmem:[#allocation6 + $0x910] sm:$0xff]
    %v665 = vld [vmem:[#allocation6 + $0x918] sm:$0xff]
    %v666 = vld [vmem:[#allocation6 + $0x920] sm:$0xf]
    %v667 = vld [vmem:[#allocation6 + $0x924] sm:$0xff]
    %v668 = vld [vmem:[#allocation6 + $0x92c] sm:$0xff]
    %v669 = vld [vmem:[#allocation6 + $0x934] sm:$0xff]
    %v670 = vld [vmem:[#allocation6 + $0x93c] sm:$0xff]
    %v671 = vld [vmem:[#allocation6 + $0x944] sm:$0xf]
    %v672 = vld [vmem:[#allocation6 + $0x948] sm:$0xff]
    %v673 = vld [vmem:[#allocation6 + $0x950] sm:$0xff]
    %v674 = vld [vmem:[#allocation6 + $0x958] sm:$0xff]
    %v675 = vld [vmem:[#allocation6 + $0x960] sm:$0xff]
    %v676 = vld [vmem:[#allocation6 + $0x968] sm:$0xf]
    %v677 = vld [vmem:[#allocation6 + $0x96c] sm:$0xff]
    %v678 = vld [vmem:[#allocation6 + $0x974] sm:$0xff]
    %v679 = vld [vmem:[#allocation6 + $0x97c] sm:$0xff]
    %v680 = vld [vmem:[#allocation6 + $0x984] sm:$0xff]
    %v681 = vld [vmem:[#allocation6 + $0x98c] sm:$0xf]
    %v682 = vld [vmem:[#allocation6 + $0x990] sm:$0xff]
    %v683 = vld [vmem:[#allocation6 + $0x998] sm:$0xff]
    %v684 = vld [vmem:[#allocation6 + $0x9a0] sm:$0xff]
    %v685 = vld [vmem:[#allocation6 + $0x9a8] sm:$0xff]
    %v686 = vld [vmem:[#allocation6 + $0x9b0] sm:$0xf]
    %v687 = vld [vmem:[#allocation6 + $0x9b4] sm:$0xff]
    %v688 = vld [vmem:[#allocation6 + $0x9bc] sm:$0xff]
    %v689 = vld [vmem:[#allocation6 + $0x9c4] sm:$0xff]
    %v690 = vld [vmem:[#allocation6 + $0x9cc] sm:$0xff]
    %v691 = vld [vmem:[#allocation6 + $0x9d4] sm:$0xf]
    %v692 = vld [vmem:[#allocation6 + $0x9d8] sm:$0xff]
    %v693 = vld [vmem:[#allocation6 + $0x9e0] sm:$0xff]
    %v694 = vld [vmem:[#allocation6 + $0x9e8] sm:$0xff]
    %v695 = vld [vmem:[#allocation6 + $0x9f0] sm:$0xff]
    %v696 = vld [vmem:[#allocation6 + $0x9f8] sm:$0xf]
    %v697 = vld [vmem:[#allocation6 + $0x9fc] sm:$0xff]
    %v698 = vld [vmem:[#allocation6 + $0xa04] sm:$0xff]
    %v699 = vld [vmem:[#allocation6 + $0xa0c] sm:$0xff]
    %v700 = vld [vmem:[#allocation6 + $0xa14] sm:$0xff]
    %v701 = vld [vmem:[#allocation6 + $0xa1c] sm:$0xf]
    %v702 = vld [vmem:[#allocation6 + $0xa20] sm:$0xff]
    %v703 = vld [vmem:[#allocation6 + $0xa28] sm:$0xff]
    %v704 = vld [vmem:[#allocation6 + $0xa30] sm:$0xff]
    %v705 = vld [vmem:[#allocation6 + $0xa38] sm:$0xff]
    %v706 = vld [vmem:[#allocation6 + $0xa40] sm:$0xf]
    %v707 = vld [vmem:[#allocation6 + $0xa44] sm:$0xff]
    %v708 = vld [vmem:[#allocation6 + $0xa4c] sm:$0xff]
    %v709 = vld [vmem:[#allocation6 + $0xa54] sm:$0xff]
    %v710 = vld [vmem:[#allocation6 + $0xa5c] sm:$0xff]
    %v711 = vld [vmem:[#allocation6 + $0xa64] sm:$0xf]
    %v712 = vld [vmem:[#allocation6 + $0xa68] sm:$0xff]
    %v713 = vld [vmem:[#allocation6 + $0xa70] sm:$0xff]
    %v714 = vld [vmem:[#allocation6 + $0xa78] sm:$0xff]
    %v715 = vld [vmem:[#allocation6 + $0xa80] sm:$0xff]
    %v716 = vld [vmem:[#allocation6 + $0xa88] sm:$0xf]
    %v717 = vld [vmem:[#allocation6 + $0xa8c] sm:$0xff]
    %v718 = vld [vmem:[#allocation6 + $0xa94] sm:$0xff]
    %v719 = vld [vmem:[#allocation6 + $0xa9c] sm:$0xff]
    %v720 = vld [vmem:[#allocation6 + $0xaa4] sm:$0xff]
    %v721 = vld [vmem:[#allocation6 + $0xaac] sm:$0xf]
    %v722 = vld [vmem:[#allocation6 + $0xab0] sm:$0xff]
    %v723 = vld [vmem:[#allocation6 + $0xab8] sm:$0xff]
    %v724 = vld [vmem:[#allocation6 + $0xac0] sm:$0xff]
    %v725 = vld [vmem:[#allocation6 + $0xac8] sm:$0xff]
    %v726 = vld [vmem:[#allocation6 + $0xad0] sm:$0xf]
    %v727 = vld [vmem:[#allocation6 + $0xad4] sm:$0xff]
    %v728 = vld [vmem:[#allocation6 + $0xadc] sm:$0xff]
    %v729 = vld [vmem:[#allocation6 + $0xae4] sm:$0xff]
    %v730 = vld [vmem:[#allocation6 + $0xaec] sm:$0xff]
    %v731 = vld [vmem:[#allocation6 + $0xaf4] sm:$0xf]
    %v732 = vld [vmem:[#allocation6 + $0xaf8] sm:$0xff]
    %v733 = vld [vmem:[#allocation6 + $0xb00] sm:$0xff]
    %v734 = vld [vmem:[#allocation6 + $0xb08] sm:$0xff]
    %v735 = vld [vmem:[#allocation6 + $0xb10] sm:$0xff]
    %v736 = vld [vmem:[#allocation6 + $0xb18] sm:$0xf]
    %v737 = vld [vmem:[#allocation6 + $0xb1c] sm:$0xff]
    %v738 = vld [vmem:[#allocation6 + $0xb24] sm:$0xff]
    %v739 = vld [vmem:[#allocation6 + $0xb2c] sm:$0xff]
    %v740 = vld [vmem:[#allocation6 + $0xb34] sm:$0xff]
    %v741 = vld [vmem:[#allocation6 + $0xb3c] sm:$0xf]
    %v742 = vld [vmem:[#allocation7] sm:$0xff]
    %v743 = vld [vmem:[#allocation7 + $0x8] sm:$0x1]
    %v746 = vlaneseq
    %v747 = vshrl.u32 %v746, 7
    %v748 = vsub.s32 0, %v747
    %v749 = vrot.slane %v742, %v748
    %v750 = vlaneseq
    %v751 = vshrl.u32 %v750, 7
    %v752 = vsub.s32 1, %v751
    %v753 = vrot.slane %v742, %v752
    %v754 = vlaneseq
    %v755 = vshrl.u32 %v754, 7
    %v756 = vsub.s32 2, %v755
    %v757 = vrot.slane %v742, %v756
    %v758 = vlaneseq
    %v759 = vshrl.u32 %v758, 7
    %v760 = vsub.s32 3, %v759
    %v761 = vrot.slane %v742, %v760
    %v762 = vlaneseq
    %v763 = vshrl.u32 %v762, 7
    %v764 = vsub.s32 4, %v763
    %v765 = vrot.slane %v742, %v764
    %v766 = vlaneseq
    %v767 = vshrl.u32 %v766, 7
    %v768 = vsub.s32 5, %v767
    %v769 = vrot.slane %v742, %v768
    %v770 = vlaneseq
    %v771 = vshrl.u32 %v770, 7
    %v772 = vsub.s32 6, %v771
    %v773 = vrot.slane %v742, %v772
    %v774 = vlaneseq
    %v775 = vshrl.u32 %v774, 7
    %v776 = vsub.s32 7, %v775
    %v777 = vrot.slane %v742, %v776
    %v778 = vlaneseq
    %v779 = vshrl.u32 %v778, 7
    %v780 = vsub.s32 0, %v779
    %v781 = vrot.slane %v743, %v780
    %v1191 = vunpack.c.l.b16 %v342
    %v1192 = vunpack.c.h.b16 %v342
    %v1193 = vunpack.c.l.b16 %v343
    %v1194 = vunpack.c.h.b16 %v343
    %v1195 = vunpack.c.l.b16 %v344
    %v1196 = vunpack.c.h.b16 %v344
    %v1197 = vunpack.c.l.b16 %v345
    %v1198 = vunpack.c.h.b16 %v345
    %v1199 = vunpack.c.l.b16 %v346
    %v1200 = vunpack.c.l.b16 %v347
    %v1201 = vunpack.c.h.b16 %v347
    %v1202 = vunpack.c.l.b16 %v348
    %v1203 = vunpack.c.h.b16 %v348
    %v1204 = vunpack.c.l.b16 %v349
    %v1205 = vunpack.c.h.b16 %v349
    %v1206 = vunpack.c.l.b16 %v350
    %v1207 = vunpack.c.h.b16 %v350
    %v1208 = vunpack.c.l.b16 %v351
    %v1209 = vunpack.c.l.b16 %v352
    %v1210 = vunpack.c.h.b16 %v352
    %v1211 = vunpack.c.l.b16 %v353
    %v1212 = vunpack.c.h.b16 %v353
    %v1213 = vunpack.c.l.b16 %v354
    %v1214 = vunpack.c.h.b16 %v354
    %v1215 = vunpack.c.l.b16 %v355
    %v1216 = vunpack.c.h.b16 %v355
    %v1217 = vunpack.c.l.b16 %v356
    %v1218 = vunpack.c.l.b16 %v357
    %v1219 = vunpack.c.h.b16 %v357
    %v1220 = vunpack.c.l.b16 %v358
    %v1221 = vunpack.c.h.b16 %v358
    %v1222 = vunpack.c.l.b16 %v359
    %v1223 = vunpack.c.h.b16 %v359
    %v1224 = vunpack.c.l.b16 %v360
    %v1225 = vunpack.c.h.b16 %v360
    %v1226 = vunpack.c.l.b16 %v361
    %v1227 = vunpack.c.l.b16 %v362
    %v1228 = vunpack.c.h.b16 %v362
    %v1229 = vunpack.c.l.b16 %v363
    %v1230 = vunpack.c.h.b16 %v363
    %v1231 = vunpack.c.l.b16 %v364
    %v1232 = vunpack.c.h.b16 %v364
    %v1233 = vunpack.c.l.b16 %v365
    %v1234 = vunpack.c.h.b16 %v365
    %v1235 = vunpack.c.l.b16 %v366
    %v1236 = vunpack.c.l.b16 %v367
    %v1237 = vunpack.c.h.b16 %v367
    %v1238 = vunpack.c.l.b16 %v368
    %v1239 = vunpack.c.h.b16 %v368
    %v1240 = vunpack.c.l.b16 %v369
    %v1241 = vunpack.c.h.b16 %v369
    %v1242 = vunpack.c.l.b16 %v370
    %v1243 = vunpack.c.h.b16 %v370
    %v1244 = vunpack.c.l.b16 %v371
    %v1245 = vunpack.c.l.b16 %v372
    %v1246 = vunpack.c.h.b16 %v372
    %v1247 = vunpack.c.l.b16 %v373
    %v1248 = vunpack.c.h.b16 %v373
    %v1249 = vunpack.c.l.b16 %v374
    %v1250 = vunpack.c.h.b16 %v374
    %v1251 = vunpack.c.l.b16 %v375
    %v1252 = vunpack.c.h.b16 %v375
    %v1253 = vunpack.c.l.b16 %v376
    %v1254 = vunpack.c.l.b16 %v377
    %v1255 = vunpack.c.h.b16 %v377
    %v1256 = vunpack.c.l.b16 %v378
    %v1257 = vunpack.c.h.b16 %v378
    %v1258 = vunpack.c.l.b16 %v379
    %v1259 = vunpack.c.h.b16 %v379
    %v1260 = vunpack.c.l.b16 %v380
    %v1261 = vunpack.c.h.b16 %v380
    %v1262 = vunpack.c.l.b16 %v381
    %v1263 = vunpack.c.l.b16 %v382
    %v1264 = vunpack.c.h.b16 %v382
    %v1265 = vunpack.c.l.b16 %v383
    %v1266 = vunpack.c.h.b16 %v383
    %v1267 = vunpack.c.l.b16 %v384
    %v1268 = vunpack.c.h.b16 %v384
    %v1269 = vunpack.c.l.b16 %v385
    %v1270 = vunpack.c.h.b16 %v385
    %v1271 = vunpack.c.l.b16 %v386
    %v1272 = vunpack.c.l.b16 %v387
    %v1273 = vunpack.c.h.b16 %v387
    %v1274 = vunpack.c.l.b16 %v388
    %v1275 = vunpack.c.h.b16 %v388
    %v1276 = vunpack.c.l.b16 %v389
    %v1277 = vunpack.c.h.b16 %v389
    %v1278 = vunpack.c.l.b16 %v390
    %v1279 = vunpack.c.h.b16 %v390
    %v1280 = vunpack.c.l.b16 %v391
    %v1281 = vunpack.c.l.b16 %v392
    %v1282 = vunpack.c.h.b16 %v392
    %v1283 = vunpack.c.l.b16 %v393
    %v1284 = vunpack.c.h.b16 %v393
    %v1285 = vunpack.c.l.b16 %v394
    %v1286 = vunpack.c.h.b16 %v394
    %v1287 = vunpack.c.l.b16 %v395
    %v1288 = vunpack.c.h.b16 %v395
    %v1289 = vunpack.c.l.b16 %v396
    %v1290 = vunpack.c.l.b16 %v397
    %v1291 = vunpack.c.h.b16 %v397
    %v1292 = vunpack.c.l.b16 %v398
    %v1293 = vunpack.c.h.b16 %v398
    %v1294 = vunpack.c.l.b16 %v399
    %v1295 = vunpack.c.h.b16 %v399
    %v1296 = vunpack.c.l.b16 %v400
    %v1297 = vunpack.c.h.b16 %v400
    %v1298 = vunpack.c.l.b16 %v401
    %v1299 = vunpack.c.l.b16 %v402
    %v1300 = vunpack.c.h.b16 %v402
    %v1301 = vunpack.c.l.b16 %v403
    %v1302 = vunpack.c.h.b16 %v403
    %v1303 = vunpack.c.l.b16 %v404
    %v1304 = vunpack.c.h.b16 %v404
    %v1305 = vunpack.c.l.b16 %v405
    %v1306 = vunpack.c.h.b16 %v405
    %v1307 = vunpack.c.l.b16 %v406
    %v1308 = vunpack.c.l.b16 %v407
    %v1309 = vunpack.c.h.b16 %v407
    %v1310 = vunpack.c.l.b16 %v408
    %v1311 = vunpack.c.h.b16 %v408
    %v1312 = vunpack.c.l.b16 %v409
    %v1313 = vunpack.c.h.b16 %v409
    %v1314 = vunpack.c.l.b16 %v410
    %v1315 = vunpack.c.h.b16 %v410
    %v1316 = vunpack.c.l.b16 %v411
    %v1317 = vunpack.c.l.b16 %v412
    %v1318 = vunpack.c.h.b16 %v412
    %v1319 = vunpack.c.l.b16 %v413
    %v1320 = vunpack.c.h.b16 %v413
    %v1321 = vunpack.c.l.b16 %v414
    %v1322 = vunpack.c.h.b16 %v414
    %v1323 = vunpack.c.l.b16 %v415
    %v1324 = vunpack.c.h.b16 %v415
    %v1325 = vunpack.c.l.b16 %v416
    %v1326 = vunpack.c.l.b16 %v417
    %v1327 = vunpack.c.h.b16 %v417
    %v1328 = vunpack.c.l.b16 %v418
    %v1329 = vunpack.c.h.b16 %v418
    %v1330 = vunpack.c.l.b16 %v419
    %v1331 = vunpack.c.h.b16 %v419
    %v1332 = vunpack.c.l.b16 %v420
    %v1333 = vunpack.c.h.b16 %v420
    %v1334 = vunpack.c.l.b16 %v421
    %v1335 = vunpack.c.l.b16 %v422
    %v1336 = vunpack.c.h.b16 %v422
    %v1337 = vunpack.c.l.b16 %v423
    %v1338 = vunpack.c.h.b16 %v423
    %v1339 = vunpack.c.l.b16 %v424
    %v1340 = vunpack.c.h.b16 %v424
    %v1341 = vunpack.c.l.b16 %v425
    %v1342 = vunpack.c.h.b16 %v425
    %v1343 = vunpack.c.l.b16 %v426
    %v1344 = vunpack.c.l.b16 %v427
    %v1345 = vunpack.c.h.b16 %v427
    %v1346 = vunpack.c.l.b16 %v428
    %v1347 = vunpack.c.h.b16 %v428
    %v1348 = vunpack.c.l.b16 %v429
    %v1349 = vunpack.c.h.b16 %v429
    %v1350 = vunpack.c.l.b16 %v430
    %v1351 = vunpack.c.h.b16 %v430
    %v1352 = vunpack.c.l.b16 %v431
    %v1353 = vunpack.c.l.b16 %v432
    %v1354 = vunpack.c.h.b16 %v432
    %v1355 = vunpack.c.l.b16 %v433
    %v1356 = vunpack.c.h.b16 %v433
    %v1357 = vunpack.c.l.b16 %v434
    %v1358 = vunpack.c.h.b16 %v434
    %v1359 = vunpack.c.l.b16 %v435
    %v1360 = vunpack.c.h.b16 %v435
    %v1361 = vunpack.c.l.b16 %v436
    %v1362 = vunpack.c.l.b16 %v437
    %v1363 = vunpack.c.h.b16 %v437
    %v1364 = vunpack.c.l.b16 %v438
    %v1365 = vunpack.c.h.b16 %v438
    %v1366 = vunpack.c.l.b16 %v439
    %v1367 = vunpack.c.h.b16 %v439
    %v1368 = vunpack.c.l.b16 %v440
    %v1369 = vunpack.c.h.b16 %v440
    %v1370 = vunpack.c.l.b16 %v441
    %v1371 = vunpack.c.l.b16 %v442
    %v1372 = vunpack.c.h.b16 %v442
    %v1373 = vunpack.c.l.b16 %v443
    %v1374 = vunpack.c.h.b16 %v443
    %v1375 = vunpack.c.l.b16 %v444
    %v1376 = vunpack.c.h.b16 %v444
    %v1377 = vunpack.c.l.b16 %v445
    %v1378 = vunpack.c.h.b16 %v445
    %v1379 = vunpack.c.l.b16 %v446
    %v1380 = vunpack.c.l.b16 %v447
    %v1381 = vunpack.c.h.b16 %v447
    %v1382 = vunpack.c.l.b16 %v448
    %v1383 = vunpack.c.h.b16 %v448
    %v1384 = vunpack.c.l.b16 %v449
    %v1385 = vunpack.c.h.b16 %v449
    %v1386 = vunpack.c.l.b16 %v450
    %v1387 = vunpack.c.h.b16 %v450
    %v1388 = vunpack.c.l.b16 %v451
    %v1389 = vunpack.c.l.b16 %v452
    %v1390 = vunpack.c.h.b16 %v452
    %v1391 = vunpack.c.l.b16 %v453
    %v1392 = vunpack.c.h.b16 %v453
    %v1393 = vunpack.c.l.b16 %v454
    %v1394 = vunpack.c.h.b16 %v454
    %v1395 = vunpack.c.l.b16 %v455
    %v1396 = vunpack.c.h.b16 %v455
    %v1397 = vunpack.c.l.b16 %v456
    %v1398 = vunpack.c.l.b16 %v457
    %v1399 = vunpack.c.h.b16 %v457
    %v1400 = vunpack.c.l.b16 %v458
    %v1401 = vunpack.c.h.b16 %v458
    %v1402 = vunpack.c.l.b16 %v459
    %v1403 = vunpack.c.h.b16 %v459
    %v1404 = vunpack.c.l.b16 %v460
    %v1405 = vunpack.c.h.b16 %v460
    %v1406 = vunpack.c.l.b16 %v461
    %v1407 = vunpack.c.l.b16 %v462
    %v1408 = vunpack.c.h.b16 %v462
    %v1409 = vunpack.c.l.b16 %v463
    %v1410 = vunpack.c.h.b16 %v463
    %v1411 = vunpack.c.l.b16 %v464
    %v1412 = vunpack.c.h.b16 %v464
    %v1413 = vunpack.c.l.b16 %v465
    %v1414 = vunpack.c.h.b16 %v465
    %v1415 = vunpack.c.l.b16 %v466
    %v1416 = vunpack.c.l.b16 %v467
    %v1417 = vunpack.c.h.b16 %v467
    %v1418 = vunpack.c.l.b16 %v468
    %v1419 = vunpack.c.h.b16 %v468
    %v1420 = vunpack.c.l.b16 %v469
    %v1421 = vunpack.c.h.b16 %v469
    %v1422 = vunpack.c.l.b16 %v470
    %v1423 = vunpack.c.h.b16 %v470
    %v1424 = vunpack.c.l.b16 %v471
    %v1425 = vunpack.c.l.b16 %v472
    %v1426 = vunpack.c.h.b16 %v472
    %v1427 = vunpack.c.l.b16 %v473
    %v1428 = vunpack.c.h.b16 %v473
    %v1429 = vunpack.c.l.b16 %v474
    %v1430 = vunpack.c.h.b16 %v474
    %v1431 = vunpack.c.l.b16 %v475
    %v1432 = vunpack.c.h.b16 %v475
    %v1433 = vunpack.c.l.b16 %v476
    %v1434 = vunpack.c.l.b16 %v477
    %v1435 = vunpack.c.h.b16 %v477
    %v1436 = vunpack.c.l.b16 %v478
    %v1437 = vunpack.c.h.b16 %v478
    %v1438 = vunpack.c.l.b16 %v479
    %v1439 = vunpack.c.h.b16 %v479
    %v1440 = vunpack.c.l.b16 %v480
    %v1441 = vunpack.c.h.b16 %v480
    %v1442 = vunpack.c.l.b16 %v481
    %v1443 = vunpack.c.l.b16 %v482
    %v1444 = vunpack.c.h.b16 %v482
    %v1445 = vunpack.c.l.b16 %v483
    %v1446 = vunpack.c.h.b16 %v483
    %v1447 = vunpack.c.l.b16 %v484
    %v1448 = vunpack.c.h.b16 %v484
    %v1449 = vunpack.c.l.b16 %v485
    %v1450 = vunpack.c.h.b16 %v485
    %v1451 = vunpack.c.l.b16 %v486
    %v1452 = vunpack.c.l.b16 %v487
    %v1453 = vunpack.c.h.b16 %v487
    %v1454 = vunpack.c.l.b16 %v488
    %v1455 = vunpack.c.h.b16 %v488
    %v1456 = vunpack.c.l.b16 %v489
    %v1457 = vunpack.c.h.b16 %v489
    %v1458 = vunpack.c.l.b16 %v490
    %v1459 = vunpack.c.h.b16 %v490
    %v1460 = vunpack.c.l.b16 %v491
    %v1461 = vunpack.c.l.b16 %v492
    %v1462 = vunpack.c.h.b16 %v492
    %v1463 = vunpack.c.l.b16 %v493
    %v1464 = vunpack.c.h.b16 %v493
    %v1465 = vunpack.c.l.b16 %v494
    %v1466 = vunpack.c.h.b16 %v494
    %v1467 = vunpack.c.l.b16 %v495
    %v1468 = vunpack.c.h.b16 %v495
    %v1469 = vunpack.c.l.b16 %v496
    %v1470 = vunpack.c.l.b16 %v497
    %v1471 = vunpack.c.h.b16 %v497
    %v1472 = vunpack.c.l.b16 %v498
    %v1473 = vunpack.c.h.b16 %v498
    %v1474 = vunpack.c.l.b16 %v499
    %v1475 = vunpack.c.h.b16 %v499
    %v1476 = vunpack.c.l.b16 %v500
    %v1477 = vunpack.c.h.b16 %v500
    %v1478 = vunpack.c.l.b16 %v501
    %v1479 = vunpack.c.l.b16 %v502
    %v1480 = vunpack.c.h.b16 %v502
    %v1481 = vunpack.c.l.b16 %v503
    %v1482 = vunpack.c.h.b16 %v503
    %v1483 = vunpack.c.l.b16 %v504
    %v1484 = vunpack.c.h.b16 %v504
    %v1485 = vunpack.c.l.b16 %v505
    %v1486 = vunpack.c.h.b16 %v505
    %v1487 = vunpack.c.l.b16 %v506
    %v1488 = vunpack.c.l.b16 %v507
    %v1489 = vunpack.c.h.b16 %v507
    %v1490 = vunpack.c.l.b16 %v508
    %v1491 = vunpack.c.h.b16 %v508
    %v1492 = vunpack.c.l.b16 %v509
    %v1493 = vunpack.c.h.b16 %v509
    %v1494 = vunpack.c.l.b16 %v510
    %v1495 = vunpack.c.h.b16 %v510
    %v1496 = vunpack.c.l.b16 %v511
    %v1497 = vunpack.c.l.b16 %v512
    %v1498 = vunpack.c.h.b16 %v512
    %v1499 = vunpack.c.l.b16 %v513
    %v1500 = vunpack.c.h.b16 %v513
    %v1501 = vunpack.c.l.b16 %v514
    %v1502 = vunpack.c.h.b16 %v514
    %v1503 = vunpack.c.l.b16 %v515
    %v1504 = vunpack.c.h.b16 %v515
    %v1505 = vunpack.c.l.b16 %v516
    %v1506 = vunpack.c.l.b16 %v517
    %v1507 = vunpack.c.h.b16 %v517
    %v1508 = vunpack.c.l.b16 %v518
    %v1509 = vunpack.c.h.b16 %v518
    %v1510 = vunpack.c.l.b16 %v519
    %v1511 = vunpack.c.h.b16 %v519
    %v1512 = vunpack.c.l.b16 %v520
    %v1513 = vunpack.c.h.b16 %v520
    %v1514 = vunpack.c.l.b16 %v521
    %v1515 = vunpack.c.l.b16 %v522
    %v1516 = vunpack.c.h.b16 %v522
    %v1517 = vunpack.c.l.b16 %v523
    %v1518 = vunpack.c.h.b16 %v523
    %v1519 = vunpack.c.l.b16 %v524
    %v1520 = vunpack.c.h.b16 %v524
    %v1521 = vunpack.c.l.b16 %v525
    %v1522 = vunpack.c.h.b16 %v525
    %v1523 = vunpack.c.l.b16 %v526
    %v1524 = vunpack.c.l.b16 %v527
    %v1525 = vunpack.c.h.b16 %v527
    %v1526 = vunpack.c.l.b16 %v528
    %v1527 = vunpack.c.h.b16 %v528
    %v1528 = vunpack.c.l.b16 %v529
    %v1529 = vunpack.c.h.b16 %v529
    %v1530 = vunpack.c.l.b16 %v530
    %v1531 = vunpack.c.h.b16 %v530
    %v1532 = vunpack.c.l.b16 %v531
    %v1533 = vunpack.c.l.b16 %v532
    %v1534 = vunpack.c.h.b16 %v532
    %v1535 = vunpack.c.l.b16 %v533
    %v1536 = vunpack.c.h.b16 %v533
    %v1537 = vunpack.c.l.b16 %v534
    %v1538 = vunpack.c.h.b16 %v534
    %v1539 = vunpack.c.l.b16 %v535
    %v1540 = vunpack.c.h.b16 %v535
    %v1541 = vunpack.c.l.b16 %v536
    %v1542 = vunpack.c.l.b16 %v537
    %v1543 = vunpack.c.h.b16 %v537
    %v1544 = vunpack.c.l.b16 %v538
    %v1545 = vunpack.c.h.b16 %v538
    %v1546 = vunpack.c.l.b16 %v539
    %v1547 = vunpack.c.h.b16 %v539
    %v1548 = vunpack.c.l.b16 %v540
    %v1549 = vunpack.c.h.b16 %v540
    %v1550 = vunpack.c.l.b16 %v541
    %v1551 = vunpack.c.l.b16 %v542
    %v1552 = vunpack.c.h.b16 %v542
    %v1553 = vunpack.c.l.b16 %v543
    %v1554 = vunpack.c.h.b16 %v543
    %v1555 = vunpack.c.l.b16 %v544
    %v1556 = vunpack.c.h.b16 %v544
    %v1557 = vunpack.c.l.b16 %v545
    %v1558 = vunpack.c.h.b16 %v545
    %v1559 = vunpack.c.l.b16 %v546
    %v1560 = vunpack.c.l.b16 %v547
    %v1561 = vunpack.c.h.b16 %v547
    %v1562 = vunpack.c.l.b16 %v548
    %v1563 = vunpack.c.h.b16 %v548
    %v1564 = vunpack.c.l.b16 %v549
    %v1565 = vunpack.c.h.b16 %v549
    %v1566 = vunpack.c.l.b16 %v550
    %v1567 = vunpack.c.h.b16 %v550
    %v1568 = vunpack.c.l.b16 %v551
    %v1569 = vunpack.c.l.b16 %v552
    %v1570 = vunpack.c.h.b16 %v552
    %v1571 = vunpack.c.l.b16 %v553
    %v1572 = vunpack.c.h.b16 %v553
    %v1573 = vunpack.c.l.b16 %v554
    %v1574 = vunpack.c.h.b16 %v554
    %v1575 = vunpack.c.l.b16 %v555
    %v1576 = vunpack.c.h.b16 %v555
    %v1577 = vunpack.c.l.b16 %v556
    %v1578 = vunpack.c.l.b16 %v557
    %v1579 = vunpack.c.h.b16 %v557
    %v1580 = vunpack.c.l.b16 %v558
    %v1581 = vunpack.c.h.b16 %v558
    %v1582 = vunpack.c.l.b16 %v559
    %v1583 = vunpack.c.h.b16 %v559
    %v1584 = vunpack.c.l.b16 %v560
    %v1585 = vunpack.c.h.b16 %v560
    %v1586 = vunpack.c.l.b16 %v561
    %v1587 = vunpack.c.l.b16 %v562
    %v1588 = vunpack.c.h.b16 %v562
    %v1589 = vunpack.c.l.b16 %v563
    %v1590 = vunpack.c.h.b16 %v563
    %v1591 = vunpack.c.l.b16 %v564
    %v1592 = vunpack.c.h.b16 %v564
    %v1593 = vunpack.c.l.b16 %v565
    %v1594 = vunpack.c.h.b16 %v565
    %v1595 = vunpack.c.l.b16 %v566
    %v1596 = vunpack.c.l.b16 %v567
    %v1597 = vunpack.c.h.b16 %v567
    %v1598 = vunpack.c.l.b16 %v568
    %v1599 = vunpack.c.h.b16 %v568
    %v1600 = vunpack.c.l.b16 %v569
    %v1601 = vunpack.c.h.b16 %v569
    %v1602 = vunpack.c.l.b16 %v570
    %v1603 = vunpack.c.h.b16 %v570
    %v1604 = vunpack.c.l.b16 %v571
    %v1605 = vunpack.c.l.b16 %v572
    %v1606 = vunpack.c.h.b16 %v572
    %v1607 = vunpack.c.l.b16 %v573
    %v1608 = vunpack.c.h.b16 %v573
    %v1609 = vunpack.c.l.b16 %v574
    %v1610 = vunpack.c.h.b16 %v574
    %v1611 = vunpack.c.l.b16 %v575
    %v1612 = vunpack.c.h.b16 %v575
    %v1613 = vunpack.c.l.b16 %v576
    %v1614 = vunpack.c.l.b16 %v577
    %v1615 = vunpack.c.h.b16 %v577
    %v1616 = vunpack.c.l.b16 %v578
    %v1617 = vunpack.c.h.b16 %v578
    %v1618 = vunpack.c.l.b16 %v579
    %v1619 = vunpack.c.h.b16 %v579
    %v1620 = vunpack.c.l.b16 %v580
    %v1621 = vunpack.c.h.b16 %v580
    %v1622 = vunpack.c.l.b16 %v581
    %v1623 = vunpack.c.l.b16 %v582
    %v1624 = vunpack.c.h.b16 %v582
    %v1625 = vunpack.c.l.b16 %v583
    %v1626 = vunpack.c.h.b16 %v583
    %v1627 = vunpack.c.l.b16 %v584
    %v1628 = vunpack.c.h.b16 %v584
    %v1629 = vunpack.c.l.b16 %v585
    %v1630 = vunpack.c.h.b16 %v585
    %v1631 = vunpack.c.l.b16 %v586
    %v1632 = vunpack.c.l.b16 %v587
    %v1633 = vunpack.c.h.b16 %v587
    %v1634 = vunpack.c.l.b16 %v588
    %v1635 = vunpack.c.h.b16 %v588
    %v1636 = vunpack.c.l.b16 %v589
    %v1637 = vunpack.c.h.b16 %v589
    %v1638 = vunpack.c.l.b16 %v590
    %v1639 = vunpack.c.h.b16 %v590
    %v1640 = vunpack.c.l.b16 %v591
    %v1641 = vunpack.c.l.b16 %v592
    %v1642 = vunpack.c.h.b16 %v592
    %v1643 = vunpack.c.l.b16 %v593
    %v1644 = vunpack.c.h.b16 %v593
    %v1645 = vunpack.c.l.b16 %v594
    %v1646 = vunpack.c.h.b16 %v594
    %v1647 = vunpack.c.l.b16 %v595
    %v1648 = vunpack.c.h.b16 %v595
    %v1649 = vunpack.c.l.b16 %v596
    %v1650 = vunpack.c.l.b16 %v597
    %v1651 = vunpack.c.h.b16 %v597
    %v1652 = vunpack.c.l.b16 %v598
    %v1653 = vunpack.c.h.b16 %v598
    %v1654 = vunpack.c.l.b16 %v599
    %v1655 = vunpack.c.h.b16 %v599
    %v1656 = vunpack.c.l.b16 %v600
    %v1657 = vunpack.c.h.b16 %v600
    %v1658 = vunpack.c.l.b16 %v601
    %v1659 = vunpack.c.l.b16 %v602
    %v1660 = vunpack.c.h.b16 %v602
    %v1661 = vunpack.c.l.b16 %v603
    %v1662 = vunpack.c.h.b16 %v603
    %v1663 = vunpack.c.l.b16 %v604
    %v1664 = vunpack.c.h.b16 %v604
    %v1665 = vunpack.c.l.b16 %v605
    %v1666 = vunpack.c.h.b16 %v605
    %v1667 = vunpack.c.l.b16 %v606
    %v1668 = vunpack.c.l.b16 %v607
    %v1669 = vunpack.c.h.b16 %v607
    %v1670 = vunpack.c.l.b16 %v608
    %v1671 = vunpack.c.h.b16 %v608
    %v1672 = vunpack.c.l.b16 %v609
    %v1673 = vunpack.c.h.b16 %v609
    %v1674 = vunpack.c.l.b16 %v610
    %v1675 = vunpack.c.h.b16 %v610
    %v1676 = vunpack.c.l.b16 %v611
    %v1677 = vunpack.c.l.b16 %v612
    %v1678 = vunpack.c.h.b16 %v612
    %v1679 = vunpack.c.l.b16 %v613
    %v1680 = vunpack.c.h.b16 %v613
    %v1681 = vunpack.c.l.b16 %v614
    %v1682 = vunpack.c.h.b16 %v614
    %v1683 = vunpack.c.l.b16 %v615
    %v1684 = vunpack.c.h.b16 %v615
    %v1685 = vunpack.c.l.b16 %v616
    %v1686 = vunpack.c.l.b16 %v617
    %v1687 = vunpack.c.h.b16 %v617
    %v1688 = vunpack.c.l.b16 %v618
    %v1689 = vunpack.c.h.b16 %v618
    %v1690 = vunpack.c.l.b16 %v619
    %v1691 = vunpack.c.h.b16 %v619
    %v1692 = vunpack.c.l.b16 %v620
    %v1693 = vunpack.c.h.b16 %v620
    %v1694 = vunpack.c.l.b16 %v621
    %v1695 = vunpack.c.l.b16 %v622
    %v1696 = vunpack.c.h.b16 %v622
    %v1697 = vunpack.c.l.b16 %v623
    %v1698 = vunpack.c.h.b16 %v623
    %v1699 = vunpack.c.l.b16 %v624
    %v1700 = vunpack.c.h.b16 %v624
    %v1701 = vunpack.c.l.b16 %v625
    %v1702 = vunpack.c.h.b16 %v625
    %v1703 = vunpack.c.l.b16 %v626
    %v1704 = vunpack.c.l.b16 %v627
    %v1705 = vunpack.c.h.b16 %v627
    %v1706 = vunpack.c.l.b16 %v628
    %v1707 = vunpack.c.h.b16 %v628
    %v1708 = vunpack.c.l.b16 %v629
    %v1709 = vunpack.c.h.b16 %v629
    %v1710 = vunpack.c.l.b16 %v630
    %v1711 = vunpack.c.h.b16 %v630
    %v1712 = vunpack.c.l.b16 %v631
    %v1713 = vunpack.c.l.b16 %v632
    %v1714 = vunpack.c.h.b16 %v632
    %v1715 = vunpack.c.l.b16 %v633
    %v1716 = vunpack.c.h.b16 %v633
    %v1717 = vunpack.c.l.b16 %v634
    %v1718 = vunpack.c.h.b16 %v634
    %v1719 = vunpack.c.l.b16 %v635
    %v1720 = vunpack.c.h.b16 %v635
    %v1721 = vunpack.c.l.b16 %v636
    %v1722 = vunpack.c.l.b16 %v637
    %v1723 = vunpack.c.h.b16 %v637
    %v1724 = vunpack.c.l.b16 %v638
    %v1725 = vunpack.c.h.b16 %v638
    %v1726 = vunpack.c.l.b16 %v639
    %v1727 = vunpack.c.h.b16 %v639
    %v1728 = vunpack.c.l.b16 %v640
    %v1729 = vunpack.c.h.b16 %v640
    %v1730 = vunpack.c.l.b16 %v641
    %v1731 = vunpack.c.l.b16 %v642
    %v1732 = vunpack.c.h.b16 %v642
    %v1733 = vunpack.c.l.b16 %v643
    %v1734 = vunpack.c.h.b16 %v643
    %v1735 = vunpack.c.l.b16 %v644
    %v1736 = vunpack.c.h.b16 %v644
    %v1737 = vunpack.c.l.b16 %v645
    %v1738 = vunpack.c.h.b16 %v645
    %v1739 = vunpack.c.l.b16 %v646
    %v1740 = vunpack.c.l.b16 %v647
    %v1741 = vunpack.c.h.b16 %v647
    %v1742 = vunpack.c.l.b16 %v648
    %v1743 = vunpack.c.h.b16 %v648
    %v1744 = vunpack.c.l.b16 %v649
    %v1745 = vunpack.c.h.b16 %v649
    %v1746 = vunpack.c.l.b16 %v650
    %v1747 = vunpack.c.h.b16 %v650
    %v1748 = vunpack.c.l.b16 %v651
    %v1749 = vunpack.c.l.b16 %v652
    %v1750 = vunpack.c.h.b16 %v652
    %v1751 = vunpack.c.l.b16 %v653
    %v1752 = vunpack.c.h.b16 %v653
    %v1753 = vunpack.c.l.b16 %v654
    %v1754 = vunpack.c.h.b16 %v654
    %v1755 = vunpack.c.l.b16 %v655
    %v1756 = vunpack.c.h.b16 %v655
    %v1757 = vunpack.c.l.b16 %v656
    %v1758 = vunpack.c.l.b16 %v657
    %v1759 = vunpack.c.h.b16 %v657
    %v1760 = vunpack.c.l.b16 %v658
    %v1761 = vunpack.c.h.b16 %v658
    %v1762 = vunpack.c.l.b16 %v659
    %v1763 = vunpack.c.h.b16 %v659
    %v1764 = vunpack.c.l.b16 %v660
    %v1765 = vunpack.c.h.b16 %v660
    %v1766 = vunpack.c.l.b16 %v661
    %v1767 = vunpack.c.l.b16 %v662
    %v1768 = vunpack.c.h.b16 %v662
    %v1769 = vunpack.c.l.b16 %v663
    %v1770 = vunpack.c.h.b16 %v663
    %v1771 = vunpack.c.l.b16 %v664
    %v1772 = vunpack.c.h.b16 %v664
    %v1773 = vunpack.c.l.b16 %v665
    %v1774 = vunpack.c.h.b16 %v665
    %v1775 = vunpack.c.l.b16 %v666
    %v1776 = vunpack.c.l.b16 %v667
    %v1777 = vunpack.c.h.b16 %v667
    %v1778 = vunpack.c.l.b16 %v668
    %v1779 = vunpack.c.h.b16 %v668
    %v1780 = vunpack.c.l.b16 %v669
    %v1781 = vunpack.c.h.b16 %v669
    %v1782 = vunpack.c.l.b16 %v670
    %v1783 = vunpack.c.h.b16 %v670
    %v1784 = vunpack.c.l.b16 %v671
    %v1785 = vunpack.c.l.b16 %v672
    %v1786 = vunpack.c.h.b16 %v672
    %v1787 = vunpack.c.l.b16 %v673
    %v1788 = vunpack.c.h.b16 %v673
    %v1789 = vunpack.c.l.b16 %v674
    %v1790 = vunpack.c.h.b16 %v674
    %v1791 = vunpack.c.l.b16 %v675
    %v1792 = vunpack.c.h.b16 %v675
    %v1793 = vunpack.c.l.b16 %v676
    %v1794 = vunpack.c.l.b16 %v677
    %v1795 = vunpack.c.h.b16 %v677
    %v1796 = vunpack.c.l.b16 %v678
    %v1797 = vunpack.c.h.b16 %v678
    %v1798 = vunpack.c.l.b16 %v679
    %v1799 = vunpack.c.h.b16 %v679
    %v1800 = vunpack.c.l.b16 %v680
    %v1801 = vunpack.c.h.b16 %v680
    %v1802 = vunpack.c.l.b16 %v681
    %v1803 = vunpack.c.l.b16 %v682
    %v1804 = vunpack.c.h.b16 %v682
    %v1805 = vunpack.c.l.b16 %v683
    %v1806 = vunpack.c.h.b16 %v683
    %v1807 = vunpack.c.l.b16 %v684
    %v1808 = vunpack.c.h.b16 %v684
    %v1809 = vunpack.c.l.b16 %v685
    %v1810 = vunpack.c.h.b16 %v685
    %v1811 = vunpack.c.l.b16 %v686
    %v1812 = vunpack.c.l.b16 %v687
    %v1813 = vunpack.c.h.b16 %v687
    %v1814 = vunpack.c.l.b16 %v688
    %v1815 = vunpack.c.h.b16 %v688
    %v1816 = vunpack.c.l.b16 %v689
    %v1817 = vunpack.c.h.b16 %v689
    %v1818 = vunpack.c.l.b16 %v690
    %v1819 = vunpack.c.h.b16 %v690
    %v1820 = vunpack.c.l.b16 %v691
    %v1821 = vunpack.c.l.b16 %v692
    %v1822 = vunpack.c.h.b16 %v692
    %v1823 = vunpack.c.l.b16 %v693
    %v1824 = vunpack.c.h.b16 %v693
    %v1825 = vunpack.c.l.b16 %v694
    %v1826 = vunpack.c.h.b16 %v694
    %v1827 = vunpack.c.l.b16 %v695
    %v1828 = vunpack.c.h.b16 %v695
    %v1829 = vunpack.c.l.b16 %v696
    %v1830 = vunpack.c.l.b16 %v697
    %v1831 = vunpack.c.h.b16 %v697
    %v1832 = vunpack.c.l.b16 %v698
    %v1833 = vunpack.c.h.b16 %v698
    %v1834 = vunpack.c.l.b16 %v699
    %v1835 = vunpack.c.h.b16 %v699
    %v1836 = vunpack.c.l.b16 %v700
    %v1837 = vunpack.c.h.b16 %v700
    %v1838 = vunpack.c.l.b16 %v701
    %v1839 = vunpack.c.l.b16 %v702
    %v1840 = vunpack.c.h.b16 %v702
    %v1841 = vunpack.c.l.b16 %v703
    %v1842 = vunpack.c.h.b16 %v703
    %v1843 = vunpack.c.l.b16 %v704
    %v1844 = vunpack.c.h.b16 %v704
    %v1845 = vunpack.c.l.b16 %v705
    %v1846 = vunpack.c.h.b16 %v705
    %v1847 = vunpack.c.l.b16 %v706
    %v1848 = vunpack.c.l.b16 %v707
    %v1849 = vunpack.c.h.b16 %v707
    %v1850 = vunpack.c.l.b16 %v708
    %v1851 = vunpack.c.h.b16 %v708
    %v1852 = vunpack.c.l.b16 %v709
    %v1853 = vunpack.c.h.b16 %v709
    %v1854 = vunpack.c.l.b16 %v710
    %v1855 = vunpack.c.h.b16 %v710
    %v1856 = vunpack.c.l.b16 %v711
    %v1857 = vunpack.c.l.b16 %v712
    %v1858 = vunpack.c.h.b16 %v712
    %v1859 = vunpack.c.l.b16 %v713
    %v1860 = vunpack.c.h.b16 %v713
    %v1861 = vunpack.c.l.b16 %v714
    %v1862 = vunpack.c.h.b16 %v714
    %v1863 = vunpack.c.l.b16 %v715
    %v1864 = vunpack.c.h.b16 %v715
    %v1865 = vunpack.c.l.b16 %v716
    %v1866 = vunpack.c.l.b16 %v717
    %v1867 = vunpack.c.h.b16 %v717
    %v1868 = vunpack.c.l.b16 %v718
    %v1869 = vunpack.c.h.b16 %v718
    %v1870 = vunpack.c.l.b16 %v719
    %v1871 = vunpack.c.h.b16 %v719
    %v1872 = vunpack.c.l.b16 %v720
    %v1873 = vunpack.c.h.b16 %v720
    %v1874 = vunpack.c.l.b16 %v721
    %v1875 = vunpack.c.l.b16 %v722
    %v1876 = vunpack.c.h.b16 %v722
    %v1877 = vunpack.c.l.b16 %v723
    %v1878 = vunpack.c.h.b16 %v723
    %v1879 = vunpack.c.l.b16 %v724
    %v1880 = vunpack.c.h.b16 %v724
    %v1881 = vunpack.c.l.b16 %v725
    %v1882 = vunpack.c.h.b16 %v725
    %v1883 = vunpack.c.l.b16 %v726
    %v1884 = vunpack.c.l.b16 %v727
    %v1885 = vunpack.c.h.b16 %v727
    %v1886 = vunpack.c.l.b16 %v728
    %v1887 = vunpack.c.h.b16 %v728
    %v1888 = vunpack.c.l.b16 %v729
    %v1889 = vunpack.c.h.b16 %v729
    %v1890 = vunpack.c.l.b16 %v730
    %v1891 = vunpack.c.h.b16 %v730
    %v1892 = vunpack.c.l.b16 %v731
    %v1893 = vunpack.c.l.b16 %v732
    %v1894 = vunpack.c.h.b16 %v732
    %v1895 = vunpack.c.l.b16 %v733
    %v1896 = vunpack.c.h.b16 %v733
    %v1897 = vunpack.c.l.b16 %v734
    %v1898 = vunpack.c.h.b16 %v734
    %v1899 = vunpack.c.l.b16 %v735
    %v1900 = vunpack.c.h.b16 %v735
    %v1901 = vunpack.c.l.b16 %v736
    %v1902 = vunpack.c.l.b16 %v737
    %v1903 = vunpack.c.h.b16 %v737
    %v1904 = vunpack.c.l.b16 %v738
    %v1905 = vunpack.c.h.b16 %v738
    %v1906 = vunpack.c.l.b16 %v739
    %v1907 = vunpack.c.h.b16 %v739
    %v1908 = vunpack.c.l.b16 %v740
    %v1909 = vunpack.c.h.b16 %v740
    %v1910 = vunpack.c.l.b16 %v741
    %v1911 = vpack.c.b16 %v1200, %v1191
    %v1912 = vpack.c.b16 %v1201, %v1192
    %v1913 = vpack.c.b16 %v1202, %v1193
    %v1914 = vpack.c.b16 %v1203, %v1194
    %v1915 = vpack.c.b16 %v1204, %v1195
    %v1916 = vpack.c.b16 %v1205, %v1196
    %v1917 = vpack.c.b16 %v1206, %v1197
    %v1918 = vpack.c.b16 %v1207, %v1198
    %v1919 = vpack.c.b16 %v1208, %v1199
    %v1920 = vpack.c.b16 %v1218, %v1209
    %v1921 = vpack.c.b16 %v1219, %v1210
    %v1922 = vpack.c.b16 %v1220, %v1211
    %v1923 = vpack.c.b16 %v1221, %v1212
    %v1924 = vpack.c.b16 %v1222, %v1213
    %v1925 = vpack.c.b16 %v1223, %v1214
    %v1926 = vpack.c.b16 %v1224, %v1215
    %v1927 = vpack.c.b16 %v1225, %v1216
    %v1928 = vpack.c.b16 %v1226, %v1217
    %v1929 = vpack.c.b16 %v1236, %v1227
    %v1930 = vpack.c.b16 %v1237, %v1228
    %v1931 = vpack.c.b16 %v1238, %v1229
    %v1932 = vpack.c.b16 %v1239, %v1230
    %v1933 = vpack.c.b16 %v1240, %v1231
    %v1934 = vpack.c.b16 %v1241, %v1232
    %v1935 = vpack.c.b16 %v1242, %v1233
    %v1936 = vpack.c.b16 %v1243, %v1234
    %v1937 = vpack.c.b16 %v1244, %v1235
    %v1938 = vpack.c.b16 %v1254, %v1245
    %v1939 = vpack.c.b16 %v1255, %v1246
    %v1940 = vpack.c.b16 %v1256, %v1247
    %v1941 = vpack.c.b16 %v1257, %v1248
    %v1942 = vpack.c.b16 %v1258, %v1249
    %v1943 = vpack.c.b16 %v1259, %v1250
    %v1944 = vpack.c.b16 %v1260, %v1251
    %v1945 = vpack.c.b16 %v1261, %v1252
    %v1946 = vpack.c.b16 %v1262, %v1253
    %v1947 = vpack.c.b16 %v1272, %v1263
    %v1948 = vpack.c.b16 %v1273, %v1264
    %v1949 = vpack.c.b16 %v1274, %v1265
    %v1950 = vpack.c.b16 %v1275, %v1266
    %v1951 = vpack.c.b16 %v1276, %v1267
    %v1952 = vpack.c.b16 %v1277, %v1268
    %v1953 = vpack.c.b16 %v1278, %v1269
    %v1954 = vpack.c.b16 %v1279, %v1270
    %v1955 = vpack.c.b16 %v1280, %v1271
    %v1956 = vpack.c.b16 %v1290, %v1281
    %v1957 = vpack.c.b16 %v1291, %v1282
    %v1958 = vpack.c.b16 %v1292, %v1283
    %v1959 = vpack.c.b16 %v1293, %v1284
    %v1960 = vpack.c.b16 %v1294, %v1285
    %v1961 = vpack.c.b16 %v1295, %v1286
    %v1962 = vpack.c.b16 %v1296, %v1287
    %v1963 = vpack.c.b16 %v1297, %v1288
    %v1964 = vpack.c.b16 %v1298, %v1289
    %v1965 = vpack.c.b16 %v1308, %v1299
    %v1966 = vpack.c.b16 %v1309, %v1300
    %v1967 = vpack.c.b16 %v1310, %v1301
    %v1968 = vpack.c.b16 %v1311, %v1302
    %v1969 = vpack.c.b16 %v1312, %v1303
    %v1970 = vpack.c.b16 %v1313, %v1304
    %v1971 = vpack.c.b16 %v1314, %v1305
    %v1972 = vpack.c.b16 %v1315, %v1306
    %v1973 = vpack.c.b16 %v1316, %v1307
    %v1974 = vpack.c.b16 %v1326, %v1317
    %v1975 = vpack.c.b16 %v1327, %v1318
    %v1976 = vpack.c.b16 %v1328, %v1319
    %v1977 = vpack.c.b16 %v1329, %v1320
    %v1978 = vpack.c.b16 %v1330, %v1321
    %v1979 = vpack.c.b16 %v1331, %v1322
    %v1980 = vpack.c.b16 %v1332, %v1323
    %v1981 = vpack.c.b16 %v1333, %v1324
    %v1982 = vpack.c.b16 %v1334, %v1325
    %v1983 = vpack.c.b16 %v1344, %v1335
    %v1984 = vpack.c.b16 %v1345, %v1336
    %v1985 = vpack.c.b16 %v1346, %v1337
    %v1986 = vpack.c.b16 %v1347, %v1338
    %v1987 = vpack.c.b16 %v1348, %v1339
    %v1988 = vpack.c.b16 %v1349, %v1340
    %v1989 = vpack.c.b16 %v1350, %v1341
    %v1990 = vpack.c.b16 %v1351, %v1342
    %v1991 = vpack.c.b16 %v1352, %v1343
    %v1992 = vpack.c.b16 %v1362, %v1353
    %v1993 = vpack.c.b16 %v1363, %v1354
    %v1994 = vpack.c.b16 %v1364, %v1355
    %v1995 = vpack.c.b16 %v1365, %v1356
    %v1996 = vpack.c.b16 %v1366, %v1357
    %v1997 = vpack.c.b16 %v1367, %v1358
    %v1998 = vpack.c.b16 %v1368, %v1359
    %v1999 = vpack.c.b16 %v1369, %v1360
    %v2000 = vpack.c.b16 %v1370, %v1361
    %v2001 = vpack.c.b16 %v1380, %v1371
    %v2002 = vpack.c.b16 %v1381, %v1372
    %v2003 = vpack.c.b16 %v1382, %v1373
    %v2004 = vpack.c.b16 %v1383, %v1374
    %v2005 = vpack.c.b16 %v1384, %v1375
    %v2006 = vpack.c.b16 %v1385, %v1376
    %v2007 = vpack.c.b16 %v1386, %v1377
    %v2008 = vpack.c.b16 %v1387, %v1378
    %v2009 = vpack.c.b16 %v1388, %v1379
    %v2010 = vpack.c.b16 %v1398, %v1389
    %v2011 = vpack.c.b16 %v1399, %v1390
    %v2012 = vpack.c.b16 %v1400, %v1391
    %v2013 = vpack.c.b16 %v1401, %v1392
    %v2014 = vpack.c.b16 %v1402, %v1393
    %v2015 = vpack.c.b16 %v1403, %v1394
    %v2016 = vpack.c.b16 %v1404, %v1395
    %v2017 = vpack.c.b16 %v1405, %v1396
    %v2018 = vpack.c.b16 %v1406, %v1397
    %v2019 = vpack.c.b16 %v1416, %v1407
    %v2020 = vpack.c.b16 %v1417, %v1408
    %v2021 = vpack.c.b16 %v1418, %v1409
    %v2022 = vpack.c.b16 %v1419, %v1410
    %v2023 = vpack.c.b16 %v1420, %v1411
    %v2024 = vpack.c.b16 %v1421, %v1412
    %v2025 = vpack.c.b16 %v1422, %v1413
    %v2026 = vpack.c.b16 %v1423, %v1414
    %v2027 = vpack.c.b16 %v1424, %v1415
    %v2028 = vpack.c.b16 %v1434, %v1425
    %v2029 = vpack.c.b16 %v1435, %v1426
    %v2030 = vpack.c.b16 %v1436, %v1427
    %v2031 = vpack.c.b16 %v1437, %v1428
    %v2032 = vpack.c.b16 %v1438, %v1429
    %v2033 = vpack.c.b16 %v1439, %v1430
    %v2034 = vpack.c.b16 %v1440, %v1431
    %v2035 = vpack.c.b16 %v1441, %v1432
    %v2036 = vpack.c.b16 %v1442, %v1433
    %v2037 = vpack.c.b16 %v1452, %v1443
    %v2038 = vpack.c.b16 %v1453, %v1444
    %v2039 = vpack.c.b16 %v1454, %v1445
    %v2040 = vpack.c.b16 %v1455, %v1446
    %v2041 = vpack.c.b16 %v1456, %v1447
    %v2042 = vpack.c.b16 %v1457, %v1448
    %v2043 = vpack.c.b16 %v1458, %v1449
    %v2044 = vpack.c.b16 %v1459, %v1450
    %v2045 = vpack.c.b16 %v1460, %v1451
    %v2046 = vpack.c.b16 %v1470, %v1461
    %v2047 = vpack.c.b16 %v1471, %v1462
    %v2048 = vpack.c.b16 %v1472, %v1463
    %v2049 = vpack.c.b16 %v1473, %v1464
    %v2050 = vpack.c.b16 %v1474, %v1465
    %v2051 = vpack.c.b16 %v1475, %v1466
    %v2052 = vpack.c.b16 %v1476, %v1467
    %v2053 = vpack.c.b16 %v1477, %v1468
    %v2054 = vpack.c.b16 %v1478, %v1469
    %v2055 = vpack.c.b16 %v1488, %v1479
    %v2056 = vpack.c.b16 %v1489, %v1480
    %v2057 = vpack.c.b16 %v1490, %v1481
    %v2058 = vpack.c.b16 %v1491, %v1482
    %v2059 = vpack.c.b16 %v1492, %v1483
    %v2060 = vpack.c.b16 %v1493, %v1484
    %v2061 = vpack.c.b16 %v1494, %v1485
    %v2062 = vpack.c.b16 %v1495, %v1486
    %v2063 = vpack.c.b16 %v1496, %v1487
    %v2064 = vpack.c.b16 %v1506, %v1497
    %v2065 = vpack.c.b16 %v1507, %v1498
    %v2066 = vpack.c.b16 %v1508, %v1499
    %v2067 = vpack.c.b16 %v1509, %v1500
    %v2068 = vpack.c.b16 %v1510, %v1501
    %v2069 = vpack.c.b16 %v1511, %v1502
    %v2070 = vpack.c.b16 %v1512, %v1503
    %v2071 = vpack.c.b16 %v1513, %v1504
    %v2072 = vpack.c.b16 %v1514, %v1505
    %v2073 = vpack.c.b16 %v1524, %v1515
    %v2074 = vpack.c.b16 %v1525, %v1516
    %v2075 = vpack.c.b16 %v1526, %v1517
    %v2076 = vpack.c.b16 %v1527, %v1518
    %v2077 = vpack.c.b16 %v1528, %v1519
    %v2078 = vpack.c.b16 %v1529, %v1520
    %v2079 = vpack.c.b16 %v1530, %v1521
    %v2080 = vpack.c.b16 %v1531, %v1522
    %v2081 = vpack.c.b16 %v1532, %v1523
    %v2082 = vpack.c.b16 %v1542, %v1533
    %v2083 = vpack.c.b16 %v1543, %v1534
    %v2084 = vpack.c.b16 %v1544, %v1535
    %v2085 = vpack.c.b16 %v1545, %v1536
    %v2086 = vpack.c.b16 %v1546, %v1537
    %v2087 = vpack.c.b16 %v1547, %v1538
    %v2088 = vpack.c.b16 %v1548, %v1539
    %v2089 = vpack.c.b16 %v1549, %v1540
    %v2090 = vpack.c.b16 %v1550, %v1541
    %v2091 = vpack.c.b16 %v1560, %v1551
    %v2092 = vpack.c.b16 %v1561, %v1552
    %v2093 = vpack.c.b16 %v1562, %v1553
    %v2094 = vpack.c.b16 %v1563, %v1554
    %v2095 = vpack.c.b16 %v1564, %v1555
    %v2096 = vpack.c.b16 %v1565, %v1556
    %v2097 = vpack.c.b16 %v1566, %v1557
    %v2098 = vpack.c.b16 %v1567, %v1558
    %v2099 = vpack.c.b16 %v1568, %v1559
    %v2100 = vpack.c.b16 %v1578, %v1569
    %v2101 = vpack.c.b16 %v1579, %v1570
    %v2102 = vpack.c.b16 %v1580, %v1571
    %v2103 = vpack.c.b16 %v1581, %v1572
    %v2104 = vpack.c.b16 %v1582, %v1573
    %v2105 = vpack.c.b16 %v1583, %v1574
    %v2106 = vpack.c.b16 %v1584, %v1575
    %v2107 = vpack.c.b16 %v1585, %v1576
    %v2108 = vpack.c.b16 %v1586, %v1577
    %v2109 = vpack.c.b16 %v1596, %v1587
    %v2110 = vpack.c.b16 %v1597, %v1588
    %v2111 = vpack.c.b16 %v1598, %v1589
    %v2112 = vpack.c.b16 %v1599, %v1590
    %v2113 = vpack.c.b16 %v1600, %v1591
    %v2114 = vpack.c.b16 %v1601, %v1592
    %v2115 = vpack.c.b16 %v1602, %v1593
    %v2116 = vpack.c.b16 %v1603, %v1594
    %v2117 = vpack.c.b16 %v1604, %v1595
    %v2118 = vpack.c.b16 %v1614, %v1605
    %v2119 = vpack.c.b16 %v1615, %v1606
    %v2120 = vpack.c.b16 %v1616, %v1607
    %v2121 = vpack.c.b16 %v1617, %v1608
    %v2122 = vpack.c.b16 %v1618, %v1609
    %v2123 = vpack.c.b16 %v1619, %v1610
    %v2124 = vpack.c.b16 %v1620, %v1611
    %v2125 = vpack.c.b16 %v1621, %v1612
    %v2126 = vpack.c.b16 %v1622, %v1613
    %v2127 = vpack.c.b16 %v1632, %v1623
    %v2128 = vpack.c.b16 %v1633, %v1624
    %v2129 = vpack.c.b16 %v1634, %v1625
    %v2130 = vpack.c.b16 %v1635, %v1626
    %v2131 = vpack.c.b16 %v1636, %v1627
    %v2132 = vpack.c.b16 %v1637, %v1628
    %v2133 = vpack.c.b16 %v1638, %v1629
    %v2134 = vpack.c.b16 %v1639, %v1630
    %v2135 = vpack.c.b16 %v1640, %v1631
    %v2136 = vpack.c.b16 %v1650, %v1641
    %v2137 = vpack.c.b16 %v1651, %v1642
    %v2138 = vpack.c.b16 %v1652, %v1643
    %v2139 = vpack.c.b16 %v1653, %v1644
    %v2140 = vpack.c.b16 %v1654, %v1645
    %v2141 = vpack.c.b16 %v1655, %v1646
    %v2142 = vpack.c.b16 %v1656, %v1647
    %v2143 = vpack.c.b16 %v1657, %v1648
    %v2144 = vpack.c.b16 %v1658, %v1649
    %v2145 = vpack.c.b16 %v1668, %v1659
    %v2146 = vpack.c.b16 %v1669, %v1660
    %v2147 = vpack.c.b16 %v1670, %v1661
    %v2148 = vpack.c.b16 %v1671, %v1662
    %v2149 = vpack.c.b16 %v1672, %v1663
    %v2150 = vpack.c.b16 %v1673, %v1664
    %v2151 = vpack.c.b16 %v1674, %v1665
    %v2152 = vpack.c.b16 %v1675, %v1666
    %v2153 = vpack.c.b16 %v1676, %v1667
    %v2154 = vpack.c.b16 %v1686, %v1677
    %v2155 = vpack.c.b16 %v1687, %v1678
    %v2156 = vpack.c.b16 %v1688, %v1679
    %v2157 = vpack.c.b16 %v1689, %v1680
    %v2158 = vpack.c.b16 %v1690, %v1681
    %v2159 = vpack.c.b16 %v1691, %v1682
    %v2160 = vpack.c.b16 %v1692, %v1683
    %v2161 = vpack.c.b16 %v1693, %v1684
    %v2162 = vpack.c.b16 %v1694, %v1685
    %v2163 = vpack.c.b16 %v1704, %v1695
    %v2164 = vpack.c.b16 %v1705, %v1696
    %v2165 = vpack.c.b16 %v1706, %v1697
    %v2166 = vpack.c.b16 %v1707, %v1698
    %v2167 = vpack.c.b16 %v1708, %v1699
    %v2168 = vpack.c.b16 %v1709, %v1700
    %v2169 = vpack.c.b16 %v1710, %v1701
    %v2170 = vpack.c.b16 %v1711, %v1702
    %v2171 = vpack.c.b16 %v1712, %v1703
    %v2172 = vpack.c.b16 %v1722, %v1713
    %v2173 = vpack.c.b16 %v1723, %v1714
    %v2174 = vpack.c.b16 %v1724, %v1715
    %v2175 = vpack.c.b16 %v1725, %v1716
    %v2176 = vpack.c.b16 %v1726, %v1717
    %v2177 = vpack.c.b16 %v1727, %v1718
    %v2178 = vpack.c.b16 %v1728, %v1719
    %v2179 = vpack.c.b16 %v1729, %v1720
    %v2180 = vpack.c.b16 %v1730, %v1721
    %v2181 = vpack.c.b16 %v1740, %v1731
    %v2182 = vpack.c.b16 %v1741, %v1732
    %v2183 = vpack.c.b16 %v1742, %v1733
    %v2184 = vpack.c.b16 %v1743, %v1734
    %v2185 = vpack.c.b16 %v1744, %v1735
    %v2186 = vpack.c.b16 %v1745, %v1736
    %v2187 = vpack.c.b16 %v1746, %v1737
    %v2188 = vpack.c.b16 %v1747, %v1738
    %v2189 = vpack.c.b16 %v1748, %v1739
    %v2190 = vpack.c.b16 %v1758, %v1749
    %v2191 = vpack.c.b16 %v1759, %v1750
    %v2192 = vpack.c.b16 %v1760, %v1751
    %v2193 = vpack.c.b16 %v1761, %v1752
    %v2194 = vpack.c.b16 %v1762, %v1753
    %v2195 = vpack.c.b16 %v1763, %v1754
    %v2196 = vpack.c.b16 %v1764, %v1755
    %v2197 = vpack.c.b16 %v1765, %v1756
    %v2198 = vpack.c.b16 %v1766, %v1757
    %v2199 = vpack.c.b16 %v1776, %v1767
    %v2200 = vpack.c.b16 %v1777, %v1768
    %v2201 = vpack.c.b16 %v1778, %v1769
    %v2202 = vpack.c.b16 %v1779, %v1770
    %v2203 = vpack.c.b16 %v1780, %v1771
    %v2204 = vpack.c.b16 %v1781, %v1772
    %v2205 = vpack.c.b16 %v1782, %v1773
    %v2206 = vpack.c.b16 %v1783, %v1774
    %v2207 = vpack.c.b16 %v1784, %v1775
    %v2208 = vpack.c.b16 %v1794, %v1785
    %v2209 = vpack.c.b16 %v1795, %v1786
    %v2210 = vpack.c.b16 %v1796, %v1787
    %v2211 = vpack.c.b16 %v1797, %v1788
    %v2212 = vpack.c.b16 %v1798, %v1789
    %v2213 = vpack.c.b16 %v1799, %v1790
    %v2214 = vpack.c.b16 %v1800, %v1791
    %v2215 = vpack.c.b16 %v1801, %v1792
    %v2216 = vpack.c.b16 %v1802, %v1793
    %v2217 = vpack.c.b16 %v1812, %v1803
    %v2218 = vpack.c.b16 %v1813, %v1804
    %v2219 = vpack.c.b16 %v1814, %v1805
    %v2220 = vpack.c.b16 %v1815, %v1806
    %v2221 = vpack.c.b16 %v1816, %v1807
    %v2222 = vpack.c.b16 %v1817, %v1808
    %v2223 = vpack.c.b16 %v1818, %v1809
    %v2224 = vpack.c.b16 %v1819, %v1810
    %v2225 = vpack.c.b16 %v1820, %v1811
    %v2226 = vpack.c.b16 %v1830, %v1821
    %v2227 = vpack.c.b16 %v1831, %v1822
    %v2228 = vpack.c.b16 %v1832, %v1823
    %v2229 = vpack.c.b16 %v1833, %v1824
    %v2230 = vpack.c.b16 %v1834, %v1825
    %v2231 = vpack.c.b16 %v1835, %v1826
    %v2232 = vpack.c.b16 %v1836, %v1827
    %v2233 = vpack.c.b16 %v1837, %v1828
    %v2234 = vpack.c.b16 %v1838, %v1829
    %v2235 = vpack.c.b16 %v1848, %v1839
    %v2236 = vpack.c.b16 %v1849, %v1840
    %v2237 = vpack.c.b16 %v1850, %v1841
    %v2238 = vpack.c.b16 %v1851, %v1842
    %v2239 = vpack.c.b16 %v1852, %v1843
    %v2240 = vpack.c.b16 %v1853, %v1844
    %v2241 = vpack.c.b16 %v1854, %v1845
    %v2242 = vpack.c.b16 %v1855, %v1846
    %v2243 = vpack.c.b16 %v1856, %v1847
    %v2244 = vpack.c.b16 %v1866, %v1857
    %v2245 = vpack.c.b16 %v1867, %v1858
    %v2246 = vpack.c.b16 %v1868, %v1859
    %v2247 = vpack.c.b16 %v1869, %v1860
    %v2248 = vpack.c.b16 %v1870, %v1861
    %v2249 = vpack.c.b16 %v1871, %v1862
    %v2250 = vpack.c.b16 %v1872, %v1863
    %v2251 = vpack.c.b16 %v1873, %v1864
    %v2252 = vpack.c.b16 %v1874, %v1865
    %v2253 = vpack.c.b16 %v1884, %v1875
    %v2254 = vpack.c.b16 %v1885, %v1876
    %v2255 = vpack.c.b16 %v1886, %v1877
    %v2256 = vpack.c.b16 %v1887, %v1878
    %v2257 = vpack.c.b16 %v1888, %v1879
    %v2258 = vpack.c.b16 %v1889, %v1880
    %v2259 = vpack.c.b16 %v1890, %v1881
    %v2260 = vpack.c.b16 %v1891, %v1882
    %v2261 = vpack.c.b16 %v1892, %v1883
    %v2262 = vpack.c.b16 %v1902, %v1893
    %v2263 = vpack.c.b16 %v1903, %v1894
    %v2264 = vpack.c.b16 %v1904, %v1895
    %v2265 = vpack.c.b16 %v1905, %v1896
    %v2266 = vpack.c.b16 %v1906, %v1897
    %v2267 = vpack.c.b16 %v1907, %v1898
    %v2268 = vpack.c.b16 %v1908, %v1899
    %v2269 = vpack.c.b16 %v1909, %v1900
    %v2270 = vpack.c.b16 %v1910, %v1901
    %2631 = vmatprep.subr.bf16.mxu0 %v1912
    %2632 = vmatpush1.bf16.msra.mxu0 %v1911
    %2633 = vmatprep.subr.bf16.mxu0 %v1921
    %2634 = vmatpush1.bf16.msra.mxu0 %v1920
    %2635 = vmatprep.subr.bf16.mxu0 %v1930
    %2636 = vmatpush1.bf16.msra.mxu0 %v1929
    %2637 = vmatprep.subr.bf16.mxu0 %v1939
    %2638 = vmatpush1.bf16.msra.mxu0 %v1938
    %2639 = vmatprep.subr.bf16.mxu0 %v1948
    %2640 = vmatpush1.bf16.msra.mxu0 %v1947
    %2641 = vmatprep.subr.bf16.mxu0 %v1957
    %2642 = vmatpush1.bf16.msra.mxu0 %v1956
    %2643 = vmatprep.subr.bf16.mxu0 %v1966
    %2644 = vmatpush1.bf16.msra.mxu0 %v1965
    %2645 = vmatprep.subr.bf16.mxu0 %v1975
    %2646 = vmatpush1.bf16.msra.mxu0 %v1974
    %2647 = vmatprep.subr.bf16.mxu0 %v1984
    %2648 = vmatpush1.bf16.msra.mxu0 %v1983
    %2649 = vmatprep.subr.bf16.mxu0 %v1993
    %2650 = vmatpush1.bf16.msra.mxu0 %v1992
    %2651 = vmatprep.subr.bf16.mxu0 %v2002
    %2652 = vmatpush1.bf16.msra.mxu0 %v2001
    %2653 = vmatprep.subr.bf16.mxu0 %v2011
    %2654 = vmatpush1.bf16.msra.mxu0 %v2010
    %2655 = vmatprep.subr.bf16.mxu0 %v2020
    %2656 = vmatpush1.bf16.msra.mxu0 %v2019
    %2657 = vmatprep.subr.bf16.mxu0 %v2029
    %2658 = vmatpush1.bf16.msra.mxu0 %v2028
    %2659 = vmatprep.subr.bf16.mxu0 %v2038
    %2660 = vmatpush1.bf16.msra.mxu0 %v2037
    %2661 = vmatprep.subr.bf16.mxu0 %v2047
    %2662 = vmatpush1.bf16.msra.mxu0 %v2046
    %2663 = vmatprep.mubr.bf16.mxu0 %v338
    %2664 = vmatmul.mubr.bf16.gmra.mrb[0].mxu0 %v337
    %v2665 = vpop.f32.mrb[0].mxu0
    %v2666 = vadd.f32 %v749, %v2665
    %v2667 = vpop.f32.mrb[0].mxu0
    %v2668 = vadd.f32 %v753, %v2667
    %v2669 = vpop.f32.mrb[0].mxu0
    %v2670 = vadd.f32 %v749, %v2669
    %v2671 = vpop.f32.mrb[0].mxu0
    %v2672 = vadd.f32 %v753, %v2671
    %2673 = vdwg.mxu0
    %2674 = vmatprep.subr.bf16.mxu0 %v2056
    %2675 = vmatpush1.bf16.msra.mxu0 %v2055
    %2676 = vmatprep.subr.bf16.mxu0 %v2065
    %2677 = vmatpush1.bf16.msra.mxu0 %v2064
    %2678 = vmatprep.subr.bf16.mxu0 %v2074
    %2679 = vmatpush1.bf16.msra.mxu0 %v2073
    %2680 = vmatprep.subr.bf16.mxu0 %v2083
    %2681 = vmatpush1.bf16.msra.mxu0 %v2082
    %2682 = vmatprep.subr.bf16.mxu0 %v2092
    %2683 = vmatpush1.bf16.msra.mxu0 %v2091
    %2684 = vmatprep.subr.bf16.mxu0 %v2101
    %2685 = vmatpush1.bf16.msra.mxu0 %v2100
    %2686 = vmatprep.subr.bf16.mxu0 %v2110
    %2687 = vmatpush1.bf16.msra.mxu0 %v2109
    %2688 = vmatprep.subr.bf16.mxu0 %v2119
    %2689 = vmatpush1.bf16.msra.mxu0 %v2118
    %2690 = vmatprep.subr.bf16.mxu0 %v2128
    %2691 = vmatpush1.bf16.msra.mxu0 %v2127
    %2692 = vmatprep.subr.bf16.mxu0 %v2137
    %2693 = vmatpush1.bf16.msra.mxu0 %v2136
    %2694 = vmatprep.subr.bf16.mxu0 %v2146
    %2695 = vmatpush1.bf16.msra.mxu0 %v2145
    %2696 = vmatprep.subr.bf16.mxu0 %v2155
    %2697 = vmatpush1.bf16.msra.mxu0 %v2154
    %2698 = vmatprep.subr.bf16.mxu0 %v2164
    %2699 = vmatpush1.bf16.msra.mxu0 %v2163
    %2700 = vmatprep.subr.bf16.mxu0 %v2173
    %2701 = vmatpush1.bf16.msra.mxu0 %v2172
    %2702 = vmatprep.subr.bf16.mxu0 %v2182
    %2703 = vmatpush1.bf16.msra.mxu0 %v2181
    %2704 = vmatprep.subr.bf16.mxu0 %v2191
    %2705 = vmatpush1.bf16.msra.mxu0 %v2190
    %2706 = vmatprep.mubr.bf16.mxu0 %v340
    %2707 = vmatmul.mubr.bf16.gmra.mrb[0].mxu0 %v339
    %v2708 = vpop.f32.mrb[0].mxu0
    %v2709 = vadd.f32 %v2666, %v2708
    %v2710 = vpop.f32.mrb[0].mxu0
    %v2711 = vadd.f32 %v2668, %v2710
    %v2712 = vpop.f32.mrb[0].mxu0
    %v2713 = vadd.f32 %v2670, %v2712
    %v2714 = vpop.f32.mrb[0].mxu0
    %v2715 = vadd.f32 %v2672, %v2714
    %2716 = vdwg.mxu0
    %2717 = vmatprep.subr.bf16.mxu0 %v2200
    %2718 = vmatpush1.bf16.msra.mxu0 %v2199
    %2719 = vmatprep.subr.bf16.mxu0 %v2209
    %2720 = vmatpush1.bf16.msra.mxu0 %v2208
    %2721 = vmatprep.subr.bf16.mxu0 %v2218
    %2722 = vmatpush1.bf16.msra.mxu0 %v2217
    %2723 = vmatprep.subr.bf16.mxu0 %v2227
    %2724 = vmatpush1.bf16.msra.mxu0 %v2226
    %2725 = vmatprep.subr.bf16.mxu0 %v2236
    %2726 = vmatpush1.bf16.msra.mxu0 %v2235
    %2727 = vmatprep.subr.bf16.mxu0 %v2245
    %2728 = vmatpush1.bf16.msra.mxu0 %v2244
    %2729 = vmatprep.subr.bf16.mxu0 %v2254
    %2730 = vmatpush1.bf16.msra.mxu0 %v2253
    %2731 = vmatprep.subr.bf16.mxu0 %v2263
    %2732 = vmatpush1.bf16.msra.mxu0 %v2262
    %2733 = vmatprep.subr.bf16.mxu0 0
    %2734 = vmatpush1.bf16.msra.mxu0 0
    %2735 = vmatprep.subr.bf16.mxu0 0
    %2736 = vmatpush1.bf16.msra.mxu0 0
    %2737 = vmatprep.subr.bf16.mxu0 0
    %2738 = vmatpush1.bf16.msra.mxu0 0
    %2739 = vmatprep.subr.bf16.mxu0 0
    %2740 = vmatpush1.bf16.msra.mxu0 0
    %2741 = vmatprep.subr.bf16.mxu0 0
    %2742 = vmatpush1.bf16.msra.mxu0 0
    %2743 = vmatprep.subr.bf16.mxu0 0
    %2744 = vmatpush1.bf16.msra.mxu0 0
    %2745 = vmatprep.subr.bf16.mxu0 0
    %2746 = vmatpush1.bf16.msra.mxu0 0
    %2747 = vmatprep.subr.bf16.mxu0 0
    %2748 = vmatpush1.bf16.msra.mxu0 0
    %2749 = vmatprep.mubr.bf16.mxu0 0
    %2750 = vmatmul.mubr.bf16.gmra.mrb[0].mxu0 %v341
    %v2751 = vpop.f32.mrb[0].mxu0
    %v2752 = vadd.f32 %v2709, %v2751
    %v2753 = vpop.f32.mrb[0].mxu0
    %v2754 = vadd.f32 %v2711, %v2753
    %v2755 = vpop.f32.mrb[0].mxu0
    %v2756 = vadd.f32 %v2713, %v2755
    %v2757 = vpop.f32.mrb[0].mxu0
    %v2758 = vadd.f32 %v2715, %v2757
    %2759 = vdwg.mxu0
    %2760 = vmatprep.subr.bf16.mxu0 %v1914
    %2761 = vmatpush1.bf16.msra.mxu0 %v1913
    %2762 = vmatprep.subr.bf16.mxu0 %v1923
    %2763 = vmatpush1.bf16.msra.mxu0 %v1922
    %2764 = vmatprep.subr.bf16.mxu0 %v1932
    %2765 = vmatpush1.bf16.msra.mxu0 %v1931
    %2766 = vmatprep.subr.bf16.mxu0 %v1941
    %2767 = vmatpush1.bf16.msra.mxu0 %v1940
    %2768 = vmatprep.subr.bf16.mxu0 %v1950
    %2769 = vmatpush1.bf16.msra.mxu0 %v1949
    %2770 = vmatprep.subr.bf16.mxu0 %v1959
    %2771 = vmatpush1.bf16.msra.mxu0 %v1958
    %2772 = vmatprep.subr.bf16.mxu0 %v1968
    %2773 = vmatpush1.bf16.msra.mxu0 %v1967
    %2774 = vmatprep.subr.bf16.mxu0 %v1977
    %2775 = vmatpush1.bf16.msra.mxu0 %v1976
    %2776 = vmatprep.subr.bf16.mxu0 %v1986
    %2777 = vmatpush1.bf16.msra.mxu0 %v1985
    %2778 = vmatprep.subr.bf16.mxu0 %v1995
    %2779 = vmatpush1.bf16.msra.mxu0 %v1994
    %2780 = vmatprep.subr.bf16.mxu0 %v2004
    %2781 = vmatpush1.bf16.msra.mxu0 %v2003
    %2782 = vmatprep.subr.bf16.mxu0 %v2013
    %2783 = vmatpush1.bf16.msra.mxu0 %v2012
    %2784 = vmatprep.subr.bf16.mxu0 %v2022
    %2785 = vmatpush1.bf16.msra.mxu0 %v2021
    %2786 = vmatprep.subr.bf16.mxu0 %v2031
    %2787 = vmatpush1.bf16.msra.mxu0 %v2030
    %2788 = vmatprep.subr.bf16.mxu0 %v2040
    %2789 = vmatpush1.bf16.msra.mxu0 %v2039
    %2790 = vmatprep.subr.bf16.mxu0 %v2049
    %2791 = vmatpush1.bf16.msra.mxu0 %v2048
    %2792 = vmatprep.mubr.bf16.mxu0 %v338
    %2793 = vmatmul.mubr.bf16.gmra.mrb[0].mxu0 %v337
    %v2794 = vpop.f32.mrb[0].mxu0
    %v2795 = vadd.f32 %v757, %v2794
    %v2796 = vpop.f32.mrb[0].mxu0
    %v2797 = vadd.f32 %v761, %v2796
    %v2798 = vpop.f32.mrb[0].mxu0
    %v2799 = vadd.f32 %v757, %v2798
    %v2800 = vpop.f32.mrb[0].mxu0
    %v2801 = vadd.f32 %v761, %v2800
    %2802 = vdwg.mxu0
    %2803 = vmatprep.subr.bf16.mxu0 %v2058
    %2804 = vmatpush1.bf16.msra.mxu0 %v2057
    %2805 = vmatprep.subr.bf16.mxu0 %v2067
    %2806 = vmatpush1.bf16.msra.mxu0 %v2066
    %2807 = vmatprep.subr.bf16.mxu0 %v2076
    %2808 = vmatpush1.bf16.msra.mxu0 %v2075
    %2809 = vmatprep.subr.bf16.mxu0 %v2085
    %2810 = vmatpush1.bf16.msra.mxu0 %v2084
    %2811 = vmatprep.subr.bf16.mxu0 %v2094
    %2812 = vmatpush1.bf16.msra.mxu0 %v2093
    %2813 = vmatprep.subr.bf16.mxu0 %v2103
    %2814 = vmatpush1.bf16.msra.mxu0 %v2102
    %2815 = vmatprep.subr.bf16.mxu0 %v2112
    %2816 = vmatpush1.bf16.msra.mxu0 %v2111
    %2817 = vmatprep.subr.bf16.mxu0 %v2121
    %2818 = vmatpush1.bf16.msra.mxu0 %v2120
    %2819 = vmatprep.subr.bf16.mxu0 %v2130
    %2820 = vmatpush1.bf16.msra.mxu0 %v2129
    %2821 = vmatprep.subr.bf16.mxu0 %v2139
    %2822 = vmatpush1.bf16.msra.mxu0 %v2138
    %2823 = vmatprep.subr.bf16.mxu0 %v2148
    %2824 = vmatpush1.bf16.msra.mxu0 %v2147
    %2825 = vmatprep.subr.bf16.mxu0 %v2157
    %2826 = vmatpush1.bf16.msra.mxu0 %v2156
    %2827 = vmatprep.subr.bf16.mxu0 %v2166
    %2828 = vmatpush1.bf16.msra.mxu0 %v2165
    %2829 = vmatprep.subr.bf16.mxu0 %v2175
    %2830 = vmatpush1.bf16.msra.mxu0 %v2174
    %2831 = vmatprep.subr.bf16.mxu0 %v2184
    %2832 = vmatpush1.bf16.msra.mxu0 %v2183
    %2833 = vmatprep.subr.bf16.mxu0 %v2193
    %2834 = vmatpush1.bf16.msra.mxu0 %v2192
    %2835 = vmatprep.mubr.bf16.mxu0 %v340
    %2836 = vmatmul.mubr.bf16.gmra.mrb[0].mxu0 %v339
    %v2837 = vpop.f32.mrb[0].mxu0
    %v2838 = vadd.f32 %v2795, %v2837
    %v2839 = vpop.f32.mrb[0].mxu0
    %v2840 = vadd.f32 %v2797, %v2839
    %v2841 = vpop.f32.mrb[0].mxu0
    %v2842 = vadd.f32 %v2799, %v2841
    %v2843 = vpop.f32.mrb[0].mxu0
    %v2844 = vadd.f32 %v2801, %v2843
    %2845 = vdwg.mxu0
    %2846 = vmatprep.subr.bf16.mxu0 %v2202
    %2847 = vmatpush1.bf16.msra.mxu0 %v2201
    %2848 = vmatprep.subr.bf16.mxu0 %v2211
    %2849 = vmatpush1.bf16.msra.mxu0 %v2210
    %2850 = vmatprep.subr.bf16.mxu0 %v2220
    %2851 = vmatpush1.bf16.msra.mxu0 %v2219
    %2852 = vmatprep.subr.bf16.mxu0 %v2229
    %2853 = vmatpush1.bf16.msra.mxu0 %v2228
    %2854 = vmatprep.subr.bf16.mxu0 %v2238
    %2855 = vmatpush1.bf16.msra.mxu0 %v2237
    %2856 = vmatprep.subr.bf16.mxu0 %v2247
    %2857 = vmatpush1.bf16.msra.mxu0 %v2246
    %2858 = vmatprep.subr.bf16.mxu0 %v2256
    %2859 = vmatpush1.bf16.msra.mxu0 %v2255
    %2860 = vmatprep.subr.bf16.mxu0 %v2265
    %2861 = vmatpush1.bf16.msra.mxu0 %v2264
    %2862 = vmatprep.subr.bf16.mxu0 0
    %2863 = vmatpush1.bf16.msra.mxu0 0
    %2864 = vmatprep.subr.bf16.mxu0 0
    %2865 = vmatpush1.bf16.msra.mxu0 0
    %2866 = vmatprep.subr.bf16.mxu0 0
    %2867 = vmatpush1.bf16.msra.mxu0 0
    %2868 = vmatprep.subr.bf16.mxu0 0
    %2869 = vmatpush1.bf16.msra.mxu0 0
    %2870 = vmatprep.subr.bf16.mxu0 0
    %2871 = vmatpush1.bf16.msra.mxu0 0
    %2872 = vmatprep.subr.bf16.mxu0 0
    %2873 = vmatpush1.bf16.msra.mxu0 0
    %2874 = vmatprep.subr.bf16.mxu0 0
    %2875 = vmatpush1.bf16.msra.mxu0 0
    %2876 = vmatprep.subr.bf16.mxu0 0
    %2877 = vmatpush1.bf16.msra.mxu0 0
    %2878 = vmatprep.mubr.bf16.mxu0 0
    %2879 = vmatmul.mubr.bf16.gmra.mrb[0].mxu0 %v341
    %v2880 = vpop.f32.mrb[0].mxu0
    %v2881 = vadd.f32 %v2838, %v2880
    %v2882 = vpop.f32.mrb[0].mxu0
    %v2883 = vadd.f32 %v2840, %v2882
    %v2884 = vpop.f32.mrb[0].mxu0
    %v2885 = vadd.f32 %v2842, %v2884
    %v2886 = vpop.f32.mrb[0].mxu0
    %v2887 = vadd.f32 %v2844, %v2886
    %2888 = vdwg.mxu0
    %2889 = vmatprep.subr.bf16.mxu0 %v1916
    %2890 = vmatpush1.bf16.msra.mxu0 %v1915
    %2891 = vmatprep.subr.bf16.mxu0 %v1925
    %2892 = vmatpush1.bf16.msra.mxu0 %v1924
    %2893 = vmatprep.subr.bf16.mxu0 %v1934
    %2894 = vmatpush1.bf16.msra.mxu0 %v1933
    %2895 = vmatprep.subr.bf16.mxu0 %v1943
    %2896 = vmatpush1.bf16.msra.mxu0 %v1942
    %2897 = vmatprep.subr.bf16.mxu0 %v1952
    %2898 = vmatpush1.bf16.msra.mxu0 %v1951
    %2899 = vmatprep.subr.bf16.mxu0 %v1961
    %2900 = vmatpush1.bf16.msra.mxu0 %v1960
    %2901 = vmatprep.subr.bf16.mxu0 %v1970
    %2902 = vmatpush1.bf16.msra.mxu0 %v1969
    %2903 = vmatprep.subr.bf16.mxu0 %v1979
    %2904 = vmatpush1.bf16.msra.mxu0 %v1978
    %2905 = vmatprep.subr.bf16.mxu0 %v1988
    %2906 = vmatpush1.bf16.msra.mxu0 %v1987
    %2907 = vmatprep.subr.bf16.mxu0 %v1997
    %2908 = vmatpush1.bf16.msra.mxu0 %v1996
    %2909 = vmatprep.subr.bf16.mxu0 %v2006
    %2910 = vmatpush1.bf16.msra.mxu0 %v2005
    %2911 = vmatprep.subr.bf16.mxu0 %v2015
    %2912 = vmatpush1.bf16.msra.mxu0 %v2014
    %2913 = vmatprep.subr.bf16.mxu0 %v2024
    %2914 = vmatpush1.bf16.msra.mxu0 %v2023
    %2915 = vmatprep.subr.bf16.mxu0 %v2033
    %2916 = vmatpush1.bf16.msra.mxu0 %v2032
    %2917 = vmatprep.subr.bf16.mxu0 %v2042
    %2918 = vmatpush1.bf16.msra.mxu0 %v2041
    %2919 = vmatprep.subr.bf16.mxu0 %v2051
    %2920 = vmatpush1.bf16.msra.mxu0 %v2050
    %2921 = vmatprep.mubr.bf16.mxu0 %v338
    %2922 = vmatmul.mubr.bf16.gmra.mrb[0].mxu0 %v337
    %v2923 = vpop.f32.mrb[0].mxu0
    %v2924 = vadd.f32 %v765, %v2923
    %v2925 = vpop.f32.mrb[0].mxu0
    %v2926 = vadd.f32 %v769, %v2925
    %v2927 = vpop.f32.mrb[0].mxu0
    %v2928 = vadd.f32 %v765, %v2927
    %v2929 = vpop.f32.mrb[0].mxu0
    %v2930 = vadd.f32 %v769, %v2929
    %2931 = vdwg.mxu0
    %2932 = vmatprep.subr.bf16.mxu0 %v2060
    %2933 = vmatpush1.bf16.msra.mxu0 %v2059
    %2934 = vmatprep.subr.bf16.mxu0 %v2069
    %2935 = vmatpush1.bf16.msra.mxu0 %v2068
    %2936 = vmatprep.subr.bf16.mxu0 %v2078
    %2937 = vmatpush1.bf16.msra.mxu0 %v2077
    %2938 = vmatprep.subr.bf16.mxu0 %v2087
    %2939 = vmatpush1.bf16.msra.mxu0 %v2086
    %2940 = vmatprep.subr.bf16.mxu0 %v2096
    %2941 = vmatpush1.bf16.msra.mxu0 %v2095
    %2942 = vmatprep.subr.bf16.mxu0 %v2105
    %2943 = vmatpush1.bf16.msra.mxu0 %v2104
    %2944 = vmatprep.subr.bf16.mxu0 %v2114
    %2945 = vmatpush1.bf16.msra.mxu0 %v2113
    %2946 = vmatprep.subr.bf16.mxu0 %v2123
    %2947 = vmatpush1.bf16.msra.mxu0 %v2122
    %2948 = vmatprep.subr.bf16.mxu0 %v2132
    %2949 = vmatpush1.bf16.msra.mxu0 %v2131
    %2950 = vmatprep.subr.bf16.mxu0 %v2141
    %2951 = vmatpush1.bf16.msra.mxu0 %v2140
    %2952 = vmatprep.subr.bf16.mxu0 %v2150
    %2953 = vmatpush1.bf16.msra.mxu0 %v2149
    %2954 = vmatprep.subr.bf16.mxu0 %v2159
    %2955 = vmatpush1.bf16.msra.mxu0 %v2158
    %2956 = vmatprep.subr.bf16.mxu0 %v2168
    %2957 = vmatpush1.bf16.msra.mxu0 %v2167
    %2958 = vmatprep.subr.bf16.mxu0 %v2177
    %2959 = vmatpush1.bf16.msra.mxu0 %v2176
    %2960 = vmatprep.subr.bf16.mxu0 %v2186
    %2961 = vmatpush1.bf16.msra.mxu0 %v2185
    %2962 = vmatprep.subr.bf16.mxu0 %v2195
    %2963 = vmatpush1.bf16.msra.mxu0 %v2194
    %2964 = vmatprep.mubr.bf16.mxu0 %v340
    %2965 = vmatmul.mubr.bf16.gmra.mrb[0].mxu0 %v339
    %v2966 = vpop.f32.mrb[0].mxu0
    %v2967 = vadd.f32 %v2924, %v2966
    %v2968 = vpop.f32.mrb[0].mxu0
    %v2969 = vadd.f32 %v2926, %v2968
    %v2970 = vpop.f32.mrb[0].mxu0
    %v2971 = vadd.f32 %v2928, %v2970
    %v2972 = vpop.f32.mrb[0].mxu0
    %v2973 = vadd.f32 %v2930, %v2972
    %2974 = vdwg.mxu0
    %2975 = vmatprep.subr.bf16.mxu0 %v2204
    %2976 = vmatpush1.bf16.msra.mxu0 %v2203
    %2977 = vmatprep.subr.bf16.mxu0 %v2213
    %2978 = vmatpush1.bf16.msra.mxu0 %v2212
    %2979 = vmatprep.subr.bf16.mxu0 %v2222
    %2980 = vmatpush1.bf16.msra.mxu0 %v2221
    %2981 = vmatprep.subr.bf16.mxu0 %v2231
    %2982 = vmatpush1.bf16.msra.mxu0 %v2230
    %2983 = vmatprep.subr.bf16.mxu0 %v2240
    %2984 = vmatpush1.bf16.msra.mxu0 %v2239
    %2985 = vmatprep.subr.bf16.mxu0 %v2249
    %2986 = vmatpush1.bf16.msra.mxu0 %v2248
    %2987 = vmatprep.subr.bf16.mxu0 %v2258
    %2988 = vmatpush1.bf16.msra.mxu0 %v2257
    %2989 = vmatprep.subr.bf16.mxu0 %v2267
    %2990 = vmatpush1.bf16.msra.mxu0 %v2266
    %2991 = vmatprep.subr.bf16.mxu0 0
    %2992 = vmatpush1.bf16.msra.mxu0 0
    %2993 = vmatprep.subr.bf16.mxu0 0
    %2994 = vmatpush1.bf16.msra.mxu0 0
    %2995 = vmatprep.subr.bf16.mxu0 0
    %2996 = vmatpush1.bf16.msra.mxu0 0
    %2997 = vmatprep.subr.bf16.mxu0 0
    %2998 = vmatpush1.bf16.msra.mxu0 0
    %2999 = vmatprep.subr.bf16.mxu0 0
    %3000 = vmatpush1.bf16.msra.mxu0 0
    %3001 = vmatprep.subr.bf16.mxu0 0
    %3002 = vmatpush1.bf16.msra.mxu0 0
    %3003 = vmatprep.subr.bf16.mxu0 0
    %3004 = vmatpush1.bf16.msra.mxu0 0
    %3005 = vmatprep.subr.bf16.mxu0 0
    %3006 = vmatpush1.bf16.msra.mxu0 0
    %3007 = vmatprep.mubr.bf16.mxu0 0
    %3008 = vmatmul.mubr.bf16.gmra.mrb[0].mxu0 %v341
    %v3009 = vpop.f32.mrb[0].mxu0
    %v3010 = vadd.f32 %v2967, %v3009
    %v3011 = vpop.f32.mrb[0].mxu0
    %v3012 = vadd.f32 %v2969, %v3011
    %v3013 = vpop.f32.mrb[0].mxu0
    %v3014 = vadd.f32 %v2971, %v3013
    %v3015 = vpop.f32.mrb[0].mxu0
    %v3016 = vadd.f32 %v2973, %v3015
    %3017 = vdwg.mxu0
    %3018 = vmatprep.subr.bf16.mxu0 %v1918
    %3019 = vmatpush1.bf16.msra.mxu0 %v1917
    %3020 = vmatprep.subr.bf16.mxu0 %v1927
    %3021 = vmatpush1.bf16.msra.mxu0 %v1926
    %3022 = vmatprep.subr.bf16.mxu0 %v1936
    %3023 = vmatpush1.bf16.msra.mxu0 %v1935
    %3024 = vmatprep.subr.bf16.mxu0 %v1945
    %3025 = vmatpush1.bf16.msra.mxu0 %v1944
    %3026 = vmatprep.subr.bf16.mxu0 %v1954
    %3027 = vmatpush1.bf16.msra.mxu0 %v1953
    %3028 = vmatprep.subr.bf16.mxu0 %v1963
    %3029 = vmatpush1.bf16.msra.mxu0 %v1962
    %3030 = vmatprep.subr.bf16.mxu0 %v1972
    %3031 = vmatpush1.bf16.msra.mxu0 %v1971
    %3032 = vmatprep.subr.bf16.mxu0 %v1981
    %3033 = vmatpush1.bf16.msra.mxu0 %v1980
    %3034 = vmatprep.subr.bf16.mxu0 %v1990
    %3035 = vmatpush1.bf16.msra.mxu0 %v1989
    %3036 = vmatprep.subr.bf16.mxu0 %v1999
    %3037 = vmatpush1.bf16.msra.mxu0 %v1998
    %3038 = vmatprep.subr.bf16.mxu0 %v2008
    %3039 = vmatpush1.bf16.msra.mxu0 %v2007
    %3040 = vmatprep.subr.bf16.mxu0 %v2017
    %3041 = vmatpush1.bf16.msra.mxu0 %v2016
    %3042 = vmatprep.subr.bf16.mxu0 %v2026
    %3043 = vmatpush1.bf16.msra.mxu0 %v2025
    %3044 = vmatprep.subr.bf16.mxu0 %v2035
    %3045 = vmatpush1.bf16.msra.mxu0 %v2034
    %3046 = vmatprep.subr.bf16.mxu0 %v2044
    %3047 = vmatpush1.bf16.msra.mxu0 %v2043
    %3048 = vmatprep.subr.bf16.mxu0 %v2053
    %3049 = vmatpush1.bf16.msra.mxu0 %v2052
    %3050 = vmatprep.mubr.bf16.mxu0 %v338
    %3051 = vmatmul.mubr.bf16.gmra.mrb[0].mxu0 %v337
    %v3052 = vpop.f32.mrb[0].mxu0
    %v3053 = vadd.f32 %v773, %v3052
    %v3054 = vpop.f32.mrb[0].mxu0
    %v3055 = vadd.f32 %v777, %v3054
    %v3056 = vpop.f32.mrb[0].mxu0
    %v3057 = vadd.f32 %v773, %v3056
    %v3058 = vpop.f32.mrb[0].mxu0
    %v3059 = vadd.f32 %v777, %v3058
    %3060 = vdwg.mxu0
    %3061 = vmatprep.subr.bf16.mxu0 %v2062
    %3062 = vmatpush1.bf16.msra.mxu0 %v2061
    %3063 = vmatprep.subr.bf16.mxu0 %v2071
    %3064 = vmatpush1.bf16.msra.mxu0 %v2070
    %3065 = vmatprep.subr.bf16.mxu0 %v2080
    %3066 = vmatpush1.bf16.msra.mxu0 %v2079
    %3067 = vmatprep.subr.bf16.mxu0 %v2089
    %3068 = vmatpush1.bf16.msra.mxu0 %v2088
    %3069 = vmatprep.subr.bf16.mxu0 %v2098
    %3070 = vmatpush1.bf16.msra.mxu0 %v2097
    %3071 = vmatprep.subr.bf16.mxu0 %v2107
    %3072 = vmatpush1.bf16.msra.mxu0 %v2106
    %3073 = vmatprep.subr.bf16.mxu0 %v2116
    %3074 = vmatpush1.bf16.msra.mxu0 %v2115
    %3075 = vmatprep.subr.bf16.mxu0 %v2125
    %3076 = vmatpush1.bf16.msra.mxu0 %v2124
    %3077 = vmatprep.subr.bf16.mxu0 %v2134
    %3078 = vmatpush1.bf16.msra.mxu0 %v2133
    %3079 = vmatprep.subr.bf16.mxu0 %v2143
    %3080 = vmatpush1.bf16.msra.mxu0 %v2142
    %3081 = vmatprep.subr.bf16.mxu0 %v2152
    %3082 = vmatpush1.bf16.msra.mxu0 %v2151
    %3083 = vmatprep.subr.bf16.mxu0 %v2161
    %3084 = vmatpush1.bf16.msra.mxu0 %v2160
    %3085 = vmatprep.subr.bf16.mxu0 %v2170
    %3086 = vmatpush1.bf16.msra.mxu0 %v2169
    %3087 = vmatprep.subr.bf16.mxu0 %v2179
    %3088 = vmatpush1.bf16.msra.mxu0 %v2178
    %3089 = vmatprep.subr.bf16.mxu0 %v2188
    %3090 = vmatpush1.bf16.msra.mxu0 %v2187
    %3091 = vmatprep.subr.bf16.mxu0 %v2197
    %3092 = vmatpush1.bf16.msra.mxu0 %v2196
    %3093 = vmatprep.mubr.bf16.mxu0 %v340
    %3094 = vmatmul.mubr.bf16.gmra.mrb[0].mxu0 %v339
    %v3095 = vpop.f32.mrb[0].mxu0
    %v3096 = vadd.f32 %v3053, %v3095
    %v3097 = vpop.f32.mrb[0].mxu0
    %v3098 = vadd.f32 %v3055, %v3097
    %v3099 = vpop.f32.mrb[0].mxu0
    %v3100 = vadd.f32 %v3057, %v3099
    %v3101 = vpop.f32.mrb[0].mxu0
    %v3102 = vadd.f32 %v3059, %v3101
    %3103 = vdwg.mxu0
    %3104 = vmatprep.subr.bf16.mxu0 %v2206
    %3105 = vmatpush1.bf16.msra.mxu0 %v2205
    %3106 = vmatprep.subr.bf16.mxu0 %v2215
    %3107 = vmatpush1.bf16.msra.mxu0 %v2214
    %3108 = vmatprep.subr.bf16.mxu0 %v2224
    %3109 = vmatpush1.bf16.msra.mxu0 %v2223
    %3110 = vmatprep.subr.bf16.mxu0 %v2233
    %3111 = vmatpush1.bf16.msra.mxu0 %v2232
    %3112 = vmatprep.subr.bf16.mxu0 %v2242
    %3113 = vmatpush1.bf16.msra.mxu0 %v2241
    %3114 = vmatprep.subr.bf16.mxu0 %v2251
    %3115 = vmatpush1.bf16.msra.mxu0 %v2250
    %3116 = vmatprep.subr.bf16.mxu0 %v2260
    %3117 = vmatpush1.bf16.msra.mxu0 %v2259
    %3118 = vmatprep.subr.bf16.mxu0 %v2269
    %3119 = vmatpush1.bf16.msra.mxu0 %v2268
    %3120 = vmatprep.subr.bf16.mxu0 0
    %3121 = vmatpush1.bf16.msra.mxu0 0
    %3122 = vmatprep.subr.bf16.mxu0 0
    %3123 = vmatpush1.bf16.msra.mxu0 0
    %3124 = vmatprep.subr.bf16.mxu0 0
    %3125 = vmatpush1.bf16.msra.mxu0 0
    %3126 = vmatprep.subr.bf16.mxu0 0
    %3127 = vmatpush1.bf16.msra.mxu0 0
    %3128 = vmatprep.subr.bf16.mxu0 0
    %3129 = vmatpush1.bf16.msra.mxu0 0
    %3130 = vmatprep.subr.bf16.mxu0 0
    %3131 = vmatpush1.bf16.msra.mxu0 0
    %3132 = vmatprep.subr.bf16.mxu0 0
    %3133 = vmatpush1.bf16.msra.mxu0 0
    %3134 = vmatprep.subr.bf16.mxu0 0
    %3135 = vmatpush1.bf16.msra.mxu0 0
    %3136 = vmatprep.mubr.bf16.mxu0 0
    %3137 = vmatmul.mubr.bf16.gmra.mrb[0].mxu0 %v341
    %v3138 = vpop.f32.mrb[0].mxu0
    %v3139 = vadd.f32 %v3096, %v3138
    %v3140 = vpop.f32.mrb[0].mxu0
    %v3141 = vadd.f32 %v3098, %v3140
    %v3142 = vpop.f32.mrb[0].mxu0
    %v3143 = vadd.f32 %v3100, %v3142
    %v3144 = vpop.f32.mrb[0].mxu0
    %v3145 = vadd.f32 %v3102, %v3144
    %3146 = vdwg.mxu0
    %3147 = vmatprep.subr.bf16.mxu0 0
    %3148 = vmatpush1.bf16.msra.mxu0 %v1919
    %3149 = vmatprep.subr.bf16.mxu0 0
    %3150 = vmatpush1.bf16.msra.mxu0 %v1928
    %3151 = vmatprep.subr.bf16.mxu0 0
    %3152 = vmatpush1.bf16.msra.mxu0 %v1937
    %3153 = vmatprep.subr.bf16.mxu0 0
    %3154 = vmatpush1.bf16.msra.mxu0 %v1946
    %3155 = vmatprep.subr.bf16.mxu0 0
    %3156 = vmatpush1.bf16.msra.mxu0 %v1955
    %3157 = vmatprep.subr.bf16.mxu0 0
    %3158 = vmatpush1.bf16.msra.mxu0 %v1964
    %3159 = vmatprep.subr.bf16.mxu0 0
    %3160 = vmatpush1.bf16.msra.mxu0 %v1973
    %3161 = vmatprep.subr.bf16.mxu0 0
    %3162 = vmatpush1.bf16.msra.mxu0 %v1982
    %3163 = vmatprep.subr.bf16.mxu0 0
    %3164 = vmatpush1.bf16.msra.mxu0 %v1991
    %3165 = vmatprep.subr.bf16.mxu0 0
    %3166 = vmatpush1.bf16.msra.mxu0 %v2000
    %3167 = vmatprep.subr.bf16.mxu0 0
    %3168 = vmatpush1.bf16.msra.mxu0 %v2009
    %3169 = vmatprep.subr.bf16.mxu0 0
    %3170 = vmatpush1.bf16.msra.mxu0 %v2018
    %3171 = vmatprep.subr.bf16.mxu0 0
    %3172 = vmatpush1.bf16.msra.mxu0 %v2027
    %3173 = vmatprep.subr.bf16.mxu0 0
    %3174 = vmatpush1.bf16.msra.mxu0 %v2036
    %3175 = vmatprep.subr.bf16.mxu0 0
    %3176 = vmatpush1.bf16.msra.mxu0 %v2045
    %3177 = vmatprep.subr.bf16.mxu0 0
    %3178 = vmatpush1.bf16.msra.mxu0 %v2054
    %3179 = vmatprep.mubr.bf16.mxu0 %v338
    %3180 = vmatmul.mubr.bf16.gmra.mrb[0].mxu0 %v337
    %v3181 = vpop.f32.mrb[0].mxu0
    %v3182 = vadd.f32 %v781, %v3181
    %v3183 = vpop.f32.mrb[0].mxu0
    %v3184 = vpop.f32.mrb[0].mxu0
    %v3185 = vadd.f32 %v781, %v3184
    %v3186 = vpop.f32.mrb[0].mxu0
    %3187 = vdwg.mxu0
    %3188 = vmatprep.subr.bf16.mxu0 0
    %3189 = vmatpush1.bf16.msra.mxu0 %v2063
    %3190 = vmatprep.subr.bf16.mxu0 0
    %3191 = vmatpush1.bf16.msra.mxu0 %v2072
    %3192 = vmatprep.subr.bf16.mxu0 0
    %3193 = vmatpush1.bf16.msra.mxu0 %v2081
    %3194 = vmatprep.subr.bf16.mxu0 0
    %3195 = vmatpush1.bf16.msra.mxu0 %v2090
    %3196 = vmatprep.subr.bf16.mxu0 0
    %3197 = vmatpush1.bf16.msra.mxu0 %v2099
    %3198 = vmatprep.subr.bf16.mxu0 0
    %3199 = vmatpush1.bf16.msra.mxu0 %v2108
    %3200 = vmatprep.subr.bf16.mxu0 0
    %3201 = vmatpush1.bf16.msra.mxu0 %v2117
    %3202 = vmatprep.subr.bf16.mxu0 0
    %3203 = vmatpush1.bf16.msra.mxu0 %v2126
    %3204 = vmatprep.subr.bf16.mxu0 0
    %3205 = vmatpush1.bf16.msra.mxu0 %v2135
    %3206 = vmatprep.subr.bf16.mxu0 0
    %3207 = vmatpush1.bf16.msra.mxu0 %v2144
    %3208 = vmatprep.subr.bf16.mxu0 0
    %3209 = vmatpush1.bf16.msra.mxu0 %v2153
    %3210 = vmatprep.subr.bf16.mxu0 0
    %3211 = vmatpush1.bf16.msra.mxu0 %v2162
    %3212 = vmatprep.subr.bf16.mxu0 0
    %3213 = vmatpush1.bf16.msra.mxu0 %v2171
    %3214 = vmatprep.subr.bf16.mxu0 0
    %3215 = vmatpush1.bf16.msra.mxu0 %v2180
    %3216 = vmatprep.subr.bf16.mxu0 0
    %3217 = vmatpush1.bf16.msra.mxu0 %v2189
    %3218 = vmatprep.subr.bf16.mxu0 0
    %3219 = vmatpush1.bf16.msra.mxu0 %v2198
    %3220 = vmatprep.mubr.bf16.mxu0 %v340
    %3221 = vmatmul.mubr.bf16.gmra.mrb[0].mxu0 %v339
    %v3222 = vpop.f32.mrb[0].mxu0
    %v3223 = vadd.f32 %v3182, %v3222
    %v3224 = vpop.f32.mrb[0].mxu0
    %v3225 = vpop.f32.mrb[0].mxu0
    %v3226 = vadd.f32 %v3185, %v3225
    %v3227 = vpop.f32.mrb[0].mxu0
    %3228 = vdwg.mxu0
    %3229 = vmatprep.subr.bf16.mxu0 0
    %3230 = vmatpush1.bf16.msra.mxu0 %v2207
    %3231 = vmatprep.subr.bf16.mxu0 0
    %3232 = vmatpush1.bf16.msra.mxu0 %v2216
    %3233 = vmatprep.subr.bf16.mxu0 0
    %3234 = vmatpush1.bf16.msra.mxu0 %v2225
    %3235 = vmatprep.subr.bf16.mxu0 0
    %3236 = vmatpush1.bf16.msra.mxu0 %v2234
    %3237 = vmatprep.subr.bf16.mxu0 0
    %3238 = vmatpush1.bf16.msra.mxu0 %v2243
    %3239 = vmatprep.subr.bf16.mxu0 0
    %3240 = vmatpush1.bf16.msra.mxu0 %v2252
    %3241 = vmatprep.subr.bf16.mxu0 0
    %3242 = vmatpush1.bf16.msra.mxu0 %v2261
    %3243 = vmatprep.subr.bf16.mxu0 0
    %3244 = vmatpush1.bf16.msra.mxu0 %v2270
    %3245 = vmatprep.subr.bf16.mxu0 0
    %3246 = vmatpush1.bf16.msra.mxu0 0
    %3247 = vmatprep.subr.bf16.mxu0 0
    %3248 = vmatpush1.bf16.msra.mxu0 0
    %3249 = vmatprep.subr.bf16.mxu0 0
    %3250 = vmatpush1.bf16.msra.mxu0 0
    %3251 = vmatprep.subr.bf16.mxu0 0
    %3252 = vmatpush1.bf16.msra.mxu0 0
    %3253 = vmatprep.subr.bf16.mxu0 0
    %3254 = vmatpush1.bf16.msra.mxu0 0
    %3255 = vmatprep.subr.bf16.mxu0 0
    %3256 = vmatpush1.bf16.msra.mxu0 0
    %3257 = vmatprep.subr.bf16.mxu0 0
    %3258 = vmatpush1.bf16.msra.mxu0 0
    %3259 = vmatprep.subr.bf16.mxu0 0
    %3260 = vmatpush1.bf16.msra.mxu0 0
    %3261 = vmatprep.mubr.bf16.mxu0 0
    %3262 = vmatmul.mubr.bf16.gmra.mrb[0].mxu0 %v341
    %v3263 = vpop.f32.mrb[0].mxu0
    %v3264 = vadd.f32 %v3223, %v3263
    %v3265 = vpop.f32.mrb[0].mxu0
    %v3266 = vpop.f32.mrb[0].mxu0
    %v3267 = vadd.f32 %v3226, %v3266
    %v3268 = vpop.f32.mrb[0].mxu0
    %3269 = vdwg.mxu0
    %v3270 = vmax.f32 %v2752, 0.0
    %v3271 = vmax.f32 %v2754, 0.0
    %v3272 = vmax.f32 %v2881, 0.0
    %v3273 = vmax.f32 %v2883, 0.0
    %v3274 = vmax.f32 %v3010, 0.0
    %v3275 = vmax.f32 %v3012, 0.0
    %v3276 = vmax.f32 %v3139, 0.0
    %v3277 = vmax.f32 %v3141, 0.0
    %v3278 = vmax.f32 %v3264, 0.0
    %v3279 = vmax.f32 %v2756, 0.0
    %v3280 = vmax.f32 %v2758, 0.0
    %v3281 = vmax.f32 %v2885, 0.0
    %v3282 = vmax.f32 %v2887, 0.0
    %v3283 = vmax.f32 %v3014, 0.0
    %v3284 = vmax.f32 %v3016, 0.0
    %v3285 = vmax.f32 %v3143, 0.0
    %v3286 = vmax.f32 %v3145, 0.0
    %v3287 = vmax.f32 %v3267, 0.0
    %v3288 = vpack.c.bf16 %v3279, %v3270
    %v3289 = vpack.c.bf16 %v3280, %v3271
    %v3290 = vpack.c.bf16 %v3281, %v3272
    %v3291 = vpack.c.bf16 %v3282, %v3273
    %v3292 = vpack.c.bf16 %v3283, %v3274
    %v3293 = vpack.c.bf16 %v3284, %v3275
    %v3294 = vpack.c.bf16 %v3285, %v3276
    %v3295 = vpack.c.bf16 %v3286, %v3277
    %v3296 = vpack.c.bf16 %v3287, %v3278
    %v3297 = vld [vmem:[#allocation9] sm:$0xff]
    %v3298 = vld [vmem:[#allocation9 + $0x8] sm:$0xff]
    %v3299 = vld [vmem:[#allocation9 + $0x10] sm:$0xff]
    %v3300 = vld [vmem:[#allocation9 + $0x18] sm:$0xff]
    %v3301 = vld [vmem:[#allocation9 + $0x20] sm:$0xff]
    %v3302 = vld [vmem:[#allocation9 + $0x28] sm:$0xff]
    %v3303 = vld [vmem:[#allocation9 + $0x30] sm:$0xff]
    %v3304 = vld [vmem:[#allocation9 + $0x38] sm:$0xff]
    %v3305 = vld [vmem:[#allocation9 + $0x40] sm:$0xff]
    %v3306 = vld [vmem:[#allocation9 + $0x48] sm:$0xff]
    %v3307 = vld [vmem:[#allocation9 + $0x50] sm:$0xff]
    %v3308 = vld [vmem:[#allocation9 + $0x58] sm:$0xff]
    %v3309 = vld [vmem:[#allocation9 + $0x60] sm:$0xff]
    %v3310 = vld [vmem:[#allocation9 + $0x68] sm:$0xff]
    %v3311 = vld [vmem:[#allocation9 + $0x70] sm:$0xff]
    %v3312 = vld [vmem:[#allocation9 + $0x78] sm:$0xff]
    %v3313 = vld [vmem:[#allocation9 + $0x80] sm:$0xff]
    %v3314 = vld [vmem:[#allocation9 + $0x88] sm:$0xff]
    %v3315 = vld [vmem:[#allocation9 + $0x90] sm:$0xff]
    %v3316 = vld [vmem:[#allocation9 + $0x98] sm:$0xff]
    %v3317 = vld [vmem:[#allocation9 + $0xa0] sm:$0xff]
    %v3318 = vld [vmem:[#allocation9 + $0xa8] sm:$0xff]
    %v3319 = vld [vmem:[#allocation9 + $0xb0] sm:$0xff]
    %v3320 = vld [vmem:[#allocation9 + $0xb8] sm:$0xff]
    %v3321 = vld [vmem:[#allocation9 + $0xc0] sm:$0xff]
    %v3322 = vld [vmem:[#allocation9 + $0xc8] sm:$0xff]
    %v3323 = vld [vmem:[#allocation9 + $0xd0] sm:$0xff]
    %v3324 = vld [vmem:[#allocation9 + $0xd8] sm:$0xff]
    %v3325 = vld [vmem:[#allocation9 + $0xe0] sm:$0xff]
    %v3326 = vld [vmem:[#allocation9 + $0xe8] sm:$0xff]
    %v3327 = vld [vmem:[#allocation9 + $0xf0] sm:$0xff]
    %v3328 = vld [vmem:[#allocation9 + $0xf8] sm:$0xff]
    %v3329 = vld [vmem:[#allocation9 + $0x100] sm:$0xff]
    %v3330 = vld [vmem:[#allocation9 + $0x108] sm:$0xff]
    %v3331 = vld [vmem:[#allocation9 + $0x110] sm:$0xff]
    %v3332 = vld [vmem:[#allocation9 + $0x118] sm:$0xff]
    %v3333 = vld [vmem:[#allocation9 + $0x120] sm:$0xff]
    %v3334 = vld [vmem:[#allocation9 + $0x128] sm:$0xff]
    %v3335 = vld [vmem:[#allocation9 + $0x130] sm:$0xff]
    %v3336 = vld [vmem:[#allocation9 + $0x138] sm:$0xff]
    %v3337 = vld [vmem:[#allocation9 + $0x140] sm:$0xff]
    %v3338 = vld [vmem:[#allocation9 + $0x148] sm:$0xff]
    %v3339 = vld [vmem:[#allocation9 + $0x150] sm:$0xff]
    %v3340 = vld [vmem:[#allocation9 + $0x158] sm:$0xff]
    %v3341 = vld [vmem:[#allocation9 + $0x160] sm:$0xff]
    %v3342 = vld [vmem:[#allocation9 + $0x168] sm:$0xff]
    %v3343 = vld [vmem:[#allocation9 + $0x170] sm:$0xff]
    %v3344 = vld [vmem:[#allocation9 + $0x178] sm:$0xff]
    %v3345 = vld [vmem:[#allocation9 + $0x180] sm:$0xff]
    %v3346 = vld [vmem:[#allocation9 + $0x188] sm:$0xff]
    %v3347 = vld [vmem:[#allocation9 + $0x190] sm:$0xff]
    %v3348 = vld [vmem:[#allocation9 + $0x198] sm:$0xff]
    %v3349 = vld [vmem:[#allocation9 + $0x1a0] sm:$0xff]
    %v3350 = vld [vmem:[#allocation9 + $0x1a8] sm:$0xff]
    %v3351 = vld [vmem:[#allocation9 + $0x1b0] sm:$0xff]
    %v3352 = vld [vmem:[#allocation9 + $0x1b8] sm:$0xff]
    %v3353 = vld [vmem:[#allocation9 + $0x1c0] sm:$0xff]
    %v3354 = vld [vmem:[#allocation9 + $0x1c8] sm:$0xff]
    %v3355 = vld [vmem:[#allocation9 + $0x1d0] sm:$0xff]
    %v3356 = vld [vmem:[#allocation9 + $0x1d8] sm:$0xff]
    %v3357 = vld [vmem:[#allocation9 + $0x1e0] sm:$0xff]
    %v3358 = vld [vmem:[#allocation9 + $0x1e8] sm:$0xff]
    %v3359 = vld [vmem:[#allocation9 + $0x1f0] sm:$0xff]
    %v3360 = vld [vmem:[#allocation9 + $0x1f8] sm:$0xff]
    %v3361 = vld [vmem:[#allocation9 + $0x200] sm:$0xff]
    %v3362 = vld [vmem:[#allocation9 + $0x208] sm:$0xff]
    %v3363 = vld [vmem:[#allocation9 + $0x210] sm:$0xff]
    %v3364 = vld [vmem:[#allocation9 + $0x218] sm:$0xff]
    %v3365 = vld [vmem:[#allocation9 + $0x220] sm:$0xff]
    %v3366 = vld [vmem:[#allocation9 + $0x228] sm:$0xff]
    %v3367 = vld [vmem:[#allocation9 + $0x230] sm:$0xff]
    %v3368 = vld [vmem:[#allocation9 + $0x238] sm:$0xff]
    %v3369 = vld [vmem:[#allocation9 + $0x240] sm:$0xff]
    %v3370 = vld [vmem:[#allocation9 + $0x248] sm:$0xff]
    %v3371 = vld [vmem:[#allocation9 + $0x250] sm:$0xff]
    %v3372 = vld [vmem:[#allocation9 + $0x258] sm:$0xff]
    %v3373 = vld [vmem:[#allocation9 + $0x260] sm:$0xff]
    %v3374 = vld [vmem:[#allocation9 + $0x268] sm:$0xff]
    %v3375 = vld [vmem:[#allocation9 + $0x270] sm:$0xff]
    %v3376 = vld [vmem:[#allocation9 + $0x278] sm:$0xff]
    %v3377 = vld [vmem:[#allocation9 + $0x280] sm:$0xff]
    %v3378 = vld [vmem:[#allocation9 + $0x288] sm:$0xff]
    %v3379 = vld [vmem:[#allocation9 + $0x290] sm:$0xff]
    %v3380 = vld [vmem:[#allocation9 + $0x298] sm:$0xff]
    %v3381 = vld [vmem:[#allocation9 + $0x2a0] sm:$0xff]
    %v3382 = vld [vmem:[#allocation9 + $0x2a8] sm:$0xff]
    %v3383 = vld [vmem:[#allocation9 + $0x2b0] sm:$0xff]
    %v3384 = vld [vmem:[#allocation9 + $0x2b8] sm:$0xff]
    %v3385 = vld [vmem:[#allocation9 + $0x2c0] sm:$0xff]
    %v3386 = vld [vmem:[#allocation9 + $0x2c8] sm:$0xff]
    %v3387 = vld [vmem:[#allocation9 + $0x2d0] sm:$0xff]
    %v3388 = vld [vmem:[#allocation9 + $0x2d8] sm:$0xff]
    %v3389 = vld [vmem:[#allocation9 + $0x2e0] sm:$0xff]
    %v3390 = vld [vmem:[#allocation9 + $0x2e8] sm:$0xff]
    %v3391 = vld [vmem:[#allocation9 + $0x2f0] sm:$0xff]
    %v3392 = vld [vmem:[#allocation9 + $0x2f8] sm:$0xff]
    %v3393 = vld [vmem:[#allocation9 + $0x300] sm:$0xff]
    %v3394 = vld [vmem:[#allocation9 + $0x308] sm:$0xff]
    %v3395 = vld [vmem:[#allocation9 + $0x310] sm:$0xff]
    %v3396 = vld [vmem:[#allocation9 + $0x318] sm:$0xff]
    %v3397 = vld [vmem:[#allocation9 + $0x320] sm:$0xff]
    %v3398 = vld [vmem:[#allocation9 + $0x328] sm:$0xff]
    %v3399 = vld [vmem:[#allocation9 + $0x330] sm:$0xff]
    %v3400 = vld [vmem:[#allocation9 + $0x338] sm:$0xff]
    %v3401 = vld [vmem:[#allocation9 + $0x340] sm:$0xff]
    %v3402 = vld [vmem:[#allocation9 + $0x348] sm:$0xff]
    %v3403 = vld [vmem:[#allocation9 + $0x350] sm:$0xff]
    %v3404 = vld [vmem:[#allocation9 + $0x358] sm:$0xff]
    %v3405 = vld [vmem:[#allocation9 + $0x360] sm:$0xff]
    %v3406 = vld [vmem:[#allocation9 + $0x368] sm:$0xff]
    %v3407 = vld [vmem:[#allocation9 + $0x370] sm:$0xff]
    %v3408 = vld [vmem:[#allocation9 + $0x378] sm:$0xff]
    %v3409 = vld [vmem:[#allocation9 + $0x380] sm:$0xff]
    %v3410 = vld [vmem:[#allocation9 + $0x388] sm:$0xff]
    %v3411 = vld [vmem:[#allocation9 + $0x390] sm:$0xff]
    %v3412 = vld [vmem:[#allocation9 + $0x398] sm:$0xff]
    %v3413 = vld [vmem:[#allocation9 + $0x3a0] sm:$0xff]
    %v3414 = vld [vmem:[#allocation9 + $0x3a8] sm:$0xff]
    %v3415 = vld [vmem:[#allocation9 + $0x3b0] sm:$0xff]
    %v3416 = vld [vmem:[#allocation9 + $0x3b8] sm:$0xff]
    %v3417 = vld [vmem:[#allocation9 + $0x3c0] sm:$0xff]
    %v3418 = vld [vmem:[#allocation9 + $0x3c8] sm:$0xff]
    %v3419 = vld [vmem:[#allocation9 + $0x3d0] sm:$0xff]
    %v3420 = vld [vmem:[#allocation9 + $0x3d8] sm:$0xff]
    %v3421 = vld [vmem:[#allocation9 + $0x3e0] sm:$0xff]
    %v3422 = vld [vmem:[#allocation9 + $0x3e8] sm:$0xff]
    %v3423 = vld [vmem:[#allocation9 + $0x3f0] sm:$0xff]
    %v3424 = vld [vmem:[#allocation9 + $0x3f8] sm:$0xff]
    %v3425 = vld [vmem:[#allocation9 + $0x400] sm:$0xff]
    %v3426 = vld [vmem:[#allocation9 + $0x408] sm:$0xff]
    %v3427 = vld [vmem:[#allocation9 + $0x410] sm:$0xff]
    %v3428 = vld [vmem:[#allocation9 + $0x418] sm:$0xff]
    %v3429 = vld [vmem:[#allocation9 + $0x420] sm:$0xff]
    %v3430 = vld [vmem:[#allocation9 + $0x428] sm:$0xff]
    %v3431 = vld [vmem:[#allocation9 + $0x430] sm:$0xff]
    %v3432 = vld [vmem:[#allocation9 + $0x438] sm:$0xff]
    %v3433 = vld [vmem:[#allocation9 + $0x440] sm:$0xff]
    %v3434 = vld [vmem:[#allocation9 + $0x448] sm:$0xff]
    %v3435 = vld [vmem:[#allocation9 + $0x450] sm:$0xff]
    %v3436 = vld [vmem:[#allocation9 + $0x458] sm:$0xff]
    %v3437 = vld [vmem:[#allocation9 + $0x460] sm:$0xff]
    %v3438 = vld [vmem:[#allocation9 + $0x468] sm:$0xff]
    %v3439 = vld [vmem:[#allocation9 + $0x470] sm:$0xff]
    %v3440 = vld [vmem:[#allocation9 + $0x478] sm:$0xff]
    %v3441 = vld [vmem:[#allocation10] sm:$0x3]
    %v3443 = vlaneseq
    %v3444 = vshrl.u32 %v3443, 7
    %v3445 = vsub.s32 0, %v3444
    %v3446 = vrot.slane %v3441, %v3445
    %v3447 = vlaneseq
    %v3448 = vshrl.u32 %v3447, 7
    %v3449 = vsub.s32 1, %v3448
    %v3450 = vrot.slane %v3441, %v3449
    %v3597 = vunpack.c.l.b16 %v3297
    %v3598 = vunpack.c.h.b16 %v3297
    %v3599 = vunpack.c.l.b16 %v3298
    %v3600 = vunpack.c.h.b16 %v3298
    %v3601 = vunpack.c.l.b16 %v3299
    %v3602 = vunpack.c.h.b16 %v3299
    %v3603 = vunpack.c.l.b16 %v3300
    %v3604 = vunpack.c.h.b16 %v3300
    %v3605 = vunpack.c.l.b16 %v3301
    %v3606 = vunpack.c.h.b16 %v3301
    %v3607 = vunpack.c.l.b16 %v3302
    %v3608 = vunpack.c.h.b16 %v3302
    %v3609 = vunpack.c.l.b16 %v3303
    %v3610 = vunpack.c.h.b16 %v3303
    %v3611 = vunpack.c.l.b16 %v3304
    %v3612 = vunpack.c.h.b16 %v3304
    %v3613 = vunpack.c.l.b16 %v3305
    %v3614 = vunpack.c.h.b16 %v3305
    %v3615 = vunpack.c.l.b16 %v3306
    %v3616 = vunpack.c.h.b16 %v3306
    %v3617 = vunpack.c.l.b16 %v3307
    %v3618 = vunpack.c.h.b16 %v3307
    %v3619 = vunpack.c.l.b16 %v3308
    %v3620 = vunpack.c.h.b16 %v3308
    %v3621 = vunpack.c.l.b16 %v3309
    %v3622 = vunpack.c.h.b16 %v3309
    %v3623 = vunpack.c.l.b16 %v3310
    %v3624 = vunpack.c.h.b16 %v3310
    %v3625 = vunpack.c.l.b16 %v3311
    %v3626 = vunpack.c.h.b16 %v3311
    %v3627 = vunpack.c.l.b16 %v3312
    %v3628 = vunpack.c.h.b16 %v3312
    %v3629 = vunpack.c.l.b16 %v3313
    %v3630 = vunpack.c.h.b16 %v3313
    %v3631 = vunpack.c.l.b16 %v3314
    %v3632 = vunpack.c.h.b16 %v3314
    %v3633 = vunpack.c.l.b16 %v3315
    %v3634 = vunpack.c.h.b16 %v3315
    %v3635 = vunpack.c.l.b16 %v3316
    %v3636 = vunpack.c.h.b16 %v3316
    %v3637 = vunpack.c.l.b16 %v3317
    %v3638 = vunpack.c.h.b16 %v3317
    %v3639 = vunpack.c.l.b16 %v3318
    %v3640 = vunpack.c.h.b16 %v3318
    %v3641 = vunpack.c.l.b16 %v3319
    %v3642 = vunpack.c.h.b16 %v3319
    %v3643 = vunpack.c.l.b16 %v3320
    %v3644 = vunpack.c.h.b16 %v3320
    %v3645 = vunpack.c.l.b16 %v3321
    %v3646 = vunpack.c.h.b16 %v3321
    %v3647 = vunpack.c.l.b16 %v3322
    %v3648 = vunpack.c.h.b16 %v3322
    %v3649 = vunpack.c.l.b16 %v3323
    %v3650 = vunpack.c.h.b16 %v3323
    %v3651 = vunpack.c.l.b16 %v3324
    %v3652 = vunpack.c.h.b16 %v3324
    %v3653 = vunpack.c.l.b16 %v3325
    %v3654 = vunpack.c.h.b16 %v3325
    %v3655 = vunpack.c.l.b16 %v3326
    %v3656 = vunpack.c.h.b16 %v3326
    %v3657 = vunpack.c.l.b16 %v3327
    %v3658 = vunpack.c.h.b16 %v3327
    %v3659 = vunpack.c.l.b16 %v3328
    %v3660 = vunpack.c.h.b16 %v3328
    %v3661 = vunpack.c.l.b16 %v3329
    %v3662 = vunpack.c.h.b16 %v3329
    %v3663 = vunpack.c.l.b16 %v3330
    %v3664 = vunpack.c.h.b16 %v3330
    %v3665 = vunpack.c.l.b16 %v3331
    %v3666 = vunpack.c.h.b16 %v3331
    %v3667 = vunpack.c.l.b16 %v3332
    %v3668 = vunpack.c.h.b16 %v3332
    %v3669 = vunpack.c.l.b16 %v3333
    %v3670 = vunpack.c.h.b16 %v3333
    %v3671 = vunpack.c.l.b16 %v3334
    %v3672 = vunpack.c.h.b16 %v3334
    %v3673 = vunpack.c.l.b16 %v3335
    %v3674 = vunpack.c.h.b16 %v3335
    %v3675 = vunpack.c.l.b16 %v3336
    %v3676 = vunpack.c.h.b16 %v3336
    %v3677 = vunpack.c.l.b16 %v3337
    %v3678 = vunpack.c.h.b16 %v3337
    %v3679 = vunpack.c.l.b16 %v3338
    %v3680 = vunpack.c.h.b16 %v3338
    %v3681 = vunpack.c.l.b16 %v3339
    %v3682 = vunpack.c.h.b16 %v3339
    %v3683 = vunpack.c.l.b16 %v3340
    %v3684 = vunpack.c.h.b16 %v3340
    %v3685 = vunpack.c.l.b16 %v3341
    %v3686 = vunpack.c.h.b16 %v3341
    %v3687 = vunpack.c.l.b16 %v3342
    %v3688 = vunpack.c.h.b16 %v3342
    %v3689 = vunpack.c.l.b16 %v3343
    %v3690 = vunpack.c.h.b16 %v3343
    %v3691 = vunpack.c.l.b16 %v3344
    %v3692 = vunpack.c.h.b16 %v3344
    %v3693 = vunpack.c.l.b16 %v3345
    %v3694 = vunpack.c.h.b16 %v3345
    %v3695 = vunpack.c.l.b16 %v3346
    %v3696 = vunpack.c.h.b16 %v3346
    %v3697 = vunpack.c.l.b16 %v3347
    %v3698 = vunpack.c.h.b16 %v3347
    %v3699 = vunpack.c.l.b16 %v3348
    %v3700 = vunpack.c.h.b16 %v3348
    %v3701 = vunpack.c.l.b16 %v3349
    %v3702 = vunpack.c.h.b16 %v3349
    %v3703 = vunpack.c.l.b16 %v3350
    %v3704 = vunpack.c.h.b16 %v3350
    %v3705 = vunpack.c.l.b16 %v3351
    %v3706 = vunpack.c.h.b16 %v3351
    %v3707 = vunpack.c.l.b16 %v3352
    %v3708 = vunpack.c.h.b16 %v3352
    %v3709 = vunpack.c.l.b16 %v3353
    %v3710 = vunpack.c.h.b16 %v3353
    %v3711 = vunpack.c.l.b16 %v3354
    %v3712 = vunpack.c.h.b16 %v3354
    %v3713 = vunpack.c.l.b16 %v3355
    %v3714 = vunpack.c.h.b16 %v3355
    %v3715 = vunpack.c.l.b16 %v3356
    %v3716 = vunpack.c.h.b16 %v3356
    %v3717 = vunpack.c.l.b16 %v3357
    %v3718 = vunpack.c.h.b16 %v3357
    %v3719 = vunpack.c.l.b16 %v3358
    %v3720 = vunpack.c.h.b16 %v3358
    %v3721 = vunpack.c.l.b16 %v3359
    %v3722 = vunpack.c.h.b16 %v3359
    %v3723 = vunpack.c.l.b16 %v3360
    %v3724 = vunpack.c.h.b16 %v3360
    %v3725 = vunpack.c.l.b16 %v3361
    %v3726 = vunpack.c.h.b16 %v3361
    %v3727 = vunpack.c.l.b16 %v3362
    %v3728 = vunpack.c.h.b16 %v3362
    %v3729 = vunpack.c.l.b16 %v3363
    %v3730 = vunpack.c.h.b16 %v3363
    %v3731 = vunpack.c.l.b16 %v3364
    %v3732 = vunpack.c.h.b16 %v3364
    %v3733 = vunpack.c.l.b16 %v3365
    %v3734 = vunpack.c.h.b16 %v3365
    %v3735 = vunpack.c.l.b16 %v3366
    %v3736 = vunpack.c.h.b16 %v3366
    %v3737 = vunpack.c.l.b16 %v3367
    %v3738 = vunpack.c.h.b16 %v3367
    %v3739 = vunpack.c.l.b16 %v3368
    %v3740 = vunpack.c.h.b16 %v3368
    %v3741 = vunpack.c.l.b16 %v3369
    %v3742 = vunpack.c.h.b16 %v3369
    %v3743 = vunpack.c.l.b16 %v3370
    %v3744 = vunpack.c.h.b16 %v3370
    %v3745 = vunpack.c.l.b16 %v3371
    %v3746 = vunpack.c.h.b16 %v3371
    %v3747 = vunpack.c.l.b16 %v3372
    %v3748 = vunpack.c.h.b16 %v3372
    %v3749 = vunpack.c.l.b16 %v3373
    %v3750 = vunpack.c.h.b16 %v3373
    %v3751 = vunpack.c.l.b16 %v3374
    %v3752 = vunpack.c.h.b16 %v3374
    %v3753 = vunpack.c.l.b16 %v3375
    %v3754 = vunpack.c.h.b16 %v3375
    %v3755 = vunpack.c.l.b16 %v3376
    %v3756 = vunpack.c.h.b16 %v3376
    %v3757 = vunpack.c.l.b16 %v3377
    %v3758 = vunpack.c.h.b16 %v3377
    %v3759 = vunpack.c.l.b16 %v3378
    %v3760 = vunpack.c.h.b16 %v3378
    %v3761 = vunpack.c.l.b16 %v3379
    %v3762 = vunpack.c.h.b16 %v3379
    %v3763 = vunpack.c.l.b16 %v3380
    %v3764 = vunpack.c.h.b16 %v3380
    %v3765 = vunpack.c.l.b16 %v3381
    %v3766 = vunpack.c.h.b16 %v3381
    %v3767 = vunpack.c.l.b16 %v3382
    %v3768 = vunpack.c.h.b16 %v3382
    %v3769 = vunpack.c.l.b16 %v3383
    %v3770 = vunpack.c.h.b16 %v3383
    %v3771 = vunpack.c.l.b16 %v3384
    %v3772 = vunpack.c.h.b16 %v3384
    %v3773 = vunpack.c.l.b16 %v3385
    %v3774 = vunpack.c.h.b16 %v3385
    %v3775 = vunpack.c.l.b16 %v3386
    %v3776 = vunpack.c.h.b16 %v3386
    %v3777 = vunpack.c.l.b16 %v3387
    %v3778 = vunpack.c.h.b16 %v3387
    %v3779 = vunpack.c.l.b16 %v3388
    %v3780 = vunpack.c.h.b16 %v3388
    %v3781 = vunpack.c.l.b16 %v3389
    %v3782 = vunpack.c.h.b16 %v3389
    %v3783 = vunpack.c.l.b16 %v3390
    %v3784 = vunpack.c.h.b16 %v3390
    %v3785 = vunpack.c.l.b16 %v3391
    %v3786 = vunpack.c.h.b16 %v3391
    %v3787 = vunpack.c.l.b16 %v3392
    %v3788 = vunpack.c.h.b16 %v3392
    %v3789 = vunpack.c.l.b16 %v3393
    %v3790 = vunpack.c.h.b16 %v3393
    %v3791 = vunpack.c.l.b16 %v3394
    %v3792 = vunpack.c.h.b16 %v3394
    %v3793 = vunpack.c.l.b16 %v3395
    %v3794 = vunpack.c.h.b16 %v3395
    %v3795 = vunpack.c.l.b16 %v3396
    %v3796 = vunpack.c.h.b16 %v3396
    %v3797 = vunpack.c.l.b16 %v3397
    %v3798 = vunpack.c.h.b16 %v3397
    %v3799 = vunpack.c.l.b16 %v3398
    %v3800 = vunpack.c.h.b16 %v3398
    %v3801 = vunpack.c.l.b16 %v3399
    %v3802 = vunpack.c.h.b16 %v3399
    %v3803 = vunpack.c.l.b16 %v3400
    %v3804 = vunpack.c.h.b16 %v3400
    %v3805 = vunpack.c.l.b16 %v3401
    %v3806 = vunpack.c.h.b16 %v3401
    %v3807 = vunpack.c.l.b16 %v3402
    %v3808 = vunpack.c.h.b16 %v3402
    %v3809 = vunpack.c.l.b16 %v3403
    %v3810 = vunpack.c.h.b16 %v3403
    %v3811 = vunpack.c.l.b16 %v3404
    %v3812 = vunpack.c.h.b16 %v3404
    %v3813 = vunpack.c.l.b16 %v3405
    %v3814 = vunpack.c.h.b16 %v3405
    %v3815 = vunpack.c.l.b16 %v3406
    %v3816 = vunpack.c.h.b16 %v3406
    %v3817 = vunpack.c.l.b16 %v3407
    %v3818 = vunpack.c.h.b16 %v3407
    %v3819 = vunpack.c.l.b16 %v3408
    %v3820 = vunpack.c.h.b16 %v3408
    %v3821 = vunpack.c.l.b16 %v3409
    %v3822 = vunpack.c.h.b16 %v3409
    %v3823 = vunpack.c.l.b16 %v3410
    %v3824 = vunpack.c.h.b16 %v3410
    %v3825 = vunpack.c.l.b16 %v3411
    %v3826 = vunpack.c.h.b16 %v3411
    %v3827 = vunpack.c.l.b16 %v3412
    %v3828 = vunpack.c.h.b16 %v3412
    %v3829 = vunpack.c.l.b16 %v3413
    %v3830 = vunpack.c.h.b16 %v3413
    %v3831 = vunpack.c.l.b16 %v3414
    %v3832 = vunpack.c.h.b16 %v3414
    %v3833 = vunpack.c.l.b16 %v3415
    %v3834 = vunpack.c.h.b16 %v3415
    %v3835 = vunpack.c.l.b16 %v3416
    %v3836 = vunpack.c.h.b16 %v3416
    %v3837 = vunpack.c.l.b16 %v3417
    %v3838 = vunpack.c.h.b16 %v3417
    %v3839 = vunpack.c.l.b16 %v3418
    %v3840 = vunpack.c.h.b16 %v3418
    %v3841 = vunpack.c.l.b16 %v3419
    %v3842 = vunpack.c.h.b16 %v3419
    %v3843 = vunpack.c.l.b16 %v3420
    %v3844 = vunpack.c.h.b16 %v3420
    %v3845 = vunpack.c.l.b16 %v3421
    %v3846 = vunpack.c.h.b16 %v3421
    %v3847 = vunpack.c.l.b16 %v3422
    %v3848 = vunpack.c.h.b16 %v3422
    %v3849 = vunpack.c.l.b16 %v3423
    %v3850 = vunpack.c.h.b16 %v3423
    %v3851 = vunpack.c.l.b16 %v3424
    %v3852 = vunpack.c.h.b16 %v3424
    %v3853 = vunpack.c.l.b16 %v3425
    %v3854 = vunpack.c.h.b16 %v3425
    %v3855 = vunpack.c.l.b16 %v3426
    %v3856 = vunpack.c.h.b16 %v3426
    %v3857 = vunpack.c.l.b16 %v3427
    %v3858 = vunpack.c.h.b16 %v3427
    %v3859 = vunpack.c.l.b16 %v3428
    %v3860 = vunpack.c.h.b16 %v3428
    %v3861 = vunpack.c.l.b16 %v3429
    %v3862 = vunpack.c.h.b16 %v3429
    %v3863 = vunpack.c.l.b16 %v3430
    %v3864 = vunpack.c.h.b16 %v3430
    %v3865 = vunpack.c.l.b16 %v3431
    %v3866 = vunpack.c.h.b16 %v3431
    %v3867 = vunpack.c.l.b16 %v3432
    %v3868 = vunpack.c.h.b16 %v3432
    %v3869 = vunpack.c.l.b16 %v3433
    %v3870 = vunpack.c.h.b16 %v3433
    %v3871 = vunpack.c.l.b16 %v3434
    %v3872 = vunpack.c.h.b16 %v3434
    %v3873 = vunpack.c.l.b16 %v3435
    %v3874 = vunpack.c.h.b16 %v3435
    %v3875 = vunpack.c.l.b16 %v3436
    %v3876 = vunpack.c.h.b16 %v3436
    %v3877 = vunpack.c.l.b16 %v3437
    %v3878 = vunpack.c.h.b16 %v3437
    %v3879 = vunpack.c.l.b16 %v3438
    %v3880 = vunpack.c.h.b16 %v3438
    %v3881 = vunpack.c.l.b16 %v3439
    %v3882 = vunpack.c.h.b16 %v3439
    %v3883 = vunpack.c.l.b16 %v3440
    %v3884 = vunpack.c.h.b16 %v3440
    %v3885 = vpack.c.b16 %v3599, %v3597
    %v3886 = vpack.c.b16 %v3600, %v3598
    %v3887 = vpack.c.b16 %v3603, %v3601
    %v3888 = vpack.c.b16 %v3604, %v3602
    %v3889 = vpack.c.b16 %v3607, %v3605
    %v3890 = vpack.c.b16 %v3608, %v3606
    %v3891 = vpack.c.b16 %v3611, %v3609
    %v3892 = vpack.c.b16 %v3612, %v3610
    %v3893 = vpack.c.b16 %v3615, %v3613
    %v3894 = vpack.c.b16 %v3616, %v3614
    %v3895 = vpack.c.b16 %v3619, %v3617
    %v3896 = vpack.c.b16 %v3620, %v3618
    %v3897 = vpack.c.b16 %v3623, %v3621
    %v3898 = vpack.c.b16 %v3624, %v3622
    %v3899 = vpack.c.b16 %v3627, %v3625
    %v3900 = vpack.c.b16 %v3628, %v3626
    %v3901 = vpack.c.b16 %v3631, %v3629
    %v3902 = vpack.c.b16 %v3632, %v3630
    %v3903 = vpack.c.b16 %v3635, %v3633
    %v3904 = vpack.c.b16 %v3636, %v3634
    %v3905 = vpack.c.b16 %v3639, %v3637
    %v3906 = vpack.c.b16 %v3640, %v3638
    %v3907 = vpack.c.b16 %v3643, %v3641
    %v3908 = vpack.c.b16 %v3644, %v3642
    %v3909 = vpack.c.b16 %v3647, %v3645
    %v3910 = vpack.c.b16 %v3648, %v3646
    %v3911 = vpack.c.b16 %v3651, %v3649
    %v3912 = vpack.c.b16 %v3652, %v3650
    %v3913 = vpack.c.b16 %v3655, %v3653
    %v3914 = vpack.c.b16 %v3656, %v3654
    %v3915 = vpack.c.b16 %v3659, %v3657
    %v3916 = vpack.c.b16 %v3660, %v3658
    %v3917 = vpack.c.b16 %v3663, %v3661
    %v3918 = vpack.c.b16 %v3664, %v3662
    %v3919 = vpack.c.b16 %v3667, %v3665
    %v3920 = vpack.c.b16 %v3668, %v3666
    %v3921 = vpack.c.b16 %v3671, %v3669
    %v3922 = vpack.c.b16 %v3672, %v3670
    %v3923 = vpack.c.b16 %v3675, %v3673
    %v3924 = vpack.c.b16 %v3676, %v3674
    %v3925 = vpack.c.b16 %v3679, %v3677
    %v3926 = vpack.c.b16 %v3680, %v3678
    %v3927 = vpack.c.b16 %v3683, %v3681
    %v3928 = vpack.c.b16 %v3684, %v3682
    %v3929 = vpack.c.b16 %v3687, %v3685
    %v3930 = vpack.c.b16 %v3688, %v3686
    %v3931 = vpack.c.b16 %v3691, %v3689
    %v3932 = vpack.c.b16 %v3692, %v3690
    %v3933 = vpack.c.b16 %v3695, %v3693
    %v3934 = vpack.c.b16 %v3696, %v3694
    %v3935 = vpack.c.b16 %v3699, %v3697
    %v3936 = vpack.c.b16 %v3700, %v3698
    %v3937 = vpack.c.b16 %v3703, %v3701
    %v3938 = vpack.c.b16 %v3704, %v3702
    %v3939 = vpack.c.b16 %v3707, %v3705
    %v3940 = vpack.c.b16 %v3708, %v3706
    %v3941 = vpack.c.b16 %v3711, %v3709
    %v3942 = vpack.c.b16 %v3712, %v3710
    %v3943 = vpack.c.b16 %v3715, %v3713
    %v3944 = vpack.c.b16 %v3716, %v3714
    %v3945 = vpack.c.b16 %v3719, %v3717
    %v3946 = vpack.c.b16 %v3720, %v3718
    %v3947 = vpack.c.b16 %v3723, %v3721
    %v3948 = vpack.c.b16 %v3724, %v3722
    %v3949 = vpack.c.b16 %v3727, %v3725
    %v3950 = vpack.c.b16 %v3728, %v3726
    %v3951 = vpack.c.b16 %v3731, %v3729
    %v3952 = vpack.c.b16 %v3732, %v3730
    %v3953 = vpack.c.b16 %v3735, %v3733
    %v3954 = vpack.c.b16 %v3736, %v3734
    %v3955 = vpack.c.b16 %v3739, %v3737
    %v3956 = vpack.c.b16 %v3740, %v3738
    %v3957 = vpack.c.b16 %v3743, %v3741
    %v3958 = vpack.c.b16 %v3744, %v3742
    %v3959 = vpack.c.b16 %v3747, %v3745
    %v3960 = vpack.c.b16 %v3748, %v3746
    %v3961 = vpack.c.b16 %v3751, %v3749
    %v3962 = vpack.c.b16 %v3752, %v3750
    %v3963 = vpack.c.b16 %v3755, %v3753
    %v3964 = vpack.c.b16 %v3756, %v3754
    %v3965 = vpack.c.b16 %v3759, %v3757
    %v3966 = vpack.c.b16 %v3760, %v3758
    %v3967 = vpack.c.b16 %v3763, %v3761
    %v3968 = vpack.c.b16 %v3764, %v3762
    %v3969 = vpack.c.b16 %v3767, %v3765
    %v3970 = vpack.c.b16 %v3768, %v3766
    %v3971 = vpack.c.b16 %v3771, %v3769
    %v3972 = vpack.c.b16 %v3772, %v3770
    %v3973 = vpack.c.b16 %v3775, %v3773
    %v3974 = vpack.c.b16 %v3776, %v3774
    %v3975 = vpack.c.b16 %v3779, %v3777
    %v3976 = vpack.c.b16 %v3780, %v3778
    %v3977 = vpack.c.b16 %v3783, %v3781
    %v3978 = vpack.c.b16 %v3784, %v3782
    %v3979 = vpack.c.b16 %v3787, %v3785
    %v3980 = vpack.c.b16 %v3788, %v3786
    %v3981 = vpack.c.b16 %v3791, %v3789
    %v3982 = vpack.c.b16 %v3792, %v3790
    %v3983 = vpack.c.b16 %v3795, %v3793
    %v3984 = vpack.c.b16 %v3796, %v3794
    %v3985 = vpack.c.b16 %v3799, %v3797
    %v3986 = vpack.c.b16 %v3800, %v3798
    %v3987 = vpack.c.b16 %v3803, %v3801
    %v3988 = vpack.c.b16 %v3804, %v3802
    %v3989 = vpack.c.b16 %v3807, %v3805
    %v3990 = vpack.c.b16 %v3808, %v3806
    %v3991 = vpack.c.b16 %v3811, %v3809
    %v3992 = vpack.c.b16 %v3812, %v3810
    %v3993 = vpack.c.b16 %v3815, %v3813
    %v3994 = vpack.c.b16 %v3816, %v3814
    %v3995 = vpack.c.b16 %v3819, %v3817
    %v3996 = vpack.c.b16 %v3820, %v3818
    %v3997 = vpack.c.b16 %v3823, %v3821
    %v3998 = vpack.c.b16 %v3824, %v3822
    %v3999 = vpack.c.b16 %v3827, %v3825
    %v4000 = vpack.c.b16 %v3828, %v3826
    %v4001 = vpack.c.b16 %v3831, %v3829
    %v4002 = vpack.c.b16 %v3832, %v3830
    %v4003 = vpack.c.b16 %v3835, %v3833
    %v4004 = vpack.c.b16 %v3836, %v3834
    %v4005 = vpack.c.b16 %v3839, %v3837
    %v4006 = vpack.c.b16 %v3840, %v3838
    %v4007 = vpack.c.b16 %v3843, %v3841
    %v4008 = vpack.c.b16 %v3844, %v3842
    %v4009 = vpack.c.b16 %v3847, %v3845
    %v4010 = vpack.c.b16 %v3848, %v3846
    %v4011 = vpack.c.b16 %v3851, %v3849
    %v4012 = vpack.c.b16 %v3852, %v3850
    %v4013 = vpack.c.b16 %v3855, %v3853
    %v4014 = vpack.c.b16 %v3856, %v3854
    %v4015 = vpack.c.b16 %v3859, %v3857
    %v4016 = vpack.c.b16 %v3860, %v3858
    %v4017 = vpack.c.b16 %v3863, %v3861
    %v4018 = vpack.c.b16 %v3864, %v3862
    %v4019 = vpack.c.b16 %v3867, %v3865
    %v4020 = vpack.c.b16 %v3868, %v3866
    %v4021 = vpack.c.b16 %v3871, %v3869
    %v4022 = vpack.c.b16 %v3872, %v3870
    %v4023 = vpack.c.b16 %v3875, %v3873
    %v4024 = vpack.c.b16 %v3876, %v3874
    %v4025 = vpack.c.b16 %v3879, %v3877
    %v4026 = vpack.c.b16 %v3880, %v3878
    %v4027 = vpack.c.b16 %v3883, %v3881
    %v4028 = vpack.c.b16 %v3884, %v3882
    %4173 = vmatprep.subr.bf16.mxu0 %v3886
    %4174 = vmatpush1.bf16.msra.mxu0 %v3885
    %4175 = vmatprep.subr.bf16.mxu0 %v3888
    %4176 = vmatpush1.bf16.msra.mxu0 %v3887
    %4177 = vmatprep.subr.bf16.mxu0 %v3890
    %4178 = vmatpush1.bf16.msra.mxu0 %v3889
    %4179 = vmatprep.subr.bf16.mxu0 %v3892
    %4180 = vmatpush1.bf16.msra.mxu0 %v3891
    %4181 = vmatprep.subr.bf16.mxu0 %v3894
    %4182 = vmatpush1.bf16.msra.mxu0 %v3893
    %4183 = vmatprep.subr.bf16.mxu0 %v3896
    %4184 = vmatpush1.bf16.msra.mxu0 %v3895
    %4185 = vmatprep.subr.bf16.mxu0 %v3898
    %4186 = vmatpush1.bf16.msra.mxu0 %v3897
    %4187 = vmatprep.subr.bf16.mxu0 %v3900
    %4188 = vmatpush1.bf16.msra.mxu0 %v3899
    %4189 = vmatprep.subr.bf16.mxu0 %v3902
    %4190 = vmatpush1.bf16.msra.mxu0 %v3901
    %4191 = vmatprep.subr.bf16.mxu0 %v3904
    %4192 = vmatpush1.bf16.msra.mxu0 %v3903
    %4193 = vmatprep.subr.bf16.mxu0 %v3906
    %4194 = vmatpush1.bf16.msra.mxu0 %v3905
    %4195 = vmatprep.subr.bf16.mxu0 %v3908
    %4196 = vmatpush1.bf16.msra.mxu0 %v3907
    %4197 = vmatprep.subr.bf16.mxu0 %v3910
    %4198 = vmatpush1.bf16.msra.mxu0 %v3909
    %4199 = vmatprep.subr.bf16.mxu0 %v3912
    %4200 = vmatpush1.bf16.msra.mxu0 %v3911
    %4201 = vmatprep.subr.bf16.mxu0 %v3914
    %4202 = vmatpush1.bf16.msra.mxu0 %v3913
    %4203 = vmatprep.subr.bf16.mxu0 %v3916
    %4204 = vmatpush1.bf16.msra.mxu0 %v3915
    %4205 = vmatprep.mubr.bf16.mxu0 %v3289
    %4206 = vmatmul.mubr.bf16.gmra.mrb[0].mxu0 %v3288
    %v4207 = vpop.f32.mrb[0].mxu0
    %v4208 = vadd.f32 %v3446, %v4207
    %v4209 = vpop.f32.mrb[0].mxu0
    %v4210 = vadd.f32 %v3450, %v4209
    %v4211 = vpop.f32.mrb[0].mxu0
    %v4212 = vadd.f32 %v3446, %v4211
    %v4213 = vpop.f32.mrb[0].mxu0
    %v4214 = vadd.f32 %v3450, %v4213
    %4215 = vdwg.mxu0
    %4216 = vmatprep.subr.bf16.mxu0 %v3918
    %4217 = vmatpush1.bf16.msra.mxu0 %v3917
    %4218 = vmatprep.subr.bf16.mxu0 %v3920
    %4219 = vmatpush1.bf16.msra.mxu0 %v3919
    %4220 = vmatprep.subr.bf16.mxu0 %v3922
    %4221 = vmatpush1.bf16.msra.mxu0 %v3921
    %4222 = vmatprep.subr.bf16.mxu0 %v3924
    %4223 = vmatpush1.bf16.msra.mxu0 %v3923
    %4224 = vmatprep.subr.bf16.mxu0 %v3926
    %4225 = vmatpush1.bf16.msra.mxu0 %v3925
    %4226 = vmatprep.subr.bf16.mxu0 %v3928
    %4227 = vmatpush1.bf16.msra.mxu0 %v3927
    %4228 = vmatprep.subr.bf16.mxu0 %v3930
    %4229 = vmatpush1.bf16.msra.mxu0 %v3929
    %4230 = vmatprep.subr.bf16.mxu0 %v3932
    %4231 = vmatpush1.bf16.msra.mxu0 %v3931
    %4232 = vmatprep.subr.bf16.mxu0 %v3934
    %4233 = vmatpush1.bf16.msra.mxu0 %v3933
    %4234 = vmatprep.subr.bf16.mxu0 %v3936
    %4235 = vmatpush1.bf16.msra.mxu0 %v3935
    %4236 = vmatprep.subr.bf16.mxu0 %v3938
    %4237 = vmatpush1.bf16.msra.mxu0 %v3937
    %4238 = vmatprep.subr.bf16.mxu0 %v3940
    %4239 = vmatpush1.bf16.msra.mxu0 %v3939
    %4240 = vmatprep.subr.bf16.mxu0 %v3942
    %4241 = vmatpush1.bf16.msra.mxu0 %v3941
    %4242 = vmatprep.subr.bf16.mxu0 %v3944
    %4243 = vmatpush1.bf16.msra.mxu0 %v3943
    %4244 = vmatprep.subr.bf16.mxu0 %v3946
    %4245 = vmatpush1.bf16.msra.mxu0 %v3945
    %4246 = vmatprep.subr.bf16.mxu0 %v3948
    %4247 = vmatpush1.bf16.msra.mxu0 %v3947
    %4248 = vmatprep.mubr.bf16.mxu0 %v3291
    %4249 = vmatmul.mubr.bf16.gmra.mrb[0].mxu0 %v3290
    %v4250 = vpop.f32.mrb[0].mxu0
    %v4251 = vadd.f32 %v4208, %v4250
    %v4252 = vpop.f32.mrb[0].mxu0
    %v4253 = vadd.f32 %v4210, %v4252
    %v4254 = vpop.f32.mrb[0].mxu0
    %v4255 = vadd.f32 %v4212, %v4254
    %v4256 = vpop.f32.mrb[0].mxu0
    %v4257 = vadd.f32 %v4214, %v4256
    %4258 = vdwg.mxu0
    %4259 = vmatprep.subr.bf16.mxu0 %v3950
    %4260 = vmatpush1.bf16.msra.mxu0 %v3949
    %4261 = vmatprep.subr.bf16.mxu0 %v3952
    %4262 = vmatpush1.bf16.msra.mxu0 %v3951
    %4263 = vmatprep.subr.bf16.mxu0 %v3954
    %4264 = vmatpush1.bf16.msra.mxu0 %v3953
    %4265 = vmatprep.subr.bf16.mxu0 %v3956
    %4266 = vmatpush1.bf16.msra.mxu0 %v3955
    %4267 = vmatprep.subr.bf16.mxu0 %v3958
    %4268 = vmatpush1.bf16.msra.mxu0 %v3957
    %4269 = vmatprep.subr.bf16.mxu0 %v3960
    %4270 = vmatpush1.bf16.msra.mxu0 %v3959
    %4271 = vmatprep.subr.bf16.mxu0 %v3962
    %4272 = vmatpush1.bf16.msra.mxu0 %v3961
    %4273 = vmatprep.subr.bf16.mxu0 %v3964
    %4274 = vmatpush1.bf16.msra.mxu0 %v3963
    %4275 = vmatprep.subr.bf16.mxu0 %v3966
    %4276 = vmatpush1.bf16.msra.mxu0 %v3965
    %4277 = vmatprep.subr.bf16.mxu0 %v3968
    %4278 = vmatpush1.bf16.msra.mxu0 %v3967
    %4279 = vmatprep.subr.bf16.mxu0 %v3970
    %4280 = vmatpush1.bf16.msra.mxu0 %v3969
    %4281 = vmatprep.subr.bf16.mxu0 %v3972
    %4282 = vmatpush1.bf16.msra.mxu0 %v3971
    %4283 = vmatprep.subr.bf16.mxu0 %v3974
    %4284 = vmatpush1.bf16.msra.mxu0 %v3973
    %4285 = vmatprep.subr.bf16.mxu0 %v3976
    %4286 = vmatpush1.bf16.msra.mxu0 %v3975
    %4287 = vmatprep.subr.bf16.mxu0 %v3978
    %4288 = vmatpush1.bf16.msra.mxu0 %v3977
    %4289 = vmatprep.subr.bf16.mxu0 %v3980
    %4290 = vmatpush1.bf16.msra.mxu0 %v3979
    %4291 = vmatprep.mubr.bf16.mxu0 %v3293
    %4292 = vmatmul.mubr.bf16.gmra.mrb[0].mxu0 %v3292
    %v4293 = vpop.f32.mrb[0].mxu0
    %v4294 = vadd.f32 %v4251, %v4293
    %v4295 = vpop.f32.mrb[0].mxu0
    %v4296 = vadd.f32 %v4253, %v4295
    %v4297 = vpop.f32.mrb[0].mxu0
    %v4298 = vadd.f32 %v4255, %v4297
    %v4299 = vpop.f32.mrb[0].mxu0
    %v4300 = vadd.f32 %v4257, %v4299
    %4301 = vdwg.mxu0
    %4302 = vmatprep.subr.bf16.mxu0 %v3982
    %4303 = vmatpush1.bf16.msra.mxu0 %v3981
    %4304 = vmatprep.subr.bf16.mxu0 %v3984
    %4305 = vmatpush1.bf16.msra.mxu0 %v3983
    %4306 = vmatprep.subr.bf16.mxu0 %v3986
    %4307 = vmatpush1.bf16.msra.mxu0 %v3985
    %4308 = vmatprep.subr.bf16.mxu0 %v3988
    %4309 = vmatpush1.bf16.msra.mxu0 %v3987
    %4310 = vmatprep.subr.bf16.mxu0 %v3990
    %4311 = vmatpush1.bf16.msra.mxu0 %v3989
    %4312 = vmatprep.subr.bf16.mxu0 %v3992
    %4313 = vmatpush1.bf16.msra.mxu0 %v3991
    %4314 = vmatprep.subr.bf16.mxu0 %v3994
    %4315 = vmatpush1.bf16.msra.mxu0 %v3993
    %4316 = vmatprep.subr.bf16.mxu0 %v3996
    %4317 = vmatpush1.bf16.msra.mxu0 %v3995
    %4318 = vmatprep.subr.bf16.mxu0 %v3998
    %4319 = vmatpush1.bf16.msra.mxu0 %v3997
    %4320 = vmatprep.subr.bf16.mxu0 %v4000
    %4321 = vmatpush1.bf16.msra.mxu0 %v3999
    %4322 = vmatprep.subr.bf16.mxu0 %v4002
    %4323 = vmatpush1.bf16.msra.mxu0 %v4001
    %4324 = vmatprep.subr.bf16.mxu0 %v4004
    %4325 = vmatpush1.bf16.msra.mxu0 %v4003
    %4326 = vmatprep.subr.bf16.mxu0 %v4006
    %4327 = vmatpush1.bf16.msra.mxu0 %v4005
    %4328 = vmatprep.subr.bf16.mxu0 %v4008
    %4329 = vmatpush1.bf16.msra.mxu0 %v4007
    %4330 = vmatprep.subr.bf16.mxu0 %v4010
    %4331 = vmatpush1.bf16.msra.mxu0 %v4009
    %4332 = vmatprep.subr.bf16.mxu0 %v4012
    %4333 = vmatpush1.bf16.msra.mxu0 %v4011
    %4334 = vmatprep.mubr.bf16.mxu0 %v3295
    %4335 = vmatmul.mubr.bf16.gmra.mrb[0].mxu0 %v3294
    %v4336 = vpop.f32.mrb[0].mxu0
    %v4337 = vadd.f32 %v4294, %v4336
    %v4338 = vpop.f32.mrb[0].mxu0
    %v4339 = vadd.f32 %v4296, %v4338
    %v4340 = vpop.f32.mrb[0].mxu0
    %v4341 = vadd.f32 %v4298, %v4340
    %v4342 = vpop.f32.mrb[0].mxu0
    %v4343 = vadd.f32 %v4300, %v4342
    %4344 = vdwg.mxu0
    %4345 = vmatprep.subr.bf16.mxu0 %v4014
    %4346 = vmatpush1.bf16.msra.mxu0 %v4013
    %4347 = vmatprep.subr.bf16.mxu0 %v4016
    %4348 = vmatpush1.bf16.msra.mxu0 %v4015
    %4349 = vmatprep.subr.bf16.mxu0 %v4018
    %4350 = vmatpush1.bf16.msra.mxu0 %v4017
    %4351 = vmatprep.subr.bf16.mxu0 %v4020
    %4352 = vmatpush1.bf16.msra.mxu0 %v4019
    %4353 = vmatprep.subr.bf16.mxu0 %v4022
    %4354 = vmatpush1.bf16.msra.mxu0 %v4021
    %4355 = vmatprep.subr.bf16.mxu0 %v4024
    %4356 = vmatpush1.bf16.msra.mxu0 %v4023
    %4357 = vmatprep.subr.bf16.mxu0 %v4026
    %4358 = vmatpush1.bf16.msra.mxu0 %v4025
    %4359 = vmatprep.subr.bf16.mxu0 %v4028
    %4360 = vmatpush1.bf16.msra.mxu0 %v4027
    %4361 = vmatprep.subr.bf16.mxu0 0
    %4362 = vmatpush1.bf16.msra.mxu0 0
    %4363 = vmatprep.subr.bf16.mxu0 0
    %4364 = vmatpush1.bf16.msra.mxu0 0
    %4365 = vmatprep.subr.bf16.mxu0 0
    %4366 = vmatpush1.bf16.msra.mxu0 0
    %4367 = vmatprep.subr.bf16.mxu0 0
    %4368 = vmatpush1.bf16.msra.mxu0 0
    %4369 = vmatprep.subr.bf16.mxu0 0
    %4370 = vmatpush1.bf16.msra.mxu0 0
    %4371 = vmatprep.subr.bf16.mxu0 0
    %4372 = vmatpush1.bf16.msra.mxu0 0
    %4373 = vmatprep.subr.bf16.mxu0 0
    %4374 = vmatpush1.bf16.msra.mxu0 0
    %4375 = vmatprep.subr.bf16.mxu0 0
    %4376 = vmatpush1.bf16.msra.mxu0 0
    %4377 = vmatprep.mubr.bf16.mxu0 0
    %4378 = vmatmul.mubr.bf16.gmra.mrb[0].mxu0 %v3296
    %v4379 = vpop.f32.mrb[0].mxu0
    %v4380 = vadd.f32 %v4337, %v4379
    %v4381 = vpop.f32.mrb[0].mxu0
    %v4382 = vadd.f32 %v4339, %v4381
    %v4383 = vpop.f32.mrb[0].mxu0
    %v4384 = vadd.f32 %v4341, %v4383
    %v4385 = vpop.f32.mrb[0].mxu0
    %v4386 = vadd.f32 %v4343, %v4385
    %4387 = vdwg.mxu0
    %v4388 = vmax.f32 %v4380, 0.0
    %v4389 = vmax.f32 %v4382, 0.0
    %v4390 = vmax.f32 %v4384, 0.0
    %v4391 = vmax.f32 %v4386, 0.0
    %v4392 = vpack.c.bf16 %v4390, %v4388
    %v4393 = vpack.c.bf16 %v4391, %v4389
    %v4394 = vld [vmem:[#allocation12] sm:$0xf]
    %v4395 = vld [vmem:[#allocation12 + $0x4] sm:$0xf]
    %v4396 = vld [vmem:[#allocation12 + $0x8] sm:$0xf]
    %v4397 = vld [vmem:[#allocation12 + $0xc] sm:$0xf]
    %v4398 = vld [vmem:[#allocation12 + $0x10] sm:$0xf]
    %v4399 = vld [vmem:[#allocation12 + $0x14] sm:$0xf]
    %v4400 = vld [vmem:[#allocation12 + $0x18] sm:$0xf]
    %v4401 = vld [vmem:[#allocation12 + $0x1c] sm:$0xf]
    %v4402 = vld [vmem:[#allocation12 + $0x20] sm:$0xf]
    %v4403 = vld [vmem:[#allocation12 + $0x24] sm:$0xf]
    %v4404 = vld [vmem:[#allocation12 + $0x28] sm:$0xf]
    %v4405 = vld [vmem:[#allocation12 + $0x2c] sm:$0xf]
    %v4406 = vld [vmem:[#allocation12 + $0x30] sm:$0xf]
    %v4407 = vld [vmem:[#allocation12 + $0x34] sm:$0xf]
    %v4408 = vld [vmem:[#allocation12 + $0x38] sm:$0xf]
    %v4409 = vld [vmem:[#allocation12 + $0x3c] sm:$0xf]
    %v4410 = vld [vmem:[#allocation12 + $0x40] sm:$0xf]
    %v4411 = vld [vmem:[#allocation12 + $0x44] sm:$0xf]
    %v4412 = vld [vmem:[#allocation12 + $0x48] sm:$0xf]
    %v4413 = vld [vmem:[#allocation12 + $0x4c] sm:$0xf]
    %v4414 = vld [vmem:[#allocation12 + $0x50] sm:$0xf]
    %v4415 = vld [vmem:[#allocation12 + $0x54] sm:$0xf]
    %v4416 = vld [vmem:[#allocation12 + $0x58] sm:$0xf]
    %v4417 = vld [vmem:[#allocation12 + $0x5c] sm:$0xf]
    %v4418 = vld [vmem:[#allocation12 + $0x60] sm:$0xf]
    %v4419 = vld [vmem:[#allocation12 + $0x64] sm:$0xf]
    %v4420 = vld [vmem:[#allocation12 + $0x68] sm:$0xf]
    %v4421 = vld [vmem:[#allocation12 + $0x6c] sm:$0xf]
    %v4422 = vld [vmem:[#allocation12 + $0x70] sm:$0xf]
    %v4423 = vld [vmem:[#allocation12 + $0x74] sm:$0xf]
    %v4424 = vld [vmem:[#allocation12 + $0x78] sm:$0xf]
    %v4425 = vld [vmem:[#allocation12 + $0x7c] sm:$0xf]
    %v4426 = vld [vmem:[#allocation13] sm:$0x1]
    %v4428 = vlaneseq
    %v4429 = vshrl.u32 %v4428, 7
    %v4430 = vsub.s32 0, %v4429
    %v4431 = vrot.slane %v4426, %v4430
    %v4465 = vunpack.c.l.b16 %v4394
    %v4466 = vunpack.c.l.b16 %v4395
    %v4467 = vunpack.c.l.b16 %v4396
    %v4468 = vunpack.c.l.b16 %v4397
    %v4469 = vunpack.c.l.b16 %v4398
    %v4470 = vunpack.c.l.b16 %v4399
    %v4471 = vunpack.c.l.b16 %v4400
    %v4472 = vunpack.c.l.b16 %v4401
    %v4473 = vunpack.c.l.b16 %v4402
    %v4474 = vunpack.c.l.b16 %v4403
    %v4475 = vunpack.c.l.b16 %v4404
    %v4476 = vunpack.c.l.b16 %v4405
    %v4477 = vunpack.c.l.b16 %v4406
    %v4478 = vunpack.c.l.b16 %v4407
    %v4479 = vunpack.c.l.b16 %v4408
    %v4480 = vunpack.c.l.b16 %v4409
    %v4481 = vunpack.c.l.b16 %v4410
    %v4482 = vunpack.c.l.b16 %v4411
    %v4483 = vunpack.c.l.b16 %v4412
    %v4484 = vunpack.c.l.b16 %v4413
    %v4485 = vunpack.c.l.b16 %v4414
    %v4486 = vunpack.c.l.b16 %v4415
    %v4487 = vunpack.c.l.b16 %v4416
    %v4488 = vunpack.c.l.b16 %v4417
    %v4489 = vunpack.c.l.b16 %v4418
    %v4490 = vunpack.c.l.b16 %v4419
    %v4491 = vunpack.c.l.b16 %v4420
    %v4492 = vunpack.c.l.b16 %v4421
    %v4493 = vunpack.c.l.b16 %v4422
    %v4494 = vunpack.c.l.b16 %v4423
    %v4495 = vunpack.c.l.b16 %v4424
    %v4496 = vunpack.c.l.b16 %v4425
    %v4497 = vpack.c.b16 %v4466, %v4465
    %v4498 = vpack.c.b16 %v4468, %v4467
    %v4499 = vpack.c.b16 %v4470, %v4469
    %v4500 = vpack.c.b16 %v4472, %v4471
    %v4501 = vpack.c.b16 %v4474, %v4473
    %v4502 = vpack.c.b16 %v4476, %v4475
    %v4503 = vpack.c.b16 %v4478, %v4477
    %v4504 = vpack.c.b16 %v4480, %v4479
    %v4505 = vpack.c.b16 %v4482, %v4481
    %v4506 = vpack.c.b16 %v4484, %v4483
    %v4507 = vpack.c.b16 %v4486, %v4485
    %v4508 = vpack.c.b16 %v4488, %v4487
    %v4509 = vpack.c.b16 %v4490, %v4489
    %v4510 = vpack.c.b16 %v4492, %v4491
    %v4511 = vpack.c.b16 %v4494, %v4493
    %v4512 = vpack.c.b16 %v4496, %v4495
    %4529 = vmatprep.subr.bf16.mxu0 0
    %4530 = vmatpush1.bf16.msra.mxu0 %v4497
    %4531 = vmatprep.subr.bf16.mxu0 0
    %4532 = vmatpush1.bf16.msra.mxu0 %v4498
    %4533 = vmatprep.subr.bf16.mxu0 0
    %4534 = vmatpush1.bf16.msra.mxu0 %v4499
    %4535 = vmatprep.subr.bf16.mxu0 0
    %4536 = vmatpush1.bf16.msra.mxu0 %v4500
    %4537 = vmatprep.subr.bf16.mxu0 0
    %4538 = vmatpush1.bf16.msra.mxu0 %v4501
    %4539 = vmatprep.subr.bf16.mxu0 0
    %4540 = vmatpush1.bf16.msra.mxu0 %v4502
    %4541 = vmatprep.subr.bf16.mxu0 0
    %4542 = vmatpush1.bf16.msra.mxu0 %v4503
    %4543 = vmatprep.subr.bf16.mxu0 0
    %4544 = vmatpush1.bf16.msra.mxu0 %v4504
    %4545 = vmatprep.subr.bf16.mxu0 0
    %4546 = vmatpush1.bf16.msra.mxu0 %v4505
    %4547 = vmatprep.subr.bf16.mxu0 0
    %4548 = vmatpush1.bf16.msra.mxu0 %v4506
    %4549 = vmatprep.subr.bf16.mxu0 0
    %4550 = vmatpush1.bf16.msra.mxu0 %v4507
    %4551 = vmatprep.subr.bf16.mxu0 0
    %4552 = vmatpush1.bf16.msra.mxu0 %v4508
    %4553 = vmatprep.subr.bf16.mxu0 0
    %4554 = vmatpush1.bf16.msra.mxu0 %v4509
    %4555 = vmatprep.subr.bf16.mxu0 0
    %4556 = vmatpush1.bf16.msra.mxu0 %v4510
    %4557 = vmatprep.subr.bf16.mxu0 0
    %4558 = vmatpush1.bf16.msra.mxu0 %v4511
    %4559 = vmatprep.subr.bf16.mxu0 0
    %4560 = vmatpush1.bf16.msra.mxu0 %v4512
    %4561 = vmatprep.mubr.bf16.mxu0 %v4393
    %4562 = vmatmul.mubr.bf16.gmra.mrb[0].mxu0 %v4392
    %v4563 = vpop.f32.mrb[0].mxu0
    %v4564 = vadd.f32 %v4431, %v4563
    %v4565 = vpop.f32.mrb[0].mxu0
    %v4566 = vpop.f32.mrb[0].mxu0
    %v4567 = vadd.f32 %v4431, %v4566
    %v4568 = vpop.f32.mrb[0].mxu0
    %4569 = vdwg.mxu0
    %4570 = vst [vmem:[%s9] sm:$0xff] %v4564
    %4571 = vst [vmem:[%s9 + $0x8] sm:$0xff] %v4567
    // Predicated region
    $region70: #{tictactoe_net_forward.1} parent=1 // pred_check
      _
    $region71: #{tictactoe_net_forward.1} parent=1 // pred_check_branch
      %4573 = sbr.rel (0) target = $region73
    $region72: #{tictactoe_net_forward.1} parent=1 // pred_region
      _
    $region73: #{tictactoe_net_forward.1} parent=1 // pred_fallthru
      _
    // Predicated region
    $region74: #{tictactoe_net_forward.1} parent=1 // pred_check
      _
    $region75: #{tictactoe_net_forward.1} parent=1 // pred_check_branch
      %4575 = sbr.rel (0) target = $region77
    $region76: #{tictactoe_net_forward.1} parent=1 // pred_region
      _
    $region77: #{tictactoe_net_forward.1} parent=1 // pred_fallthru
      _
    %4576 = vsyncpa [#allocation3], 1
    %4577 = vsyncpa [#allocation5], 1
    %4578 = vsyncpa [#allocation8], 1
    %4579 = vsyncpa [#allocation11], 1
    %4580 = vsyncpa [#allocation14], 1

</llo_original>
